<compile_context>
chip_gen: v5e
topology: v5e:2x2
jax: 0.10.0
libtpu: 0.0.40
codegen_flags: <defaults>
</compile_context>

<pallas_src>
import functools

import jax
import jax.numpy as jnp
from jax.experimental import pallas as pl
from jax.experimental.pallas import tpu as pltpu

# ---------------- config (cfg.model.*) ----------------
HEAD_NUM = 4
HEAD_DIM = 8
NEWS_DIM = HEAD_NUM * HEAD_DIM          # 32
ENTITY_DIM = 16                          # cfg.model.entity_emb_dim
ENTITY_SIZE = 5                          # cfg.model.entity_size
ENTITY_NEIGHBORS = 2                     # cfg.model.entity_neighbors
TITLE_LEN = 8
WORD_EMB_DIM = 32
WORD_VOCAB = 100
ENTITY_VOCAB = 50
ATT_DIM = 32
LSTM_HIDDEN = ENTITY_DIM + NEWS_DIM      # 48 (user_emb dim == cand_final_emb dim)
GGC_LAYERS = 3

VMEM_SPEC = pl.BlockSpec(memory_space=pltpu.MemorySpace.VMEM)
SMEM_SPEC = pl.BlockSpec(memory_space=pltpu.MemorySpace.SMEM)


def _make_compiler_params():
    # vmem limit per generation: ~75% of physical VMEM (headroom for Mosaic scratch).
    try:
        cap = int(pltpu.get_tpu_info().vmem_capacity_bytes)
    except Exception:
        cap = 64 * 1024 * 1024
    return pltpu.CompilerParams(vmem_limit_bytes=max(32 * 1024 * 1024, (cap * 3) // 4))


COMPILER_PARAMS = _make_compiler_params()


# =====================================================================
# Fused Pallas kernel
# =====================================================================

def glory_fused_kernel(sel_idx_ref, sel_m_ref, title_ref, ent_ref, adj_ref, smask_ref,
                       nbemb_ref, nbmask_ref,
                       watt_ref, q_ref, wproj_ref,
                       ggcw_ref, ggcwih_ref, ggcwhh_ref, ggcbih_ref, ggcbhh_ref,
                       gew1_ref, geq_ref, gew2_ref,
                       lwih_ref, lwhh_ref, lb_ref,
                       score_ref,
                       node_cat, clicked, xg,
                       *, b_pad, lsteps):
    f32 = jnp.float32
    bf16 = jnp.bfloat16
    d = ggcwih_ref.shape[0]          # NEWS_DIM
    hdim = lwhh_ref.shape[0]         # LSTM_HIDDEN

    # ---- local news encoder over padded subgraph nodes + B*C candidates ----
    emb = title_ref[...]                                        # (R, T, E) f32
    r, t, e = emb.shape
    h = jnp.tanh(
        jnp.dot(emb.reshape(r * t, e).astype(bf16), watt_ref[...],
                preferred_element_type=f32)).reshape(r, t, -1)   # (R, T, A) f32
    s = jnp.sum(h * q_ref[...], axis=-1)                         # (R, T) lane-dense
    s = s - jnp.max(s, axis=-1, keepdims=True)
    p = jnp.exp(s)
    p = p / jnp.sum(p, axis=-1, keepdims=True)
    title_vec = jnp.sum(p[:, :, None] * emb, axis=1)             # (R, E)

    ent_pool = jnp.mean(ent_ref[...], axis=1)                    # (R, ENTITY_DIM)
    feats = jnp.concatenate([title_vec, ent_pool], axis=-1)      # (R, E + De)
    # wproj is [W_title ; folded W_ent] (folding concat([ent]*3) @ W is exact).
    x_all = jnp.dot(feats.astype(bf16), wproj_ref[...],
                    preferred_element_type=f32)                  # (R, D)

    n_pad = adj_ref.shape[0]
    x0 = x_all[:n_pad]               # (N_pad, D) local node encodings (x_encoded)
    cand_title = x_all[n_pad:]       # (M, D) candidate title encodings

    # ---- global news encoder: 3-layer GatedGraphConv, shared GRU, packed gates ----
    # TODO(synk): for large graphs tile the dense adjacency (or CSR + scalar prefetch)
    # instead of keeping N_pad^2 resident in VMEM (v7x = 64 MiB).
    adj = adj_ref[...]               # (N_pad, N_pad) bf16
    wih = ggcwih_ref[...]            # (D, 3D) bf16
    whh = ggcwhh_ref[...]            # (D, 3D) bf16
    bih = ggcbih_ref[...]            # (1, 3D) f32
    bhh = ggcbhh_ref[...]            # (1, 3D) f32
    x = x0
    for layer in range(ggcw_ref.shape[0]):                       # 3 layers, static
        xw = jnp.dot(x.astype(bf16), ggcw_ref[layer], preferred_element_type=f32)
        msg = jnp.dot(adj, xw.astype(bf16), preferred_element_type=f32)   # aggr='add'
        gi = jnp.dot(msg.astype(bf16), wih, preferred_element_type=f32) + bih
        gh = jnp.dot(x.astype(bf16), whh, preferred_element_type=f32) + bhh
        rg = jax.nn.sigmoid(gi[:, :d] + gh[:, :d])
        zg = jax.nn.sigmoid(gi[:, d:2 * d] + gh[:, d:2 * d])
        ng = jnp.tanh(gi[:, 2 * d:] + rg * gh[:, 2 * d:])
        x = (1.0 - zg) * ng + zg * x
    node_cat[...] = jnp.concatenate([x0, x], axis=-1)            # (N_pad, 2D)

    # ---- clicked-news gather (t-major rows), masked rows zeroed ----
    # TODO(synk): for long click histories switch to a fori_loop with a dynamic
    # destination row instead of this static unroll.
    for rr in range(lsteps * b_pad):
        idx = sel_idx_ref[rr]
        m = sel_m_ref[rr]
        clicked[pl.ds(rr, 1), :] = node_cat[pl.ds(idx, 1), :] * m

    # ---- LSTM user encoder: hoisted packed input projection + fori_loop recurrence ----
    xg[...] = (jnp.dot(clicked[...].astype(bf16), lwih_ref[...],
                       preferred_element_type=f32) + lb_ref[...])   # (L*Bp, 4H)
    whh_l = lwhh_ref[...]                                           # (H, 4H) bf16

    def lstm_step(step, carry):
        hstate, cstate = carry
        lo = pl.multiple_of(step * b_pad, b_pad)
        gt = xg[pl.ds(lo, b_pad), :] + jnp.dot(hstate.astype(bf16), whh_l,
                                               preferred_element_type=f32)   # (Bp, 4H)
        ig = jax.nn.sigmoid(gt[:, :hdim])
        fg = jax.nn.sigmoid(gt[:, hdim:2 * hdim])
        gg = jnp.tanh(gt[:, 2 * hdim:3 * hdim])
        og = jax.nn.sigmoid(gt[:, 3 * hdim:])
        c_new = fg * cstate + ig * gg
        h_new = og * jnp.tanh(c_new)
        m_t = smask_ref[pl.ds(lo, b_pad), :]                         # (Bp, H)
        return (m_t * h_new + (1.0 - m_t) * hstate,
                m_t * c_new + (1.0 - m_t) * cstate)

    hstate, _ = jax.lax.fori_loop(
        0, lsteps, lstm_step,
        (jnp.zeros((b_pad, hdim), f32), jnp.zeros((b_pad, hdim), f32)))

    # ---- global entity encoder: masked attention pooling over candidate neighbors ----
    en = nbemb_ref[...]                                          # (M, K, De) f32
    m_, k, de = en.shape
    eh = jnp.tanh(
        jnp.dot(en.reshape(m_ * k, de).astype(bf16), gew1_ref[...],
                preferred_element_type=f32)).reshape(m_, k, -1)   # (M, K, A) f32
    es = jnp.sum(eh * geq_ref[...], axis=-1)                      # (M, K)
    msk = nbmask_ref[...]                                         # (M, K)
    es = es + (msk - 1.0) * 1e9
    es = es - jnp.max(es, axis=-1, keepdims=True)
    ep = jnp.exp(es) * msk
    ep = ep / (jnp.sum(ep, axis=-1, keepdims=True) + 1e-8)
    pooled = jnp.sum(ep[:, :, None] * en, axis=1)                 # (M, De)
    cand_ent = jnp.dot(pooled.astype(bf16), gew2_ref[...],
                       preferred_element_type=f32)                # (M, De)

    # ---- fused DotProduct click predictor (scores vs every padded user row) ----
    cand_final = jnp.concatenate([cand_ent, cand_title], axis=-1)   # (M, De + D)
    score_ref[...] = jax.lax.dot_general(
        cand_final.astype(bf16), hstate.astype(bf16),
        dimension_numbers=(((1,), (1,)), ((), ())),
        preferred_element_type=f32)                                  # (M, B_pad)


# =====================================================================
# Parameter init (deterministic, synthetic, gate weights stored lane-packed)
# =====================================================================

def init_params(key):
    ks = jax.random.split(key, 20)
    s = 0.1
    entity_emb = jax.random.normal(ks[1], (ENTITY_VOCAB, ENTITY_DIM)) * s
    entity_emb = entity_emb.at[0].set(0.0)                 # padding_idx=0

    # Entity projection originally (3*ENTITY_DIM, NEWS_DIM) applied to concat([ent]*3);
    # folding the three blocks -> (ENTITY_DIM, NEWS_DIM) is mathematically identical.
    w_ent_full = jax.random.normal(ks[5], (3 * ENTITY_DIM, NEWS_DIM)) * s
    w_ent_folded = (w_ent_full[:ENTITY_DIM]
                    + w_ent_full[ENTITY_DIM:2 * ENTITY_DIM]
                    + w_ent_full[2 * ENTITY_DIM:])
    w_title = jax.random.normal(ks[4], (WORD_EMB_DIM, NEWS_DIM)) * s

    return {
        "word_emb": jax.random.normal(ks[0], (WORD_VOCAB, WORD_EMB_DIM)) * s,
        "entity_emb": entity_emb,
        # NewsEncoder
        "ne_w_att": jax.random.normal(ks[2], (WORD_EMB_DIM, ATT_DIM)) * s,
        "ne_q": jax.random.normal(ks[3], (1, ATT_DIM)) * s,
        # packed [W_title ; folded W_ent] : (WORD_EMB_DIM + ENTITY_DIM, NEWS_DIM)
        "ne_w_proj": jnp.concatenate([w_title, w_ent_folded], axis=0),
        # GatedGraphConv (3 layers, shared GRU; gate weights lane-packed)
        "ggc_w": jax.random.normal(ks[6], (GGC_LAYERS, NEWS_DIM, NEWS_DIM)) * s,
        "ggc_wih": jax.random.normal(ks[7], (NEWS_DIM, 3 * NEWS_DIM)) * s,
        "ggc_whh": jax.random.normal(ks[8], (NEWS_DIM, 3 * NEWS_DIM)) * s,
        "ggc_bih": jnp.zeros((1, 3 * NEWS_DIM), jnp.float32),
        "ggc_bhh": jnp.zeros((1, 3 * NEWS_DIM), jnp.float32),
        # GlobalEntityEncoder
        "ge_w1": jax.random.normal(ks[9], (ENTITY_DIM, ATT_DIM)) * s,
        "ge_q": jax.random.normal(ks[10], (1, ATT_DIM)) * s,
        "ge_w2": jax.random.normal(ks[11], (ENTITY_DIM, ENTITY_DIM)) * s,
        # LSTM user encoder (gate weights lane-packed)
        "lstm_wih": jax.random.normal(ks[12], (2 * NEWS_DIM, 4 * LSTM_HIDDEN)) * s,
        "lstm_whh": jax.random.normal(ks[13], (LSTM_HIDDEN, 4 * LSTM_HIDDEN)) * s,
        "lstm_b": jnp.zeros((1, 4 * LSTM_HIDDEN), jnp.float32),
    }


# =====================================================================
# GLORY forward (embedding gathers / padding in plain JAX; compute in 1 Pallas call)
# =====================================================================

def glory_forward(params, subgraph_x, edge_index, mapping_idx, candidate_news,
                  candidate_entity, entity_mask, label):
    f32, bf16 = jnp.float32, jnp.bfloat16
    batch_size, num_clicked = mapping_idx.shape
    num_cand = candidate_news.shape[1]
    n_nodes = subgraph_x.shape[0]
    n_pad = ((n_nodes + 7) // 8) * 8        # sublane-aligned node count
    b_pad = ((batch_size + 7) // 8) * 8     # sublane-aligned batch for LSTM steps
    m = batch_size * num_cand

    mask = mapping_idx != -1
    map_safe = jnp.where(mask, mapping_idx, 0)

    # ---- embedding gathers (data-dependent; plain JAX outside the kernel) ----
    sub_title = params["word_emb"][subgraph_x[:, :TITLE_LEN]]          # (N, 8, 32)
    sub_ent = params["entity_emb"][subgraph_x[:, -8:-3]]               # (N, 5, 16)
    sub_title = jnp.pad(sub_title, ((0, n_pad - n_nodes), (0, 0), (0, 0)))
    sub_ent = jnp.pad(sub_ent, ((0, n_pad - n_nodes), (0, 0), (0, 0)))

    cand_tokens = candidate_news[..., :TITLE_LEN].reshape(m, TITLE_LEN)
    cand_title = params["word_emb"][cand_tokens]                       # (M, 8, 32)
    origin_entity = candidate_entity[..., :ENTITY_SIZE]
    cand_ent = params["entity_emb"][origin_entity].reshape(m, ENTITY_SIZE, ENTITY_DIM)

    # merged news-encoder input: padded subgraph nodes followed by B*C candidates
    title_all = jnp.concatenate([sub_title, cand_title], axis=0)       # (N_pad+M, 8, 32)
    ent_all = jnp.concatenate([sub_ent, cand_ent], axis=0)             # (N_pad+M, 5, 16)

    # dense adjacency (message src -> tgt), zero-padded, bf16 (matmul-only operand)
    adj = jnp.zeros((n_pad, n_pad), f32).at[edge_index[1], edge_index[0]].add(1.0)
    adj = adj.astype(bf16)

    # t-major clicked indices / masks: SMEM gather indices + lane-dense LSTM step mask
    idx_tm = jnp.zeros((num_clicked, b_pad), jnp.int32).at[:, :batch_size].set(
        map_safe.T.astype(jnp.int32))
    msk_tm = jnp.zeros((num_clicked, b_pad), f32).at[:, :batch_size].set(
        mask.T.astype(f32))
    sel_idx = idx_tm.reshape(num_clicked * b_pad)
    sel_msk = msk_tm.reshape(num_clicked * b_pad)
    smask = jnp.broadcast_to(sel_msk[:, None], (num_clicked * b_pad, LSTM_HIDDEN))

    # candidate neighbor entities + mask
    n_nb = ENTITY_SIZE * ENTITY_NEIGHBORS
    neighbor_entity = candidate_entity[..., ENTITY_SIZE:ENTITY_SIZE + n_nb]
    nb_emb = params["entity_emb"][neighbor_entity].reshape(m, n_nb, ENTITY_DIM)
    nb_mask = entity_mask.reshape(m, n_nb).astype(f32)

    bf = lambda w: w.astype(bf16)
    kernel = functools.partial(glory_fused_kernel, b_pad=b_pad, lsteps=num_clicked)

    # ---- fused kernel: news encoder + GGC(3) + clicked gather + LSTM + entity encoder
    #      + DotProduct click predictor (one launch, no HBM round-trips between stages)
    scores_all = pl.pallas_call(
        kernel,
        out_shape=jax.ShapeDtypeStruct((m, b_pad), f32),
        in_specs=[SMEM_SPEC, SMEM_SPEC] + [VMEM_SPEC] * 20,
        out_specs=VMEM_SPEC,
        scratch_shapes=[
            pltpu.VMEM((n_pad, 2 * NEWS_DIM), f32),                 # [x_encoded||graph]
            pltpu.VMEM((num_clicked * b_pad, 2 * NEWS_DIM), f32),   # gathered clicks
            pltpu.VMEM((num_clicked * b_pad, 4 * LSTM_HIDDEN), f32),  # hoisted LSTM xg
        ],
        compiler_params=COMPILER_PARAMS,
    )(sel_idx, sel_msk, title_all, ent_all, adj, smask, nb_emb, nb_mask,
      bf(params["ne_w_att"]), params["ne_q"], bf(params["ne_w_proj"]),
      bf(params["ggc_w"]), bf(params["ggc_wih"]), bf(params["ggc_whh"]),
      params["ggc_bih"], params["ggc_bhh"],
      bf(params["ge_w1"]), params["ge_q"], bf(params["ge_w2"]),
      bf(params["lstm_wih"]), bf(params["lstm_whh"]), params["lstm_b"])

    # each candidate row against its own user embedding (lane-dense kernel output)
    score = scores_all.reshape(batch_size, num_cand, b_pad)[
        jnp.arange(batch_size), :, jnp.arange(batch_size)]              # (B, C)

    # NCELoss (cross-entropy) on the scores — tiny, fused into the surrounding XLA graph
    logz = jax.nn.logsumexp(score, axis=-1)
    nll = logz - jnp.take_along_axis(score, label[:, None], axis=-1)[:, 0]
    loss = jnp.mean(nll)

    # TODO(synk): add a "parallel" grid axis over merged news-encoder row blocks to use
    # v7x's second TensorCore; the single-shot call is kept for these toy sizes.
    return loss, score


# =====================================================================
# Demo
# =====================================================================

if __name__ == "__main__":
    key = jax.random.PRNGKey(0)
    k_par, k1, k2, k3, k4, k5, k6, k7 = jax.random.split(key, 8)

    params = init_params(k_par)

    B = 2           # batch
    NUM_CLICKED = 4
    NUM_CAND = 3
    N_NODES = 12
    N_EDGES = 24
    TOKEN_DIM = TITLE_LEN + 5 + 3   # title(8) + entities(5 at [-8:-3]) + other(3) = 16

    # subgraph.x : (N, token_dim) ints
    title_cols = jax.random.randint(k1, (N_NODES, TITLE_LEN), 1, WORD_VOCAB)
    ent_cols = jax.random.randint(k2, (N_NODES, 5), 0, ENTITY_VOCAB)
    other_cols = jax.random.randint(k3, (N_NODES, 3), 0, WORD_VOCAB)
    subgraph_x = jnp.concatenate([title_cols, ent_cols, other_cols],
                                 axis=1).astype(jnp.int32)

    edge_index = jax.random.randint(k4, (2, N_EDGES), 0, N_NODES).astype(jnp.int32)

    mapping_idx = jnp.array([[0, 3, 5, -1],
                             [2, 7, -1, -1]], dtype=jnp.int32)   # (B, NUM_CLICKED)

    cand_title = jax.random.randint(k5, (B, NUM_CAND, TITLE_LEN), 1, WORD_VOCAB)
    cand_other = jax.random.randint(k5, (B, NUM_CAND, TOKEN_DIM - TITLE_LEN),
                                    0, WORD_VOCAB)
    candidate_news = jnp.concatenate([cand_title, cand_other],
                                     axis=-1).astype(jnp.int32)  # (B, C, 16)

    candidate_entity = jax.random.randint(
        k6, (B, NUM_CAND, ENTITY_SIZE + ENTITY_SIZE * ENTITY_NEIGHBORS),
        0, ENTITY_VOCAB).astype(jnp.int32)                        # (B, C, 15)

    entity_mask = (jax.random.uniform(
        k7, (B, NUM_CAND, ENTITY_SIZE * ENTITY_NEIGHBORS)) > 0.3
    ).astype(jnp.int32)                                           # (B, C, 10)

    label = jnp.array([0, 1], dtype=jnp.int32)

    loss, score = glory_forward(params, subgraph_x, edge_index, mapping_idx,
                                candidate_news, candidate_entity, entity_mask,
                                label)
    jax.block_until_ready((loss, score))
    assert score.shape == (B, NUM_CAND)
    assert jnp.isfinite(loss) and bool(jnp.all(jnp.isfinite(score)))
    print("KERNEL_OK")
</pallas_src>

<mosaic_0001>
module attributes {stable_mosaic.version = 11 : i64} {
  func.func @glory_fused_kernel(%arg0: memref<32xi32, #tpu.memory_space<smem>>, %arg1: memref<32xf32, #tpu.memory_space<smem>>, %arg2: memref<22x8x32xf32, #tpu.memory_space<vmem>>, %arg3: memref<22x5x16xf32, #tpu.memory_space<vmem>>, %arg4: memref<16x16xbf16, #tpu.memory_space<vmem>>, %arg5: memref<32x48xf32, #tpu.memory_space<vmem>>, %arg6: memref<6x10x16xf32, #tpu.memory_space<vmem>>, %arg7: memref<6x10xf32, #tpu.memory_space<vmem>>, %arg8: memref<32x32xbf16, #tpu.memory_space<vmem>>, %arg9: memref<1x32xf32, #tpu.memory_space<vmem>>, %arg10: memref<48x32xbf16, #tpu.memory_space<vmem>>, %arg11: memref<3x32x32xbf16, #tpu.memory_space<vmem>>, %arg12: memref<32x96xbf16, #tpu.memory_space<vmem>>, %arg13: memref<32x96xbf16, #tpu.memory_space<vmem>>, %arg14: memref<1x96xf32, #tpu.memory_space<vmem>>, %arg15: memref<1x96xf32, #tpu.memory_space<vmem>>, %arg16: memref<16x32xbf16, #tpu.memory_space<vmem>>, %arg17: memref<1x32xf32, #tpu.memory_space<vmem>>, %arg18: memref<16x16xbf16, #tpu.memory_space<vmem>>, %arg19: memref<64x192xbf16, #tpu.memory_space<vmem>>, %arg20: memref<48x192xbf16, #tpu.memory_space<vmem>>, %arg21: memref<1x192xf32, #tpu.memory_space<vmem>>, %arg22: memref<6x8xf32, #tpu.memory_space<vmem>>, %arg23: memref<16x64xf32, #tpu.memory_space<vmem>>, %arg24: memref<32x64xf32, #tpu.memory_space<vmem>>, %arg25: memref<32x192xf32, #tpu.memory_space<vmem>>) attributes {dimension_semantics = [], scalar_prefetch = 0 : i64, scratch_operands = 3 : i64, tpu.core_type = #tpu.core_type<tc>} {
    %c0 = arith.constant 0 : index
    %c0_0 = arith.constant 0 : index
    %c0_1 = arith.constant 0 : index
    %0 = vector.load %arg2[%c0, %c0_0, %c0_1] : memref<22x8x32xf32, #tpu.memory_space<vmem>>, vector<22x8x32xf32>
    %1 = vector.shape_cast %0 : vector<22x8x32xf32> to vector<176x32xf32>
    %2 = arith.truncf %1 : vector<176x32xf32> to vector<176x32xbf16>
    %c0_2 = arith.constant 0 : index
    %c0_3 = arith.constant 0 : index
    %3 = vector.load %arg8[%c0_2, %c0_3] : memref<32x32xbf16, #tpu.memory_space<vmem>>, vector<32x32xbf16>
    %cst = arith.constant dense<0.000000e+00> : vector<176x32xf32>
    %4 = tpu.matmul %2, %3, %cst {dimension_numbers = #tpu.dot_dimension_numbers<[1], [0], [0], [1], [0, 0, 1, 1], [], []>} : vector<176x32xbf16>, vector<32x32xbf16>, vector<176x32xf32> -> vector<176x32xf32>
    %5 = math.tanh %4 : vector<176x32xf32>
    %6 = vector.shape_cast %5 : vector<176x32xf32> to vector<22x8x32xf32>
    %c0_4 = arith.constant 0 : index
    %c0_5 = arith.constant 0 : index
    %7 = vector.load %arg9[%c0_4, %c0_5] : memref<1x32xf32, #tpu.memory_space<vmem>>, vector<1x32xf32>
    %8 = vector.shape_cast %7 : vector<1x32xf32> to vector<1x1x32xf32>
    %9 = vector.broadcast %8 : vector<1x1x32xf32> to vector<22x8x32xf32>
    %10 = arith.mulf %6, %9 : vector<22x8x32xf32>
    %cst_6 = arith.constant dense<0.000000e+00> : vector<22x8xf32>
    %11 = vector.multi_reduction <add>, %10, %cst_6 [2] : vector<22x8x32xf32> to vector<22x8xf32>
    %cst_7 = arith.constant dense<0xFF800000> : vector<22xf32>
    %12 = vector.multi_reduction <maximumf>, %11, %cst_7 [1] : vector<22x8xf32> to vector<22xf32>
    %13 = vector.shape_cast %12 : vector<22xf32> to vector<22x1xf32>
    %14 = vector.broadcast %13 : vector<22x1xf32> to vector<22x8xf32>
    %15 = arith.subf %11, %14 : vector<22x8xf32>
    %16 = math.exp %15 : vector<22x8xf32>
    %cst_8 = arith.constant dense<0.000000e+00> : vector<22xf32>
    %17 = vector.multi_reduction <add>, %16, %cst_8 [1] : vector<22x8xf32> to vector<22xf32>
    %18 = vector.shape_cast %17 : vector<22xf32> to vector<22x1xf32>
    %19 = vector.broadcast %18 : vector<22x1xf32> to vector<22x8xf32>
    %20 = arith.divf %16, %19 : vector<22x8xf32>
    %21 = vector.shape_cast %20 : vector<22x8xf32> to vector<22x8x1xf32>
    %22 = vector.broadcast %21 : vector<22x8x1xf32> to vector<22x8x32xf32>
    %23 = arith.mulf %22, %0 : vector<22x8x32xf32>
    %cst_9 = arith.constant dense<0.000000e+00> : vector<22x32xf32>
    %24 = vector.multi_reduction <add>, %23, %cst_9 [1] : vector<22x8x32xf32> to vector<22x32xf32>
    %c0_10 = arith.constant 0 : index
    %c0_11 = arith.constant 0 : index
    %c0_12 = arith.constant 0 : index
    %25 = vector.load %arg3[%c0_10, %c0_11, %c0_12] : memref<22x5x16xf32, #tpu.memory_space<vmem>>, vector<22x5x16xf32>
    %cst_13 = arith.constant dense<0.000000e+00> : vector<22x16xf32>
    %26 = vector.multi_reduction <add>, %25, %cst_13 [1] : vector<22x5x16xf32> to vector<22x16xf32>
    %cst_14 = arith.constant 5.000000e+00 : f32
    %27 = vector.broadcast %cst_14 : f32 to vector<22x16xf32>
    %28 = arith.divf %26, %27 : vector<22x16xf32>
    %29 = tpu.concatenate %24, %28 in 1 : vector<22x32xf32>, vector<22x16xf32> -> vector<22x48xf32>
    %30 = arith.truncf %29 : vector<22x48xf32> to vector<22x48xbf16>
    %c0_15 = arith.constant 0 : index
    %c0_16 = arith.constant 0 : index
    %31 = vector.load %arg10[%c0_15, %c0_16] : memref<48x32xbf16, #tpu.memory_space<vmem>>, vector<48x32xbf16>
    %cst_17 = arith.constant dense<0.000000e+00> : vector<22x32xf32>
    %32 = tpu.matmul %30, %31, %cst_17 {dimension_numbers = #tpu.dot_dimension_numbers<[1], [0], [0], [1], [0, 0, 1, 1], [], []>} : vector<22x48xbf16>, vector<48x32xbf16>, vector<22x32xf32> -> vector<22x32xf32>
    %33 = vector.extract_strided_slice %32 {offsets = [0, 0], sizes = [16, 32], strides = [1, 1]} : vector<22x32xf32> to vector<16x32xf32>
    %34 = vector.extract_strided_slice %32 {offsets = [16, 0], sizes = [6, 32], strides = [1, 1]} : vector<22x32xf32> to vector<6x32xf32>
    %c0_18 = arith.constant 0 : index
    %c0_19 = arith.constant 0 : index
    %35 = vector.load %arg4[%c0_18, %c0_19] : memref<16x16xbf16, #tpu.memory_space<vmem>>, vector<16x16xbf16>
    %c0_20 = arith.constant 0 : index
    %c0_21 = arith.constant 0 : index
    %36 = vector.load %arg12[%c0_20, %c0_21] : memref<32x96xbf16, #tpu.memory_space<vmem>>, vector<32x96xbf16>
    %c0_22 = arith.constant 0 : index
    %c0_23 = arith.constant 0 : index
    %37 = vector.load %arg13[%c0_22, %c0_23] : memref<32x96xbf16, #tpu.memory_space<vmem>>, vector<32x96xbf16>
    %c0_24 = arith.constant 0 : index
    %c0_25 = arith.constant 0 : index
    %38 = vector.load %arg14[%c0_24, %c0_25] : memref<1x96xf32, #tpu.memory_space<vmem>>, vector<1x96xf32>
    %c0_26 = arith.constant 0 : index
    %c0_27 = arith.constant 0 : index
    %39 = vector.load %arg15[%c0_26, %c0_27] : memref<1x96xf32, #tpu.memory_space<vmem>>, vector<1x96xf32>
    %40 = arith.truncf %33 : vector<16x32xf32> to vector<16x32xbf16>
    %c0_28 = arith.constant 0 : index
    %c0_29 = arith.constant 0 : index
    %c0_30 = arith.constant 0 : index
    %41 = vector.load %arg11[%c0_28, %c0_29, %c0_30] : memref<3x32x32xbf16, #tpu.memory_space<vmem>>, vector<1x32x32xbf16>
    %42 = vector.shape_cast %41 : vector<1x32x32xbf16> to vector<32x32xbf16>
    %cst_31 = arith.constant dense<0.000000e+00> : vector<16x32xf32>
    %43 = tpu.matmul %40, %42, %cst_31 {dimension_numbers = #tpu.dot_dimension_numbers<[1], [0], [0], [1], [0, 0, 1, 1], [], []>} : vector<16x32xbf16>, vector<32x32xbf16>, vector<16x32xf32> -> vector<16x32xf32>
    %44 = arith.truncf %43 : vector<16x32xf32> to vector<16x32xbf16>
    %cst_32 = arith.constant dense<0.000000e+00> : vector<16x32xf32>
    %45 = tpu.matmul %35, %44, %cst_32 {dimension_numbers = #tpu.dot_dimension_numbers<[1], [0], [0], [1], [0, 0, 1, 1], [], []>} : vector<16x16xbf16>, vector<16x32xbf16>, vector<16x32xf32> -> vector<16x32xf32>
    %46 = arith.truncf %45 : vector<16x32xf32> to vector<16x32xbf16>
    %cst_33 = arith.constant dense<0.000000e+00> : vector<16x96xf32>
    %47 = tpu.matmul %46, %36, %cst_33 {dimension_numbers = #tpu.dot_dimension_numbers<[1], [0], [0], [1], [0, 0, 1, 1], [], []>} : vector<16x32xbf16>, vector<32x96xbf16>, vector<16x96xf32> -> vector<16x96xf32>
    %48 = vector.broadcast %38 : vector<1x96xf32> to vector<16x96xf32>
    %49 = arith.addf %47, %48 : vector<16x96xf32>
    %50 = arith.truncf %33 : vector<16x32xf32> to vector<16x32xbf16>
    %cst_34 = arith.constant dense<0.000000e+00> : vector<16x96xf32>
    %51 = tpu.matmul %50, %37, %cst_34 {dimension_numbers = #tpu.dot_dimension_numbers<[1], [0], [0], [1], [0, 0, 1, 1], [], []>} : vector<16x32xbf16>, vector<32x96xbf16>, vector<16x96xf32> -> vector<16x96xf32>
    %52 = vector.broadcast %39 : vector<1x96xf32> to vector<16x96xf32>
    %53 = arith.addf %51, %52 : vector<16x96xf32>
    %54 = vector.extract_strided_slice %49 {offsets = [0, 0], sizes = [16, 32], strides = [1, 1]} : vector<16x96xf32> to vector<16x32xf32>
    %55 = vector.extract_strided_slice %53 {offsets = [0, 0], sizes = [16, 32], strides = [1, 1]} : vector<16x96xf32> to vector<16x32xf32>
    %56 = arith.addf %54, %55 : vector<16x32xf32>
    %57 = arith.negf %56 : vector<16x32xf32>
    %58 = math.exp %57 : vector<16x32xf32>
    %cst_35 = arith.constant 1.000000e+00 : f32
    %59 = vector.broadcast %cst_35 : f32 to vector<16x32xf32>
    %60 = arith.addf %59, %58 : vector<16x32xf32>
    %61 = arith.divf %59, %60 : vector<16x32xf32>
    %62 = vector.extract_strided_slice %49 {offsets = [0, 32], sizes = [16, 32], strides = [1, 1]} : vector<16x96xf32> to vector<16x32xf32>
    %63 = vector.extract_strided_slice %53 {offsets = [0, 32], sizes = [16, 32], strides = [1, 1]} : vector<16x96xf32> to vector<16x32xf32>
    %64 = arith.addf %62, %63 : vector<16x32xf32>
    %65 = arith.negf %64 : vector<16x32xf32>
    %66 = math.exp %65 : vector<16x32xf32>
    %cst_36 = arith.constant 1.000000e+00 : f32
    %67 = vector.broadcast %cst_36 : f32 to vector<16x32xf32>
    %68 = arith.addf %67, %66 : vector<16x32xf32>
    %69 = arith.divf %67, %68 : vector<16x32xf32>
    %70 = vector.extract_strided_slice %49 {offsets = [0, 64], sizes = [16, 32], strides = [1, 1]} : vector<16x96xf32> to vector<16x32xf32>
    %71 = vector.extract_strided_slice %53 {offsets = [0, 64], sizes = [16, 32], strides = [1, 1]} : vector<16x96xf32> to vector<16x32xf32>
    %72 = arith.mulf %61, %71 : vector<16x32xf32>
    %73 = arith.addf %70, %72 : vector<16x32xf32>
    %74 = math.tanh %73 : vector<16x32xf32>
    %cst_37 = arith.constant 1.000000e+00 : f32
    %75 = vector.broadcast %cst_37 : f32 to vector<16x32xf32>
    %76 = arith.subf %75, %69 : vector<16x32xf32>
    %77 = arith.mulf %76, %74 : vector<16x32xf32>
    %78 = arith.mulf %69, %33 : vector<16x32xf32>
    %79 = arith.addf %77, %78 : vector<16x32xf32>
    %80 = arith.truncf %79 : vector<16x32xf32> to vector<16x32xbf16>
    %c1 = arith.constant 1 : index
    %c0_38 = arith.constant 0 : index
    %c0_39 = arith.constant 0 : index
    %81 = vector.load %arg11[%c1, %c0_38, %c0_39] : memref<3x32x32xbf16, #tpu.memory_space<vmem>>, vector<1x32x32xbf16>
    %82 = vector.shape_cast %81 : vector<1x32x32xbf16> to vector<32x32xbf16>
    %cst_40 = arith.constant dense<0.000000e+00> : vector<16x32xf32>
    %83 = tpu.matmul %80, %82, %cst_40 {dimension_numbers = #tpu.dot_dimension_numbers<[1], [0], [0], [1], [0, 0, 1, 1], [], []>} : vector<16x32xbf16>, vector<32x32xbf16>, vector<16x32xf32> -> vector<16x32xf32>
    %84 = arith.truncf %83 : vector<16x32xf32> to vector<16x32xbf16>
    %cst_41 = arith.constant dense<0.000000e+00> : vector<16x32xf32>
    %85 = tpu.matmul %35, %84, %cst_41 {dimension_numbers = #tpu.dot_dimension_numbers<[1], [0], [0], [1], [0, 0, 1, 1], [], []>} : vector<16x16xbf16>, vector<16x32xbf16>, vector<16x32xf32> -> vector<16x32xf32>
    %86 = arith.truncf %85 : vector<16x32xf32> to vector<16x32xbf16>
    %cst_42 = arith.constant dense<0.000000e+00> : vector<16x96xf32>
    %87 = tpu.matmul %86, %36, %cst_42 {dimension_numbers = #tpu.dot_dimension_numbers<[1], [0], [0], [1], [0, 0, 1, 1], [], []>} : vector<16x32xbf16>, vector<32x96xbf16>, vector<16x96xf32> -> vector<16x96xf32>
    %88 = vector.broadcast %38 : vector<1x96xf32> to vector<16x96xf32>
    %89 = arith.addf %87, %88 : vector<16x96xf32>
    %90 = arith.truncf %79 : vector<16x32xf32> to vector<16x32xbf16>
    %cst_43 = arith.constant dense<0.000000e+00> : vector<16x96xf32>
    %91 = tpu.matmul %90, %37, %cst_43 {dimension_numbers = #tpu.dot_dimension_numbers<[1], [0], [0], [1], [0, 0, 1, 1], [], []>} : vector<16x32xbf16>, vector<32x96xbf16>, vector<16x96xf32> -> vector<16x96xf32>
    %92 = vector.broadcast %39 : vector<1x96xf32> to vector<16x96xf32>
    %93 = arith.addf %91, %92 : vector<16x96xf32>
    %94 = vector.extract_strided_slice %89 {offsets = [0, 0], sizes = [16, 32], strides = [1, 1]} : vector<16x96xf32> to vector<16x32xf32>
    %95 = vector.extract_strided_slice %93 {offsets = [0, 0], sizes = [16, 32], strides = [1, 1]} : vector<16x96xf32> to vector<16x32xf32>
    %96 = arith.addf %94, %95 : vector<16x32xf32>
    %97 = arith.negf %96 : vector<16x32xf32>
    %98 = math.exp %97 : vector<16x32xf32>
    %cst_44 = arith.constant 1.000000e+00 : f32
    %99 = vector.broadcast %cst_44 : f32 to vector<16x32xf32>
    %100 = arith.addf %99, %98 : vector<16x32xf32>
    %101 = arith.divf %99, %100 : vector<16x32xf32>
    %102 = vector.extract_strided_slice %89 {offsets = [0, 32], sizes = [16, 32], strides = [1, 1]} : vector<16x96xf32> to vector<16x32xf32>
    %103 = vector.extract_strided_slice %93 {offsets = [0, 32], sizes = [16, 32], strides = [1, 1]} : vector<16x96xf32> to vector<16x32xf32>
    %104 = arith.addf %102, %103 : vector<16x32xf32>
    %105 = arith.negf %104 : vector<16x32xf32>
    %106 = math.exp %105 : vector<16x32xf32>
    %cst_45 = arith.constant 1.000000e+00 : f32
    %107 = vector.broadcast %cst_45 : f32 to vector<16x32xf32>
    %108 = arith.addf %107, %106 : vector<16x32xf32>
    %109 = arith.divf %107, %108 : vector<16x32xf32>
    %110 = vector.extract_strided_slice %89 {offsets = [0, 64], sizes = [16, 32], strides = [1, 1]} : vector<16x96xf32> to vector<16x32xf32>
    %111 = vector.extract_strided_slice %93 {offsets = [0, 64], sizes = [16, 32], strides = [1, 1]} : vector<16x96xf32> to vector<16x32xf32>
    %112 = arith.mulf %101, %111 : vector<16x32xf32>
    %113 = arith.addf %110, %112 : vector<16x32xf32>
    %114 = math.tanh %113 : vector<16x32xf32>
    %cst_46 = arith.constant 1.000000e+00 : f32
    %115 = vector.broadcast %cst_46 : f32 to vector<16x32xf32>
    %116 = arith.subf %115, %109 : vector<16x32xf32>
    %117 = arith.mulf %116, %114 : vector<16x32xf32>
    %118 = arith.mulf %109, %79 : vector<16x32xf32>
    %119 = arith.addf %117, %118 : vector<16x32xf32>
    %120 = arith.truncf %119 : vector<16x32xf32> to vector<16x32xbf16>
    %c2 = arith.constant 2 : index
    %c0_47 = arith.constant 0 : index
    %c0_48 = arith.constant 0 : index
    %121 = vector.load %arg11[%c2, %c0_47, %c0_48] : memref<3x32x32xbf16, #tpu.memory_space<vmem>>, vector<1x32x32xbf16>
    %122 = vector.shape_cast %121 : vector<1x32x32xbf16> to vector<32x32xbf16>
    %cst_49 = arith.constant dense<0.000000e+00> : vector<16x32xf32>
    %123 = tpu.matmul %120, %122, %cst_49 {dimension_numbers = #tpu.dot_dimension_numbers<[1], [0], [0], [1], [0, 0, 1, 1], [], []>} : vector<16x32xbf16>, vector<32x32xbf16>, vector<16x32xf32> -> vector<16x32xf32>
    %124 = arith.truncf %123 : vector<16x32xf32> to vector<16x32xbf16>
    %cst_50 = arith.constant dense<0.000000e+00> : vector<16x32xf32>
    %125 = tpu.matmul %35, %124, %cst_50 {dimension_numbers = #tpu.dot_dimension_numbers<[1], [0], [0], [1], [0, 0, 1, 1], [], []>} : vector<16x16xbf16>, vector<16x32xbf16>, vector<16x32xf32> -> vector<16x32xf32>
    %126 = arith.truncf %125 : vector<16x32xf32> to vector<16x32xbf16>
    %cst_51 = arith.constant dense<0.000000e+00> : vector<16x96xf32>
    %127 = tpu.matmul %126, %36, %cst_51 {dimension_numbers = #tpu.dot_dimension_numbers<[1], [0], [0], [1], [0, 0, 1, 1], [], []>} : vector<16x32xbf16>, vector<32x96xbf16>, vector<16x96xf32> -> vector<16x96xf32>
    %128 = vector.broadcast %38 : vector<1x96xf32> to vector<16x96xf32>
    %129 = arith.addf %127, %128 : vector<16x96xf32>
    %130 = arith.truncf %119 : vector<16x32xf32> to vector<16x32xbf16>
    %cst_52 = arith.constant dense<0.000000e+00> : vector<16x96xf32>
    %131 = tpu.matmul %130, %37, %cst_52 {dimension_numbers = #tpu.dot_dimension_numbers<[1], [0], [0], [1], [0, 0, 1, 1], [], []>} : vector<16x32xbf16>, vector<32x96xbf16>, vector<16x96xf32> -> vector<16x96xf32>
    %132 = vector.broadcast %39 : vector<1x96xf32> to vector<16x96xf32>
    %133 = arith.addf %131, %132 : vector<16x96xf32>
    %134 = vector.extract_strided_slice %129 {offsets = [0, 0], sizes = [16, 32], strides = [1, 1]} : vector<16x96xf32> to vector<16x32xf32>
    %135 = vector.extract_strided_slice %133 {offsets = [0, 0], sizes = [16, 32], strides = [1, 1]} : vector<16x96xf32> to vector<16x32xf32>
    %136 = arith.addf %134, %135 : vector<16x32xf32>
    %137 = arith.negf %136 : vector<16x32xf32>
    %138 = math.exp %137 : vector<16x32xf32>
    %cst_53 = arith.constant 1.000000e+00 : f32
    %139 = vector.broadcast %cst_53 : f32 to vector<16x32xf32>
    %140 = arith.addf %139, %138 : vector<16x32xf32>
    %141 = arith.divf %139, %140 : vector<16x32xf32>
    %142 = vector.extract_strided_slice %129 {offsets = [0, 32], sizes = [16, 32], strides = [1, 1]} : vector<16x96xf32> to vector<16x32xf32>
    %143 = vector.extract_strided_slice %133 {offsets = [0, 32], sizes = [16, 32], strides = [1, 1]} : vector<16x96xf32> to vector<16x32xf32>
    %144 = arith.addf %142, %143 : vector<16x32xf32>
    %145 = arith.negf %144 : vector<16x32xf32>
    %146 = math.exp %145 : vector<16x32xf32>
    %cst_54 = arith.constant 1.000000e+00 : f32
    %147 = vector.broadcast %cst_54 : f32 to vector<16x32xf32>
    %148 = arith.addf %147, %146 : vector<16x32xf32>
    %149 = arith.divf %147, %148 : vector<16x32xf32>
    %150 = vector.extract_strided_slice %129 {offsets = [0, 64], sizes = [16, 32], strides = [1, 1]} : vector<16x96xf32> to vector<16x32xf32>
    %151 = vector.extract_strided_slice %133 {offsets = [0, 64], sizes = [16, 32], strides = [1, 1]} : vector<16x96xf32> to vector<16x32xf32>
    %152 = arith.mulf %141, %151 : vector<16x32xf32>
    %153 = arith.addf %150, %152 : vector<16x32xf32>
    %154 = math.tanh %153 : vector<16x32xf32>
    %cst_55 = arith.constant 1.000000e+00 : f32
    %155 = vector.broadcast %cst_55 : f32 to vector<16x32xf32>
    %156 = arith.subf %155, %149 : vector<16x32xf32>
    %157 = arith.mulf %156, %154 : vector<16x32xf32>
    %158 = arith.mulf %149, %119 : vector<16x32xf32>
    %159 = arith.addf %157, %158 : vector<16x32xf32>
    %160 = tpu.concatenate %33, %159 in 1 : vector<16x32xf32>, vector<16x32xf32> -> vector<16x64xf32>
    %c0_56 = arith.constant 0 : index
    %c0_57 = arith.constant 0 : index
    %161 = vector.load %arg23[%c0_56, %c0_57] : memref<16x64xf32, #tpu.memory_space<vmem>>, vector<16x64xf32>
    tpu.vector_store %arg23[%c0_56, %c0_57], %160 {strides = array<i32>} : memref<16x64xf32, #tpu.memory_space<vmem>>, vector<16x64xf32>,
    %c0_58 = arith.constant 0 : index
    %162 = memref.load %arg0[%c0_58] : memref<32xi32, #tpu.memory_space<smem>>
    %c0_59 = arith.constant 0 : index
    %163 = memref.load %arg1[%c0_59] : memref<32xf32, #tpu.memory_space<smem>>
    %164 = arith.index_cast %162 : i32 to index
    %c0_60 = arith.constant 0 : index
    %165 = vector.load %arg23[%164, %c0_60] : memref<16x64xf32, #tpu.memory_space<vmem>>, vector<1x64xf32>
    %166 = vector.broadcast %163 : f32 to vector<1x64xf32>
    %167 = arith.mulf %165, %166 : vector<1x64xf32>
    %c0_61 = arith.constant 0 : index
    %c0_62 = arith.constant 0 : index
    %168 = vector.load %arg24[%c0_61, %c0_62] : memref<32x64xf32, #tpu.memory_space<vmem>>, vector<1x64xf32>
    tpu.vector_store %arg24[%c0_61, %c0_62], %167 {strides = array<i32>} : memref<32x64xf32, #tpu.memory_space<vmem>>, vector<1x64xf32>,
    %c1_63 = arith.constant 1 : index
    %169 = memref.load %arg0[%c1_63] : memref<32xi32, #tpu.memory_space<smem>>
    %c1_64 = arith.constant 1 : index
    %170 = memref.load %arg1[%c1_64] : memref<32xf32, #tpu.memory_space<smem>>
    %171 = arith.index_cast %169 : i32 to index
    %c0_65 = arith.constant 0 : index
    %172 = vector.load %arg23[%171, %c0_65] : memref<16x64xf32, #tpu.memory_space<vmem>>, vector<1x64xf32>
    %173 = vector.broadcast %170 : f32 to vector<1x64xf32>
    %174 = arith.mulf %172, %173 : vector<1x64xf32>
    %c1_66 = arith.constant 1 : index
    %c0_67 = arith.constant 0 : index
    %175 = vector.load %arg24[%c1_66, %c0_67] : memref<32x64xf32, #tpu.memory_space<vmem>>, vector<1x64xf32>
    tpu.vector_store %arg24[%c1_66, %c0_67], %174 {strides = array<i32>} : memref<32x64xf32, #tpu.memory_space<vmem>>, vector<1x64xf32>,
    %c2_68 = arith.constant 2 : index
    %176 = memref.load %arg0[%c2_68] : memref<32xi32, #tpu.memory_space<smem>>
    %c2_69 = arith.constant 2 : index
    %177 = memref.load %arg1[%c2_69] : memref<32xf32, #tpu.memory_space<smem>>
    %178 = arith.index_cast %176 : i32 to index
    %c0_70 = arith.constant 0 : index
    %179 = vector.load %arg23[%178, %c0_70] : memref<16x64xf32, #tpu.memory_space<vmem>>, vector<1x64xf32>
    %180 = vector.broadcast %177 : f32 to vector<1x64xf32>
    %181 = arith.mulf %179, %180 : vector<1x64xf32>
    %c2_71 = arith.constant 2 : index
    %c0_72 = arith.constant 0 : index
    %182 = vector.load %arg24[%c2_71, %c0_72] : memref<32x64xf32, #tpu.memory_space<vmem>>, vector<1x64xf32>
    tpu.vector_store %arg24[%c2_71, %c0_72], %181 {strides = array<i32>} : memref<32x64xf32, #tpu.memory_space<vmem>>, vector<1x64xf32>,
    %c3 = arith.constant 3 : index
    %183 = memref.load %arg0[%c3] : memref<32xi32, #tpu.memory_space<smem>>
    %c3_73 = arith.constant 3 : index
    %184 = memref.load %arg1[%c3_73] : memref<32xf32, #tpu.memory_space<smem>>
    %185 = arith.index_cast %183 : i32 to index
    %c0_74 = arith.constant 0 : index
    %186 = vector.load %arg23[%185, %c0_74] : memref<16x64xf32, #tpu.memory_space<vmem>>, vector<1x64xf32>
    %187 = vector.broadcast %184 : f32 to vector<1x64xf32>
    %188 = arith.mulf %186, %187 : vector<1x64xf32>
    %c3_75 = arith.constant 3 : index
    %c0_76 = arith.constant 0 : index
    %189 = vector.load %arg24[%c3_75, %c0_76] : memref<32x64xf32, #tpu.memory_space<vmem>>, vector<1x64xf32>
    tpu.vector_store %arg24[%c3_75, %c0_76], %188 {strides = array<i32>} : memref<32x64xf32, #tpu.memory_space<vmem>>, vector<1x64xf32>,
    %c4 = arith.constant 4 : index
    %190 = memref.load %arg0[%c4] : memref<32xi32, #tpu.memory_space<smem>>
    %c4_77 = arith.constant 4 : index
    %191 = memref.load %arg1[%c4_77] : memref<32xf32, #tpu.memory_space<smem>>
    %192 = arith.index_cast %190 : i32 to index
    %c0_78 = arith.constant 0 : index
    %193 = vector.load %arg23[%192, %c0_78] : memref<16x64xf32, #tpu.memory_space<vmem>>, vector<1x64xf32>
    %194 = vector.broadcast %191 : f32 to vector<1x64xf32>
    %195 = arith.mulf %193, %194 : vector<1x64xf32>
    %c4_79 = arith.constant 4 : index
    %c0_80 = arith.constant 0 : index
    %196 = vector.load %arg24[%c4_79, %c0_80] : memref<32x64xf32, #tpu.memory_space<vmem>>, vector<1x64xf32>
    tpu.vector_store %arg24[%c4_79, %c0_80], %195 {strides = array<i32>} : memref<32x64xf32, #tpu.memory_space<vmem>>, vector<1x64xf32>,
    %c5 = arith.constant 5 : index
    %197 = memref.load %arg0[%c5] : memref<32xi32, #tpu.memory_space<smem>>
    %c5_81 = arith.constant 5 : index
    %198 = memref.load %arg1[%c5_81] : memref<32xf32, #tpu.memory_space<smem>>
    %199 = arith.index_cast %197 : i32 to index
    %c0_82 = arith.constant 0 : index
    %200 = vector.load %arg23[%199, %c0_82] : memref<16x64xf32, #tpu.memory_space<vmem>>, vector<1x64xf32>
    %201 = vector.broadcast %198 : f32 to vector<1x64xf32>
    %202 = arith.mulf %200, %201 : vector<1x64xf32>
    %c5_83 = arith.constant 5 : index
    %c0_84 = arith.constant 0 : index
    %203 = vector.load %arg24[%c5_83, %c0_84] : memref<32x64xf32, #tpu.memory_space<vmem>>, vector<1x64xf32>
    tpu.vector_store %arg24[%c5_83, %c0_84], %202 {strides = array<i32>} : memref<32x64xf32, #tpu.memory_space<vmem>>, vector<1x64xf32>,
    %c6 = arith.constant 6 : index
    %204 = memref.load %arg0[%c6] : memref<32xi32, #tpu.memory_space<smem>>
    %c6_85 = arith.constant 6 : index
    %205 = memref.load %arg1[%c6_85] : memref<32xf32, #tpu.memory_space<smem>>
    %206 = arith.index_cast %204 : i32 to index
    %c0_86 = arith.constant 0 : index
    %207 = vector.load %arg23[%206, %c0_86] : memref<16x64xf32, #tpu.memory_space<vmem>>, vector<1x64xf32>
    %208 = vector.broadcast %205 : f32 to vector<1x64xf32>
    %209 = arith.mulf %207, %208 : vector<1x64xf32>
    %c6_87 = arith.constant 6 : index
    %c0_88 = arith.constant 0 : index
    %210 = vector.load %arg24[%c6_87, %c0_88] : memref<32x64xf32, #tpu.memory_space<vmem>>, vector<1x64xf32>
    tpu.vector_store %arg24[%c6_87, %c0_88], %209 {strides = array<i32>} : memref<32x64xf32, #tpu.memory_space<vmem>>, vector<1x64xf32>,
    %c7 = arith.constant 7 : index
    %211 = memref.load %arg0[%c7] : memref<32xi32, #tpu.memory_space<smem>>
    %c7_89 = arith.constant 7 : index
    %212 = memref.load %arg1[%c7_89] : memref<32xf32, #tpu.memory_space<smem>>
    %213 = arith.index_cast %211 : i32 to index
    %c0_90 = arith.constant 0 : index
    %214 = vector.load %arg23[%213, %c0_90] : memref<16x64xf32, #tpu.memory_space<vmem>>, vector<1x64xf32>
    %215 = vector.broadcast %212 : f32 to vector<1x64xf32>
    %216 = arith.mulf %214, %215 : vector<1x64xf32>
    %c7_91 = arith.constant 7 : index
    %c0_92 = arith.constant 0 : index
    %217 = vector.load %arg24[%c7_91, %c0_92] : memref<32x64xf32, #tpu.memory_space<vmem>>, vector<1x64xf32>
    tpu.vector_store %arg24[%c7_91, %c0_92], %216 {strides = array<i32>} : memref<32x64xf32, #tpu.memory_space<vmem>>, vector<1x64xf32>,
    %c8 = arith.constant 8 : index
    %218 = memref.load %arg0[%c8] : memref<32xi32, #tpu.memory_space<smem>>
    %c8_93 = arith.constant 8 : index
    %219 = memref.load %arg1[%c8_93] : memref<32xf32, #tpu.memory_space<smem>>
    %220 = arith.index_cast %218 : i32 to index
    %c0_94 = arith.constant 0 : index
    %221 = vector.load %arg23[%220, %c0_94] : memref<16x64xf32, #tpu.memory_space<vmem>>, vector<1x64xf32>
    %222 = vector.broadcast %219 : f32 to vector<1x64xf32>
    %223 = arith.mulf %221, %222 : vector<1x64xf32>
    %c8_95 = arith.constant 8 : index
    %c0_96 = arith.constant 0 : index
    %224 = vector.load %arg24[%c8_95, %c0_96] : memref<32x64xf32, #tpu.memory_space<vmem>>, vector<1x64xf32>
    tpu.vector_store %arg24[%c8_95, %c0_96], %223 {strides = array<i32>} : memref<32x64xf32, #tpu.memory_space<vmem>>, vector<1x64xf32>,
    %c9 = arith.constant 9 : index
    %225 = memref.load %arg0[%c9] : memref<32xi32, #tpu.memory_space<smem>>
    %c9_97 = arith.constant 9 : index
    %226 = memref.load %arg1[%c9_97] : memref<32xf32, #tpu.memory_space<smem>>
    %227 = arith.index_cast %225 : i32 to index
    %c0_98 = arith.constant 0 : index
    %228 = vector.load %arg23[%227, %c0_98] : memref<16x64xf32, #tpu.memory_space<vmem>>, vector<1x64xf32>
    %229 = vector.broadcast %226 : f32 to vector<1x64xf32>
    %230 = arith.mulf %228, %229 : vector<1x64xf32>
    %c9_99 = arith.constant 9 : index
    %c0_100 = arith.constant 0 : index
    %231 = vector.load %arg24[%c9_99, %c0_100] : memref<32x64xf32, #tpu.memory_space<vmem>>, vector<1x64xf32>
    tpu.vector_store %arg24[%c9_99, %c0_100], %230 {strides = array<i32>} : memref<32x64xf32, #tpu.memory_space<vmem>>, vector<1x64xf32>,
    %c10 = arith.constant 10 : index
    %232 = memref.load %arg0[%c10] : memref<32xi32, #tpu.memory_space<smem>>
    %c10_101 = arith.constant 10 : index
    %233 = memref.load %arg1[%c10_101] : memref<32xf32, #tpu.memory_space<smem>>
    %234 = arith.index_cast %232 : i32 to index
    %c0_102 = arith.constant 0 : index
    %235 = vector.load %arg23[%234, %c0_102] : memref<16x64xf32, #tpu.memory_space<vmem>>, vector<1x64xf32>
    %236 = vector.broadcast %233 : f32 to vector<1x64xf32>
    %237 = arith.mulf %235, %236 : vector<1x64xf32>
    %c10_103 = arith.constant 10 : index
    %c0_104 = arith.constant 0 : index
    %238 = vector.load %arg24[%c10_103, %c0_104] : memref<32x64xf32, #tpu.memory_space<vmem>>, vector<1x64xf32>
    tpu.vector_store %arg24[%c10_103, %c0_104], %237 {strides = array<i32>} : memref<32x64xf32, #tpu.memory_space<vmem>>, vector<1x64xf32>,
    %c11 = arith.constant 11 : index
    %239 = memref.load %arg0[%c11] : memref<32xi32, #tpu.memory_space<smem>>
    %c11_105 = arith.constant 11 : index
    %240 = memref.load %arg1[%c11_105] : memref<32xf32, #tpu.memory_space<smem>>
    %241 = arith.index_cast %239 : i32 to index
    %c0_106 = arith.constant 0 : index
    %242 = vector.load %arg23[%241, %c0_106] : memref<16x64xf32, #tpu.memory_space<vmem>>, vector<1x64xf32>
    %243 = vector.broadcast %240 : f32 to vector<1x64xf32>
    %244 = arith.mulf %242, %243 : vector<1x64xf32>
    %c11_107 = arith.constant 11 : index
    %c0_108 = arith.constant 0 : index
    %245 = vector.load %arg24[%c11_107, %c0_108] : memref<32x64xf32, #tpu.memory_space<vmem>>, vector<1x64xf32>
    tpu.vector_store %arg24[%c11_107, %c0_108], %244 {strides = array<i32>} : memref<32x64xf32, #tpu.memory_space<vmem>>, vector<1x64xf32>,
    %c12 = arith.constant 12 : index
    %246 = memref.load %arg0[%c12] : memref<32xi32, #tpu.memory_space<smem>>
    %c12_109 = arith.constant 12 : index
    %247 = memref.load %arg1[%c12_109] : memref<32xf32, #tpu.memory_space<smem>>
    %248 = arith.index_cast %246 : i32 to index
    %c0_110 = arith.constant 0 : index
    %249 = vector.load %arg23[%248, %c0_110] : memref<16x64xf32, #tpu.memory_space<vmem>>, vector<1x64xf32>
    %250 = vector.broadcast %247 : f32 to vector<1x64xf32>
    %251 = arith.mulf %249, %250 : vector<1x64xf32>
    %c12_111 = arith.constant 12 : index
    %c0_112 = arith.constant 0 : index
    %252 = vector.load %arg24[%c12_111, %c0_112] : memref<32x64xf32, #tpu.memory_space<vmem>>, vector<1x64xf32>
    tpu.vector_store %arg24[%c12_111, %c0_112], %251 {strides = array<i32>} : memref<32x64xf32, #tpu.memory_space<vmem>>, vector<1x64xf32>,
    %c13 = arith.constant 13 : index
    %253 = memref.load %arg0[%c13] : memref<32xi32, #tpu.memory_space<smem>>
    %c13_113 = arith.constant 13 : index
    %254 = memref.load %arg1[%c13_113] : memref<32xf32, #tpu.memory_space<smem>>
    %255 = arith.index_cast %253 : i32 to index
    %c0_114 = arith.constant 0 : index
    %256 = vector.load %arg23[%255, %c0_114] : memref<16x64xf32, #tpu.memory_space<vmem>>, vector<1x64xf32>
    %257 = vector.broadcast %254 : f32 to vector<1x64xf32>
    %258 = arith.mulf %256, %257 : vector<1x64xf32>
    %c13_115 = arith.constant 13 : index
    %c0_116 = arith.constant 0 : index
    %259 = vector.load %arg24[%c13_115, %c0_116] : memref<32x64xf32, #tpu.memory_space<vmem>>, vector<1x64xf32>
    tpu.vector_store %arg24[%c13_115, %c0_116], %258 {strides = array<i32>} : memref<32x64xf32, #tpu.memory_space<vmem>>, vector<1x64xf32>,
    %c14 = arith.constant 14 : index
    %260 = memref.load %arg0[%c14] : memref<32xi32, #tpu.memory_space<smem>>
    %c14_117 = arith.constant 14 : index
    %261 = memref.load %arg1[%c14_117] : memref<32xf32, #tpu.memory_space<smem>>
    %262 = arith.index_cast %260 : i32 to index
    %c0_118 = arith.constant 0 : index
    %263 = vector.load %arg23[%262, %c0_118] : memref<16x64xf32, #tpu.memory_space<vmem>>, vector<1x64xf32>
    %264 = vector.broadcast %261 : f32 to vector<1x64xf32>
    %265 = arith.mulf %263, %264 : vector<1x64xf32>
    %c14_119 = arith.constant 14 : index
    %c0_120 = arith.constant 0 : index
    %266 = vector.load %arg24[%c14_119, %c0_120] : memref<32x64xf32, #tpu.memory_space<vmem>>, vector<1x64xf32>
    tpu.vector_store %arg24[%c14_119, %c0_120], %265 {strides = array<i32>} : memref<32x64xf32, #tpu.memory_space<vmem>>, vector<1x64xf32>,
    %c15 = arith.constant 15 : index
    %267 = memref.load %arg0[%c15] : memref<32xi32, #tpu.memory_space<smem>>
    %c15_121 = arith.constant 15 : index
    %268 = memref.load %arg1[%c15_121] : memref<32xf32, #tpu.memory_space<smem>>
    %269 = arith.index_cast %267 : i32 to index
    %c0_122 = arith.constant 0 : index
    %270 = vector.load %arg23[%269, %c0_122] : memref<16x64xf32, #tpu.memory_space<vmem>>, vector<1x64xf32>
    %271 = vector.broadcast %268 : f32 to vector<1x64xf32>
    %272 = arith.mulf %270, %271 : vector<1x64xf32>
    %c15_123 = arith.constant 15 : index
    %c0_124 = arith.constant 0 : index
    %273 = vector.load %arg24[%c15_123, %c0_124] : memref<32x64xf32, #tpu.memory_space<vmem>>, vector<1x64xf32>
    tpu.vector_store %arg24[%c15_123, %c0_124], %272 {strides = array<i32>} : memref<32x64xf32, #tpu.memory_space<vmem>>, vector<1x64xf32>,
    %c16 = arith.constant 16 : index
    %274 = memref.load %arg0[%c16] : memref<32xi32, #tpu.memory_space<smem>>
    %c16_125 = arith.constant 16 : index
    %275 = memref.load %arg1[%c16_125] : memref<32xf32, #tpu.memory_space<smem>>
    %276 = arith.index_cast %274 : i32 to index
    %c0_126 = arith.constant 0 : index
    %277 = vector.load %arg23[%276, %c0_126] : memref<16x64xf32, #tpu.memory_space<vmem>>, vector<1x64xf32>
    %278 = vector.broadcast %275 : f32 to vector<1x64xf32>
    %279 = arith.mulf %277, %278 : vector<1x64xf32>
    %c16_127 = arith.constant 16 : index
    %c0_128 = arith.constant 0 : index
    %280 = vector.load %arg24[%c16_127, %c0_128] : memref<32x64xf32, #tpu.memory_space<vmem>>, vector<1x64xf32>
    tpu.vector_store %arg24[%c16_127, %c0_128], %279 {strides = array<i32>} : memref<32x64xf32, #tpu.memory_space<vmem>>, vector<1x64xf32>,
    %c17 = arith.constant 17 : index
    %281 = memref.load %arg0[%c17] : memref<32xi32, #tpu.memory_space<smem>>
    %c17_129 = arith.constant 17 : index
    %282 = memref.load %arg1[%c17_129] : memref<32xf32, #tpu.memory_space<smem>>
    %283 = arith.index_cast %281 : i32 to index
    %c0_130 = arith.constant 0 : index
    %284 = vector.load %arg23[%283, %c0_130] : memref<16x64xf32, #tpu.memory_space<vmem>>, vector<1x64xf32>
    %285 = vector.broadcast %282 : f32 to vector<1x64xf32>
    %286 = arith.mulf %284, %285 : vector<1x64xf32>
    %c17_131 = arith.constant 17 : index
    %c0_132 = arith.constant 0 : index
    %287 = vector.load %arg24[%c17_131, %c0_132] : memref<32x64xf32, #tpu.memory_space<vmem>>, vector<1x64xf32>
    tpu.vector_store %arg24[%c17_131, %c0_132], %286 {strides = array<i32>} : memref<32x64xf32, #tpu.memory_space<vmem>>, vector<1x64xf32>,
    %c18 = arith.constant 18 : index
    %288 = memref.load %arg0[%c18] : memref<32xi32, #tpu.memory_space<smem>>
    %c18_133 = arith.constant 18 : index
    %289 = memref.load %arg1[%c18_133] : memref<32xf32, #tpu.memory_space<smem>>
    %290 = arith.index_cast %288 : i32 to index
    %c0_134 = arith.constant 0 : index
    %291 = vector.load %arg23[%290, %c0_134] : memref<16x64xf32, #tpu.memory_space<vmem>>, vector<1x64xf32>
    %292 = vector.broadcast %289 : f32 to vector<1x64xf32>
    %293 = arith.mulf %291, %292 : vector<1x64xf32>
    %c18_135 = arith.constant 18 : index
    %c0_136 = arith.constant 0 : index
    %294 = vector.load %arg24[%c18_135, %c0_136] : memref<32x64xf32, #tpu.memory_space<vmem>>, vector<1x64xf32>
    tpu.vector_store %arg24[%c18_135, %c0_136], %293 {strides = array<i32>} : memref<32x64xf32, #tpu.memory_space<vmem>>, vector<1x64xf32>,
    %c19 = arith.constant 19 : index
    %295 = memref.load %arg0[%c19] : memref<32xi32, #tpu.memory_space<smem>>
    %c19_137 = arith.constant 19 : index
    %296 = memref.load %arg1[%c19_137] : memref<32xf32, #tpu.memory_space<smem>>
    %297 = arith.index_cast %295 : i32 to index
    %c0_138 = arith.constant 0 : index
    %298 = vector.load %arg23[%297, %c0_138] : memref<16x64xf32, #tpu.memory_space<vmem>>, vector<1x64xf32>
    %299 = vector.broadcast %296 : f32 to vector<1x64xf32>
    %300 = arith.mulf %298, %299 : vector<1x64xf32>
    %c19_139 = arith.constant 19 : index
    %c0_140 = arith.constant 0 : index
    %301 = vector.load %arg24[%c19_139, %c0_140] : memref<32x64xf32, #tpu.memory_space<vmem>>, vector<1x64xf32>
    tpu.vector_store %arg24[%c19_139, %c0_140], %300 {strides = array<i32>} : memref<32x64xf32, #tpu.memory_space<vmem>>, vector<1x64xf32>,
    %c20 = arith.constant 20 : index
    %302 = memref.load %arg0[%c20] : memref<32xi32, #tpu.memory_space<smem>>
    %c20_141 = arith.constant 20 : index
    %303 = memref.load %arg1[%c20_141] : memref<32xf32, #tpu.memory_space<smem>>
    %304 = arith.index_cast %302 : i32 to index
    %c0_142 = arith.constant 0 : index
    %305 = vector.load %arg23[%304, %c0_142] : memref<16x64xf32, #tpu.memory_space<vmem>>, vector<1x64xf32>
    %306 = vector.broadcast %303 : f32 to vector<1x64xf32>
    %307 = arith.mulf %305, %306 : vector<1x64xf32>
    %c20_143 = arith.constant 20 : index
    %c0_144 = arith.constant 0 : index
    %308 = vector.load %arg24[%c20_143, %c0_144] : memref<32x64xf32, #tpu.memory_space<vmem>>, vector<1x64xf32>
    tpu.vector_store %arg24[%c20_143, %c0_144], %307 {strides = array<i32>} : memref<32x64xf32, #tpu.memory_space<vmem>>, vector<1x64xf32>,
    %c21 = arith.constant 21 : index
    %309 = memref.load %arg0[%c21] : memref<32xi32, #tpu.memory_space<smem>>
    %c21_145 = arith.constant 21 : index
    %310 = memref.load %arg1[%c21_145] : memref<32xf32, #tpu.memory_space<smem>>
    %311 = arith.index_cast %309 : i32 to index
    %c0_146 = arith.constant 0 : index
    %312 = vector.load %arg23[%311, %c0_146] : memref<16x64xf32, #tpu.memory_space<vmem>>, vector<1x64xf32>
    %313 = vector.broadcast %310 : f32 to vector<1x64xf32>
    %314 = arith.mulf %312, %313 : vector<1x64xf32>
    %c21_147 = arith.constant 21 : index
    %c0_148 = arith.constant 0 : index
    %315 = vector.load %arg24[%c21_147, %c0_148] : memref<32x64xf32, #tpu.memory_space<vmem>>, vector<1x64xf32>
    tpu.vector_store %arg24[%c21_147, %c0_148], %314 {strides = array<i32>} : memref<32x64xf32, #tpu.memory_space<vmem>>, vector<1x64xf32>,
    %c22 = arith.constant 22 : index
    %316 = memref.load %arg0[%c22] : memref<32xi32, #tpu.memory_space<smem>>
    %c22_149 = arith.constant 22 : index
    %317 = memref.load %arg1[%c22_149] : memref<32xf32, #tpu.memory_space<smem>>
    %318 = arith.index_cast %316 : i32 to index
    %c0_150 = arith.constant 0 : index
    %319 = vector.load %arg23[%318, %c0_150] : memref<16x64xf32, #tpu.memory_space<vmem>>, vector<1x64xf32>
    %320 = vector.broadcast %317 : f32 to vector<1x64xf32>
    %321 = arith.mulf %319, %320 : vector<1x64xf32>
    %c22_151 = arith.constant 22 : index
    %c0_152 = arith.constant 0 : index
    %322 = vector.load %arg24[%c22_151, %c0_152] : memref<32x64xf32, #tpu.memory_space<vmem>>, vector<1x64xf32>
    tpu.vector_store %arg24[%c22_151, %c0_152], %321 {strides = array<i32>} : memref<32x64xf32, #tpu.memory_space<vmem>>, vector<1x64xf32>,
    %c23 = arith.constant 23 : index
    %323 = memref.load %arg0[%c23] : memref<32xi32, #tpu.memory_space<smem>>
    %c23_153 = arith.constant 23 : index
    %324 = memref.load %arg1[%c23_153] : memref<32xf32, #tpu.memory_space<smem>>
    %325 = arith.index_cast %323 : i32 to index
    %c0_154 = arith.constant 0 : index
    %326 = vector.load %arg23[%325, %c0_154] : memref<16x64xf32, #tpu.memory_space<vmem>>, vector<1x64xf32>
    %327 = vector.broadcast %324 : f32 to vector<1x64xf32>
    %328 = arith.mulf %326, %327 : vector<1x64xf32>
    %c23_155 = arith.constant 23 : index
    %c0_156 = arith.constant 0 : index
    %329 = vector.load %arg24[%c23_155, %c0_156] : memref<32x64xf32, #tpu.memory_space<vmem>>, vector<1x64xf32>
    tpu.vector_store %arg24[%c23_155, %c0_156], %328 {strides = array<i32>} : memref<32x64xf32, #tpu.memory_space<vmem>>, vector<1x64xf32>,
    %c24 = arith.constant 24 : index
    %330 = memref.load %arg0[%c24] : memref<32xi32, #tpu.memory_space<smem>>
    %c24_157 = arith.constant 24 : index
    %331 = memref.load %arg1[%c24_157] : memref<32xf32, #tpu.memory_space<smem>>
    %332 = arith.index_cast %330 : i32 to index
    %c0_158 = arith.constant 0 : index
    %333 = vector.load %arg23[%332, %c0_158] : memref<16x64xf32, #tpu.memory_space<vmem>>, vector<1x64xf32>
    %334 = vector.broadcast %331 : f32 to vector<1x64xf32>
    %335 = arith.mulf %333, %334 : vector<1x64xf32>
    %c24_159 = arith.constant 24 : index
    %c0_160 = arith.constant 0 : index
    %336 = vector.load %arg24[%c24_159, %c0_160] : memref<32x64xf32, #tpu.memory_space<vmem>>, vector<1x64xf32>
    tpu.vector_store %arg24[%c24_159, %c0_160], %335 {strides = array<i32>} : memref<32x64xf32, #tpu.memory_space<vmem>>, vector<1x64xf32>,
    %c25 = arith.constant 25 : index
    %337 = memref.load %arg0[%c25] : memref<32xi32, #tpu.memory_space<smem>>
    %c25_161 = arith.constant 25 : index
    %338 = memref.load %arg1[%c25_161] : memref<32xf32, #tpu.memory_space<smem>>
    %339 = arith.index_cast %337 : i32 to index
    %c0_162 = arith.constant 0 : index
    %340 = vector.load %arg23[%339, %c0_162] : memref<16x64xf32, #tpu.memory_space<vmem>>, vector<1x64xf32>
    %341 = vector.broadcast %338 : f32 to vector<1x64xf32>
    %342 = arith.mulf %340, %341 : vector<1x64xf32>
    %c25_163 = arith.constant 25 : index
    %c0_164 = arith.constant 0 : index
    %343 = vector.load %arg24[%c25_163, %c0_164] : memref<32x64xf32, #tpu.memory_space<vmem>>, vector<1x64xf32>
    tpu.vector_store %arg24[%c25_163, %c0_164], %342 {strides = array<i32>} : memref<32x64xf32, #tpu.memory_space<vmem>>, vector<1x64xf32>,
    %c26 = arith.constant 26 : index
    %344 = memref.load %arg0[%c26] : memref<32xi32, #tpu.memory_space<smem>>
    %c26_165 = arith.constant 26 : index
    %345 = memref.load %arg1[%c26_165] : memref<32xf32, #tpu.memory_space<smem>>
    %346 = arith.index_cast %344 : i32 to index
    %c0_166 = arith.constant 0 : index
    %347 = vector.load %arg23[%346, %c0_166] : memref<16x64xf32, #tpu.memory_space<vmem>>, vector<1x64xf32>
    %348 = vector.broadcast %345 : f32 to vector<1x64xf32>
    %349 = arith.mulf %347, %348 : vector<1x64xf32>
    %c26_167 = arith.constant 26 : index
    %c0_168 = arith.constant 0 : index
    %350 = vector.load %arg24[%c26_167, %c0_168] : memref<32x64xf32, #tpu.memory_space<vmem>>, vector<1x64xf32>
    tpu.vector_store %arg24[%c26_167, %c0_168], %349 {strides = array<i32>} : memref<32x64xf32, #tpu.memory_space<vmem>>, vector<1x64xf32>,
    %c27 = arith.constant 27 : index
    %351 = memref.load %arg0[%c27] : memref<32xi32, #tpu.memory_space<smem>>
    %c27_169 = arith.constant 27 : index
    %352 = memref.load %arg1[%c27_169] : memref<32xf32, #tpu.memory_space<smem>>
    %353 = arith.index_cast %351 : i32 to index
    %c0_170 = arith.constant 0 : index
    %354 = vector.load %arg23[%353, %c0_170] : memref<16x64xf32, #tpu.memory_space<vmem>>, vector<1x64xf32>
    %355 = vector.broadcast %352 : f32 to vector<1x64xf32>
    %356 = arith.mulf %354, %355 : vector<1x64xf32>
    %c27_171 = arith.constant 27 : index
    %c0_172 = arith.constant 0 : index
    %357 = vector.load %arg24[%c27_171, %c0_172] : memref<32x64xf32, #tpu.memory_space<vmem>>, vector<1x64xf32>
    tpu.vector_store %arg24[%c27_171, %c0_172], %356 {strides = array<i32>} : memref<32x64xf32, #tpu.memory_space<vmem>>, vector<1x64xf32>,
    %c28 = arith.constant 28 : index
    %358 = memref.load %arg0[%c28] : memref<32xi32, #tpu.memory_space<smem>>
    %c28_173 = arith.constant 28 : index
    %359 = memref.load %arg1[%c28_173] : memref<32xf32, #tpu.memory_space<smem>>
    %360 = arith.index_cast %358 : i32 to index
    %c0_174 = arith.constant 0 : index
    %361 = vector.load %arg23[%360, %c0_174] : memref<16x64xf32, #tpu.memory_space<vmem>>, vector<1x64xf32>
    %362 = vector.broadcast %359 : f32 to vector<1x64xf32>
    %363 = arith.mulf %361, %362 : vector<1x64xf32>
    %c28_175 = arith.constant 28 : index
    %c0_176 = arith.constant 0 : index
    %364 = vector.load %arg24[%c28_175, %c0_176] : memref<32x64xf32, #tpu.memory_space<vmem>>, vector<1x64xf32>
    tpu.vector_store %arg24[%c28_175, %c0_176], %363 {strides = array<i32>} : memref<32x64xf32, #tpu.memory_space<vmem>>, vector<1x64xf32>,
    %c29 = arith.constant 29 : index
    %365 = memref.load %arg0[%c29] : memref<32xi32, #tpu.memory_space<smem>>
    %c29_177 = arith.constant 29 : index
    %366 = memref.load %arg1[%c29_177] : memref<32xf32, #tpu.memory_space<smem>>
    %367 = arith.index_cast %365 : i32 to index
    %c0_178 = arith.constant 0 : index
    %368 = vector.load %arg23[%367, %c0_178] : memref<16x64xf32, #tpu.memory_space<vmem>>, vector<1x64xf32>
    %369 = vector.broadcast %366 : f32 to vector<1x64xf32>
    %370 = arith.mulf %368, %369 : vector<1x64xf32>
    %c29_179 = arith.constant 29 : index
    %c0_180 = arith.constant 0 : index
    %371 = vector.load %arg24[%c29_179, %c0_180] : memref<32x64xf32, #tpu.memory_space<vmem>>, vector<1x64xf32>
    tpu.vector_store %arg24[%c29_179, %c0_180], %370 {strides = array<i32>} : memref<32x64xf32, #tpu.memory_space<vmem>>, vector<1x64xf32>,
    %c30 = arith.constant 30 : index
    %372 = memref.load %arg0[%c30] : memref<32xi32, #tpu.memory_space<smem>>
    %c30_181 = arith.constant 30 : index
    %373 = memref.load %arg1[%c30_181] : memref<32xf32, #tpu.memory_space<smem>>
    %374 = arith.index_cast %372 : i32 to index
    %c0_182 = arith.constant 0 : index
    %375 = vector.load %arg23[%374, %c0_182] : memref<16x64xf32, #tpu.memory_space<vmem>>, vector<1x64xf32>
    %376 = vector.broadcast %373 : f32 to vector<1x64xf32>
    %377 = arith.mulf %375, %376 : vector<1x64xf32>
    %c30_183 = arith.constant 30 : index
    %c0_184 = arith.constant 0 : index
    %378 = vector.load %arg24[%c30_183, %c0_184] : memref<32x64xf32, #tpu.memory_space<vmem>>, vector<1x64xf32>
    tpu.vector_store %arg24[%c30_183, %c0_184], %377 {strides = array<i32>} : memref<32x64xf32, #tpu.memory_space<vmem>>, vector<1x64xf32>,
    %c31 = arith.constant 31 : index
    %379 = memref.load %arg0[%c31] : memref<32xi32, #tpu.memory_space<smem>>
    %c31_185 = arith.constant 31 : index
    %380 = memref.load %arg1[%c31_185] : memref<32xf32, #tpu.memory_space<smem>>
    %381 = arith.index_cast %379 : i32 to index
    %c0_186 = arith.constant 0 : index
    %382 = vector.load %arg23[%381, %c0_186] : memref<16x64xf32, #tpu.memory_space<vmem>>, vector<1x64xf32>
    %383 = vector.broadcast %380 : f32 to vector<1x64xf32>
    %384 = arith.mulf %382, %383 : vector<1x64xf32>
    %c31_187 = arith.constant 31 : index
    %c0_188 = arith.constant 0 : index
    %385 = vector.load %arg24[%c31_187, %c0_188] : memref<32x64xf32, #tpu.memory_space<vmem>>, vector<1x64xf32>
    tpu.vector_store %arg24[%c31_187, %c0_188], %384 {strides = array<i32>} : memref<32x64xf32, #tpu.memory_space<vmem>>, vector<1x64xf32>,
    %c0_189 = arith.constant 0 : index
    %c0_190 = arith.constant 0 : index
    %386 = vector.load %arg24[%c0_189, %c0_190] : memref<32x64xf32, #tpu.memory_space<vmem>>, vector<32x64xf32>
    %387 = arith.truncf %386 : vector<32x64xf32> to vector<32x64xbf16>
    %c0_191 = arith.constant 0 : index
    %c0_192 = arith.constant 0 : index
    %388 = vector.load %arg19[%c0_191, %c0_192] : memref<64x192xbf16, #tpu.memory_space<vmem>>, vector<64x192xbf16>
    %cst_193 = arith.constant dense<0.000000e+00> : vector<32x192xf32>
    %389 = tpu.matmul %387, %388, %cst_193 {dimension_numbers = #tpu.dot_dimension_numbers<[1], [0], [0], [1], [0, 0, 1, 1], [], []>} : vector<32x64xbf16>, vector<64x192xbf16>, vector<32x192xf32> -> vector<32x192xf32>
    %c0_194 = arith.constant 0 : index
    %c0_195 = arith.constant 0 : index
    %390 = vector.load %arg21[%c0_194, %c0_195] : memref<1x192xf32, #tpu.memory_space<vmem>>, vector<1x192xf32>
    %391 = vector.broadcast %390 : vector<1x192xf32> to vector<32x192xf32>
    %392 = arith.addf %389, %391 : vector<32x192xf32>
    %c0_196 = arith.constant 0 : index
    %c0_197 = arith.constant 0 : index
    %393 = vector.load %arg25[%c0_196, %c0_197] : memref<32x192xf32, #tpu.memory_space<vmem>>, vector<32x192xf32>
    tpu.vector_store %arg25[%c0_196, %c0_197], %392 {strides = array<i32>} : memref<32x192xf32, #tpu.memory_space<vmem>>, vector<32x192xf32>,
    %c0_198 = arith.constant 0 : index
    %c0_199 = arith.constant 0 : index
    %394 = vector.load %arg20[%c0_198, %c0_199] : memref<48x192xbf16, #tpu.memory_space<vmem>>, vector<48x192xbf16>
    %cst_200 = arith.constant 0.000000e+00 : f32
    %395 = vector.broadcast %cst_200 : f32 to vector<8x48xf32>
    %cst_201 = arith.constant 0.000000e+00 : f32
    %396 = vector.broadcast %cst_201 : f32 to vector<8x48xf32>
    %c0_i32 = arith.constant 0 : i32
    %c4_i32 = arith.constant 4 : i32
    %397 = arith.addi %c0_i32, %c4_i32 : i32
    %c1_i32 = arith.constant 1 : i32
    %398:2 = scf.for %arg26 = %c0_i32 to %397 step %c1_i32 iter_args(%arg27 = %395, %arg28 = %396) -> (vector<8x48xf32>, vector<8x48xf32>)  : i32 {
      %c8_i32 = arith.constant 8 : i32
      %441 = arith.muli %arg26, %c8_i32 : i32
      %442 = tpu.assume_multiple %441, 8 : i32
      %443 = arith.index_cast %442 : i32 to index
      %c0_226 = arith.constant 0 : index
      %444 = vector.load %arg25[%443, %c0_226] : memref<32x192xf32, #tpu.memory_space<vmem>>, vector<8x192xf32>
      %445 = arith.truncf %arg27 : vector<8x48xf32> to vector<8x48xbf16>
      %cst_227 = arith.constant dense<0.000000e+00> : vector<8x192xf32>
      %446 = tpu.matmul %445, %394, %cst_227 {dimension_numbers = #tpu.dot_dimension_numbers<[1], [0], [0], [1], [0, 0, 1, 1], [], []>} : vector<8x48xbf16>, vector<48x192xbf16>, vector<8x192xf32> -> vector<8x192xf32>
      %447 = arith.addf %444, %446 : vector<8x192xf32>
      %448 = vector.extract_strided_slice %447 {offsets = [0, 0], sizes = [8, 48], strides = [1, 1]} : vector<8x192xf32> to vector<8x48xf32>
      %449 = arith.negf %448 : vector<8x48xf32>
      %450 = math.exp %449 : vector<8x48xf32>
      %cst_228 = arith.constant 1.000000e+00 : f32
      %451 = vector.broadcast %cst_228 : f32 to vector<8x48xf32>
      %452 = arith.addf %451, %450 : vector<8x48xf32>
      %453 = arith.divf %451, %452 : vector<8x48xf32>
      %454 = vector.extract_strided_slice %447 {offsets = [0, 48], sizes = [8, 48], strides = [1, 1]} : vector<8x192xf32> to vector<8x48xf32>
      %455 = arith.negf %454 : vector<8x48xf32>
      %456 = math.exp %455 : vector<8x48xf32>
      %cst_229 = arith.constant 1.000000e+00 : f32
      %457 = vector.broadcast %cst_229 : f32 to vector<8x48xf32>
      %458 = arith.addf %457, %456 : vector<8x48xf32>
      %459 = arith.divf %457, %458 : vector<8x48xf32>
      %460 = vector.extract_strided_slice %447 {offsets = [0, 96], sizes = [8, 48], strides = [1, 1]} : vector<8x192xf32> to vector<8x48xf32>
      %461 = math.tanh %460 : vector<8x48xf32>
      %462 = vector.extract_strided_slice %447 {offsets = [0, 144], sizes = [8, 48], strides = [1, 1]} : vector<8x192xf32> to vector<8x48xf32>
      %463 = arith.negf %462 : vector<8x48xf32>
      %464 = math.exp %463 : vector<8x48xf32>
      %cst_230 = arith.constant 1.000000e+00 : f32
      %465 = vector.broadcast %cst_230 : f32 to vector<8x48xf32>
      %466 = arith.addf %465, %464 : vector<8x48xf32>
      %467 = arith.divf %465, %466 : vector<8x48xf32>
      %468 = arith.mulf %459, %arg28 : vector<8x48xf32>
      %469 = arith.mulf %453, %461 : vector<8x48xf32>
      %470 = arith.addf %468, %469 : vector<8x48xf32>
      %471 = math.tanh %470 : vector<8x48xf32>
      %472 = arith.mulf %467, %471 : vector<8x48xf32>
      %473 = arith.index_cast %442 : i32 to index
      %c0_231 = arith.constant 0 : index
      %474 = vector.load %arg5[%473, %c0_231] : memref<32x48xf32, #tpu.memory_space<vmem>>, vector<8x48xf32>
      %475 = arith.mulf %474, %472 : vector<8x48xf32>
      %cst_232 = arith.constant 1.000000e+00 : f32
      %476 = vector.broadcast %cst_232 : f32 to vector<8x48xf32>
      %477 = arith.subf %476, %474 : vector<8x48xf32>
      %478 = arith.mulf %477, %arg27 : vector<8x48xf32>
      %479 = arith.addf %475, %478 : vector<8x48xf32>
      %480 = arith.mulf %474, %470 : vector<8x48xf32>
      %cst_233 = arith.constant 1.000000e+00 : f32
      %481 = vector.broadcast %cst_233 : f32 to vector<8x48xf32>
      %482 = arith.subf %481, %474 : vector<8x48xf32>
      %483 = arith.mulf %482, %arg28 : vector<8x48xf32>
      %484 = arith.addf %480, %483 : vector<8x48xf32>
      scf.yield %479, %484 : vector<8x48xf32>, vector<8x48xf32>
    }
    %c4_i32_202 = arith.constant 4 : i32
    %c0_203 = arith.constant 0 : index
    %c0_204 = arith.constant 0 : index
    %c0_205 = arith.constant 0 : index
    %399 = vector.load %arg6[%c0_203, %c0_204, %c0_205] : memref<6x10x16xf32, #tpu.memory_space<vmem>>, vector<6x10x16xf32>
    %400 = vector.shape_cast %399 : vector<6x10x16xf32> to vector<60x16xf32>
    %401 = arith.truncf %400 : vector<60x16xf32> to vector<60x16xbf16>
    %c0_206 = arith.constant 0 : index
    %c0_207 = arith.constant 0 : index
    %402 = vector.load %arg16[%c0_206, %c0_207] : memref<16x32xbf16, #tpu.memory_space<vmem>>, vector<16x32xbf16>
    %cst_208 = arith.constant dense<0.000000e+00> : vector<60x32xf32>
    %403 = tpu.matmul %401, %402, %cst_208 {dimension_numbers = #tpu.dot_dimension_numbers<[1], [0], [0], [1], [0, 0, 1, 1], [], []>} : vector<60x16xbf16>, vector<16x32xbf16>, vector<60x32xf32> -> vector<60x32xf32>
    %404 = math.tanh %403 : vector<60x32xf32>
    %405 = vector.shape_cast %404 : vector<60x32xf32> to vector<6x10x32xf32>
    %c0_209 = arith.constant 0 : index
    %c0_210 = arith.constant 0 : index
    %406 = vector.load %arg17[%c0_209, %c0_210] : memref<1x32xf32, #tpu.memory_space<vmem>>, vector<1x32xf32>
    %407 = vector.shape_cast %406 : vector<1x32xf32> to vector<1x1x32xf32>
    %408 = vector.broadcast %407 : vector<1x1x32xf32> to vector<6x10x32xf32>
    %409 = arith.mulf %405, %408 : vector<6x10x32xf32>
    %cst_211 = arith.constant dense<0.000000e+00> : vector<6x10xf32>
    %410 = vector.multi_reduction <add>, %409, %cst_211 [2] : vector<6x10x32xf32> to vector<6x10xf32>
    %c0_212 = arith.constant 0 : index
    %c0_213 = arith.constant 0 : index
    %411 = vector.load %arg7[%c0_212, %c0_213] : memref<6x10xf32, #tpu.memory_space<vmem>>, vector<6x10xf32>
    %cst_214 = arith.constant 1.000000e+00 : f32
    %412 = vector.broadcast %cst_214 : f32 to vector<6x10xf32>
    %413 = arith.subf %411, %412 : vector<6x10xf32>
    %cst_215 = arith.constant 1.000000e+09 : f32
    %414 = vector.broadcast %cst_215 : f32 to vector<6x10xf32>
    %415 = arith.mulf %413, %414 : vector<6x10xf32>
    %416 = arith.addf %410, %415 : vector<6x10xf32>
    %cst_216 = arith.constant dense<0xFF800000> : vector<6xf32>
    %417 = vector.multi_reduction <maximumf>, %416, %cst_216 [1] : vector<6x10xf32> to vector<6xf32>
    %418 = vector.shape_cast %417 : vector<6xf32> to vector<6x1xf32>
    %419 = vector.broadcast %418 : vector<6x1xf32> to vector<6x10xf32>
    %420 = arith.subf %416, %419 : vector<6x10xf32>
    %421 = math.exp %420 : vector<6x10xf32>
    %422 = arith.mulf %421, %411 : vector<6x10xf32>
    %cst_217 = arith.constant dense<0.000000e+00> : vector<6xf32>
    %423 = vector.multi_reduction <add>, %422, %cst_217 [1] : vector<6x10xf32> to vector<6xf32>
    %424 = vector.shape_cast %423 : vector<6xf32> to vector<6x1xf32>
    %cst_218 = arith.constant 9.99999993E-9 : f32
    %425 = vector.broadcast %cst_218 : f32 to vector<6x1xf32>
    %426 = arith.addf %424, %425 : vector<6x1xf32>
    %427 = vector.broadcast %426 : vector<6x1xf32> to vector<6x10xf32>
    %428 = arith.divf %422, %427 : vector<6x10xf32>
    %429 = vector.shape_cast %428 : vector<6x10xf32> to vector<6x10x1xf32>
    %430 = vector.broadcast %429 : vector<6x10x1xf32> to vector<6x10x16xf32>
    %431 = arith.mulf %430, %399 : vector<6x10x16xf32>
    %cst_219 = arith.constant dense<0.000000e+00> : vector<6x16xf32>
    %432 = vector.multi_reduction <add>, %431, %cst_219 [1] : vector<6x10x16xf32> to vector<6x16xf32>
    %433 = arith.truncf %432 : vector<6x16xf32> to vector<6x16xbf16>
    %c0_220 = arith.constant 0 : index
    %c0_221 = arith.constant 0 : index
    %434 = vector.load %arg18[%c0_220, %c0_221] : memref<16x16xbf16, #tpu.memory_space<vmem>>, vector<16x16xbf16>
    %cst_222 = arith.constant dense<0.000000e+00> : vector<6x16xf32>
    %435 = tpu.matmul %433, %434, %cst_222 {dimension_numbers = #tpu.dot_dimension_numbers<[1], [0], [0], [1], [0, 0, 1, 1], [], []>} : vector<6x16xbf16>, vector<16x16xbf16>, vector<6x16xf32> -> vector<6x16xf32>
    %436 = tpu.concatenate %435, %34 in 1 : vector<6x16xf32>, vector<6x32xf32> -> vector<6x48xf32>
    %437 = arith.truncf %436 : vector<6x48xf32> to vector<6x48xbf16>
    %438 = arith.truncf %398#0 : vector<8x48xf32> to vector<8x48xbf16>
    %cst_223 = arith.constant dense<0.000000e+00> : vector<6x8xf32>
    %439 = tpu.matmul %437, %438, %cst_223 {dimension_numbers = #tpu.dot_dimension_numbers<[1], [1], [0], [0], [0, 0, 1, 0], [], []>} : vector<6x48xbf16>, vector<8x48xbf16>, vector<6x8xf32> -> vector<6x8xf32>
    %c0_224 = arith.constant 0 : index
    %c0_225 = arith.constant 0 : index
    %440 = vector.load %arg22[%c0_224, %c0_225] : memref<6x8xf32, #tpu.memory_space<vmem>>, vector<6x8xf32>
    tpu.vector_store %arg22[%c0_224, %c0_225], %439 {strides = array<i32>} : memref<6x8xf32, #tpu.memory_space<vmem>>, vector<6x8xf32>,
    return
  }
}

</mosaic_0001>

<llo_original>
// kernel: tpu_custom_call.1
$region0: #{tpu_custom_call.1}
  #allocation0 [shape = 'u32[]', space=smem, size = 0x4, offset = 0x4, fixed_abs, tag = 'smem constant byte address 0x4 - core index']
  #allocation1 [shape = 'u32[72,128]{1,0:T(1,128)}', space=vmem, size = 0x9000, scoped, tag = 'internal scratch']
  #allocation2 [shape = 'f32[16,64]{1,0:T(8,128)}', space=vmem, size = 0x2000, scoped, tag = 'scratch operand']
  #allocation3 [shape = 'f32[32,64]{1,0:T(8,128)}', space=vmem, size = 0x4000, scoped, tag = 'scratch operand']
  #allocation4 [shape = 'f32[32,192]{1,0:T(8,128)}', space=vmem, size = 0x8000, scoped, tag = 'scratch operand']
  %s0 = inlined_call_operand.vmem [shape: s32[32], index: 0, kind: input, shape index: {}]
  %s1 = inlined_call_operand.hbm [shape: f32[32], index: 1, kind: input, shape index: {}]
  %s2 = inlined_call_operand.vmem [shape: f32[22,8,32], index: 2, kind: input, shape index: {}]
  %s3 = inlined_call_operand.vmem [shape: f32[22,5,16], index: 3, kind: input, shape index: {}]
  %s4 = inlined_call_operand.hbm [shape: bf16[16,16], index: 4, kind: input, shape index: {}]
  %s5 = inlined_call_operand.vmem [shape: f32[32,48], index: 5, kind: input, shape index: {}]
  %s6 = inlined_call_operand.vmem [shape: f32[6,10,16], index: 6, kind: input, shape index: {}]
  %s7 = inlined_call_operand.hbm [shape: f32[6,10], index: 7, kind: input, shape index: {}]
  %s8 = inlined_call_operand.vmem [shape: bf16[32,32], index: 8, kind: input, shape index: {}]
  %s9 = inlined_call_operand.hbm [shape: f32[1,32], index: 9, kind: input, shape index: {}]
  %s10 = inlined_call_operand.vmem [shape: bf16[48,32], index: 10, kind: input, shape index: {}]
  %s11 = inlined_call_operand.vmem [shape: bf16[3,32,32], index: 11, kind: input, shape index: {}]
  %s12 = inlined_call_operand.vmem [shape: bf16[32,96], index: 12, kind: input, shape index: {}]
  %s13 = inlined_call_operand.hbm [shape: bf16[32,96], index: 13, kind: input, shape index: {}]
  %s14 = inlined_call_operand.hbm [shape: f32[1,96], index: 14, kind: input, shape index: {}]
  %s15 = inlined_call_operand.hbm [shape: f32[1,96], index: 15, kind: input, shape index: {}]
  %s16 = inlined_call_operand.hbm [shape: bf16[16,32], index: 16, kind: input, shape index: {}]
  %s17 = inlined_call_operand.hbm [shape: f32[1,32], index: 17, kind: input, shape index: {}]
  %s18 = inlined_call_operand.vmem [shape: bf16[16,16], index: 18, kind: input, shape index: {}]
  %s19 = inlined_call_operand.vmem [shape: bf16[64,192], index: 19, kind: input, shape index: {}]
  %s20 = inlined_call_operand.vmem [shape: bf16[48,192], index: 20, kind: input, shape index: {}]
  %s21 = inlined_call_operand.hbm [shape: f32[1,192], index: 21, kind: input, shape index: {}]
  %s22 = inlined_call_operand.hbm [shape: f32[6,8], index: 22, kind: output, shape index: {}]
  %s23 = sld [smem:[#allocation0]]
  $region149: #{tpu_custom_call.1} parent=0
    _
  %s25 = ssub.s32 1, %s23
  %s26 = scalar_select 0, %s25, %s23
  $region1: #{tpu_custom_call.1} parent=0
    #allocation5 [shape = 'u8[512]{0}', space=smem, size = 0x200, scoped, tag = 'input window, operand 0, single buffered']
    #allocation6 [shape = 's32[1]{0}', space=sflag, size = 0x4, scoped, tag = 'scoped memory for tpu_custom_call.1']
    #allocation7 [shape = 's32[1]{0}', space=sflag, size = 0x4, scoped, tag = 'scoped memory for tpu_custom_call.1']
    #allocation8 [shape = 's32[1]{0}', space=sflag, size = 0x4, scoped, tag = 'scoped memory for tpu_custom_call.1']
    #allocation9 [shape = 's32[1]{0}', space=sflag, size = 0x4, scoped, tag = 'scoped memory for tpu_custom_call.1']
    #allocation10 [shape = 'u8[512]{0}', space=smem, size = 0x200, scoped, tag = 'input window, operand 1, single buffered']
    #allocation11 [shape = 'u8[4096]{0}', space=vmem, size = 0x1000, scoped, tag = 'input window, operand 4, single buffered']
    #allocation12 [shape = 'u8[4096]{0}', space=vmem, size = 0x1000, scoped, tag = 'input window, operand 7, single buffered']
    #allocation13 [shape = 's32[1]{0}', space=sflag, size = 0x4, scoped, tag = 'scoped memory for tpu_custom_call.1']
    #allocation14 [shape = 'u8[512]{0}', space=vmem, size = 0x400, scoped, tag = 'input window, operand 9, single buffered']
    #allocation15 [shape = 'u8[8192]{0}', space=vmem, size = 0x2000, scoped, tag = 'input window, operand 13, single buffered']
    #allocation16 [shape = 's32[1]{0}', space=sflag, size = 0x4, scoped, tag = 'scoped memory for tpu_custom_call.1']
    #allocation17 [shape = 'u8[512]{0}', space=vmem, size = 0x400, scoped, tag = 'input window, operand 14, single buffered']
    #allocation18 [shape = 'u8[512]{0}', space=vmem, size = 0x400, scoped, tag = 'input window, operand 15, single buffered']
    #allocation19 [shape = 's32[1]{0}', space=sflag, size = 0x4, scoped, tag = 'scoped memory for tpu_custom_call.1']
    #allocation20 [shape = 'u8[4096]{0}', space=vmem, size = 0x1000, scoped, tag = 'input window, operand 16, single buffered']
    #allocation21 [shape = 'u8[512]{0}', space=vmem, size = 0x400, scoped, tag = 'input window, operand 17, single buffered']
    #allocation22 [shape = 's32[1]{0}', space=sflag, size = 0x4, scoped, tag = 'scoped memory for tpu_custom_call.1']
    #allocation23 [shape = 'u8[1024]{0}', space=vmem, size = 0x400, scoped, tag = 'input window, operand 21, single buffered']
    #allocation24 [shape = 'u8[4096]{0}', space=vmem, size = 0x1000, scoped, tag = 'output window, operand 0, single buffered']
    %27 = vsyncpa [#allocation9], 0
    %28 = vsyncpa [#allocation8], 0
    %29 = vsyncpa [#allocation6], 0
    %30 = vsyncpa [#allocation13], 0
    %31 = vsyncpa [#allocation16], 0
    %32 = vsyncpa [#allocation19], 0
    %33 = vsyncpa [#allocation22], 0
    %34 = vsyncpa [#allocation7], 0
    // Predicated region
    $region2: #{tpu_custom_call.1} parent=1 // pred_check
      _
    $region3: #{tpu_custom_call.1} parent=1 // pred_check_branch
      %36 = sbr.rel (0) target = $region5
    $region4: #{tpu_custom_call.1} parent=1 // pred_region
      %38 = vsyncadd [#allocation9], 0
      %s40 = sshll.u32 %s0, 4
      %s41 = int_to_ptr.vmem [resolvable:$true] %s40
      %43 = dma.vmem_to_smem %s41, 16, [#allocation5], [#allocation9]
    $region5: #{tpu_custom_call.1} parent=1 // pred_fallthru
      _
    // Predicated region
    $region6: #{tpu_custom_call.1} parent=1 // pred_check
      _
    $region7: #{tpu_custom_call.1} parent=1 // pred_check_branch
      %45 = sbr.rel (0) target = $region9
    $region8: #{tpu_custom_call.1} parent=1 // pred_region
      %47 = vsyncadd [#allocation8], 0
      %s49 = sshll.u32 %s1, 4
      %s50 = int_to_ptr.hbm [resolvable:$true] %s49
      %52 = dma.hbm_to_smem %s50, 16, [#allocation10], [#allocation8]
    $region9: #{tpu_custom_call.1} parent=1 // pred_fallthru
      _
    // Predicated region
    $region10: #{tpu_custom_call.1} parent=1 // pred_check
      _
    $region11: #{tpu_custom_call.1} parent=1 // pred_check_branch
      %54 = sbr.rel (0) target = $region13
    $region12: #{tpu_custom_call.1} parent=1 // pred_region
      _
    $region13: #{tpu_custom_call.1} parent=1 // pred_fallthru
      _
    // Predicated region
    $region14: #{tpu_custom_call.1} parent=1 // pred_check
      _
    $region15: #{tpu_custom_call.1} parent=1 // pred_check_branch
      %56 = sbr.rel (0) target = $region17
    $region16: #{tpu_custom_call.1} parent=1 // pred_region
      _
    $region17: #{tpu_custom_call.1} parent=1 // pred_fallthru
      _
    // Predicated region
    $region18: #{tpu_custom_call.1} parent=1 // pred_check
      _
    $region19: #{tpu_custom_call.1} parent=1 // pred_check_branch
      %58 = sbr.rel (0) target = $region21
    $region20: #{tpu_custom_call.1} parent=1 // pred_region
      %60 = vsyncadd [#allocation6], 0
      %s61 = sshll.u32 %s4, 4
      %s62 = int_to_ptr.hbm [resolvable:$true] %s61
      %s63 = sshll.u32 [#allocation11], 4
      %s64 = int_to_ptr.vmem [resolvable:$true] %s63
      %69 = dma.hbm_to_vmem [thread:$0]  %s62, 128, %s64, [#allocation6], 64, 64, 4
    $region21: #{tpu_custom_call.1} parent=1 // pred_fallthru
      _
    // Predicated region
    $region22: #{tpu_custom_call.1} parent=1 // pred_check
      _
    $region23: #{tpu_custom_call.1} parent=1 // pred_check_branch
      %71 = sbr.rel (0) target = $region25
    $region24: #{tpu_custom_call.1} parent=1 // pred_region
      _
    $region25: #{tpu_custom_call.1} parent=1 // pred_fallthru
      _
    // Predicated region
    $region26: #{tpu_custom_call.1} parent=1 // pred_check
      _
    $region27: #{tpu_custom_call.1} parent=1 // pred_check_branch
      %73 = sbr.rel (0) target = $region29
    $region28: #{tpu_custom_call.1} parent=1 // pred_region
      _
    $region29: #{tpu_custom_call.1} parent=1 // pred_fallthru
      _
    // Predicated region
    $region30: #{tpu_custom_call.1} parent=1 // pred_check
      _
    $region31: #{tpu_custom_call.1} parent=1 // pred_check_branch
      %75 = sbr.rel (0) target = $region33
    $region32: #{tpu_custom_call.1} parent=1 // pred_region
      %77 = vsyncadd [#allocation13], 0
      %s79 = sshll.u32 %s7, 4
      %s80 = int_to_ptr.hbm [resolvable:$true] %s79
      %s81 = sshll.u32 [#allocation12], 4
      %s82 = int_to_ptr.vmem [resolvable:$true] %s81
      %84 = dma.hbm_to_vmem [thread:$0]  %s80, 128, %s82, [#allocation13]
    $region33: #{tpu_custom_call.1} parent=1 // pred_fallthru
      _
    // Predicated region
    $region34: #{tpu_custom_call.1} parent=1 // pred_check
      _
    $region35: #{tpu_custom_call.1} parent=1 // pred_check_branch
      %86 = sbr.rel (0) target = $region37
    $region36: #{tpu_custom_call.1} parent=1 // pred_region
      _
    $region37: #{tpu_custom_call.1} parent=1 // pred_fallthru
      _
    // Predicated region
    $region38: #{tpu_custom_call.1} parent=1 // pred_check
      _
    $region39: #{tpu_custom_call.1} parent=1 // pred_check_branch
      %88 = sbr.rel (0) target = $region41
    $region40: #{tpu_custom_call.1} parent=1 // pred_region
      %90 = vsyncadd [#allocation13], 0
      %s92 = sshll.u32 %s9, 4
      %s93 = int_to_ptr.hbm [resolvable:$true] %s92
      %s94 = sshll.u32 [#allocation14], 4
      %s95 = int_to_ptr.vmem [resolvable:$true] %s94
      %97 = dma.hbm_to_vmem [thread:$0]  %s93, 16, %s95, [#allocation13]
    $region41: #{tpu_custom_call.1} parent=1 // pred_fallthru
      _
    // Predicated region
    $region42: #{tpu_custom_call.1} parent=1 // pred_check
      _
    $region43: #{tpu_custom_call.1} parent=1 // pred_check_branch
      %99 = sbr.rel (0) target = $region45
    $region44: #{tpu_custom_call.1} parent=1 // pred_region
      _
    $region45: #{tpu_custom_call.1} parent=1 // pred_fallthru
      _
    // Predicated region
    $region46: #{tpu_custom_call.1} parent=1 // pred_check
      _
    $region47: #{tpu_custom_call.1} parent=1 // pred_check_branch
      %101 = sbr.rel (0) target = $region49
    $region48: #{tpu_custom_call.1} parent=1 // pred_region
      _
    $region49: #{tpu_custom_call.1} parent=1 // pred_fallthru
      _
    // Predicated region
    $region50: #{tpu_custom_call.1} parent=1 // pred_check
      _
    $region51: #{tpu_custom_call.1} parent=1 // pred_check_branch
      %103 = sbr.rel (0) target = $region53
    $region52: #{tpu_custom_call.1} parent=1 // pred_region
      _
    $region53: #{tpu_custom_call.1} parent=1 // pred_fallthru
      _
    // Predicated region
    $region54: #{tpu_custom_call.1} parent=1 // pred_check
      _
    $region55: #{tpu_custom_call.1} parent=1 // pred_check_branch
      %105 = sbr.rel (0) target = $region57
    $region56: #{tpu_custom_call.1} parent=1 // pred_region
      %107 = vsyncadd [#allocation16], 0
      %s108 = sshll.u32 %s13, 4
      %s109 = int_to_ptr.hbm [resolvable:$true] %s108
      %s110 = sshll.u32 [#allocation15], 4
      %s111 = int_to_ptr.vmem [resolvable:$true] %s110
      %116 = dma.hbm_to_vmem [thread:$0]  %s109, 256, %s111, [#allocation16], 64, 64, 4
    $region57: #{tpu_custom_call.1} parent=1 // pred_fallthru
      _
    // Predicated region
    $region58: #{tpu_custom_call.1} parent=1 // pred_check
      _
    $region59: #{tpu_custom_call.1} parent=1 // pred_check_branch
      %118 = sbr.rel (0) target = $region61
    $region60: #{tpu_custom_call.1} parent=1 // pred_region
      %120 = vsyncadd [#allocation16], 0
      %s122 = sshll.u32 %s14, 4
      %s123 = int_to_ptr.hbm [resolvable:$true] %s122
      %s124 = sshll.u32 [#allocation17], 4
      %s125 = int_to_ptr.vmem [resolvable:$true] %s124
      %127 = dma.hbm_to_vmem [thread:$0]  %s123, 16, %s125, [#allocation16]
    $region61: #{tpu_custom_call.1} parent=1 // pred_fallthru
      _
    // Predicated region
    $region62: #{tpu_custom_call.1} parent=1 // pred_check
      _
    $region63: #{tpu_custom_call.1} parent=1 // pred_check_branch
      %129 = sbr.rel (0) target = $region65
    $region64: #{tpu_custom_call.1} parent=1 // pred_region
      %131 = vsyncadd [#allocation19], 0
      %s133 = sshll.u32 %s15, 4
      %s134 = int_to_ptr.hbm [resolvable:$true] %s133
      %s135 = sshll.u32 [#allocation18], 4
      %s136 = int_to_ptr.vmem [resolvable:$true] %s135
      %138 = dma.hbm_to_vmem [thread:$0]  %s134, 16, %s136, [#allocation19]
    $region65: #{tpu_custom_call.1} parent=1 // pred_fallthru
      _
    // Predicated region
    $region66: #{tpu_custom_call.1} parent=1 // pred_check
      _
    $region67: #{tpu_custom_call.1} parent=1 // pred_check_branch
      %140 = sbr.rel (0) target = $region69
    $region68: #{tpu_custom_call.1} parent=1 // pred_region
      %142 = vsyncadd [#allocation19], 0
      %s143 = sshll.u32 %s16, 4
      %s144 = int_to_ptr.hbm [resolvable:$true] %s143
      %s145 = sshll.u32 [#allocation20], 4
      %s146 = int_to_ptr.vmem [resolvable:$true] %s145
      %151 = dma.hbm_to_vmem [thread:$0]  %s144, 128, %s146, [#allocation19], 64, 64, 4
    $region69: #{tpu_custom_call.1} parent=1 // pred_fallthru
      _
    // Predicated region
    $region70: #{tpu_custom_call.1} parent=1 // pred_check
      _
    $region71: #{tpu_custom_call.1} parent=1 // pred_check_branch
      %153 = sbr.rel (0) target = $region73
    $region72: #{tpu_custom_call.1} parent=1 // pred_region
      %155 = vsyncadd [#allocation22], 0
      %s157 = sshll.u32 %s17, 4
      %s158 = int_to_ptr.hbm [resolvable:$true] %s157
      %s159 = sshll.u32 [#allocation21], 4
      %s160 = int_to_ptr.vmem [resolvable:$true] %s159
      %162 = dma.hbm_to_vmem [thread:$0]  %s158, 16, %s160, [#allocation22]
    $region73: #{tpu_custom_call.1} parent=1 // pred_fallthru
      _
    // Predicated region
    $region74: #{tpu_custom_call.1} parent=1 // pred_check
      _
    $region75: #{tpu_custom_call.1} parent=1 // pred_check_branch
      %164 = sbr.rel (0) target = $region77
    $region76: #{tpu_custom_call.1} parent=1 // pred_region
      _
    $region77: #{tpu_custom_call.1} parent=1 // pred_fallthru
      _
    // Predicated region
    $region78: #{tpu_custom_call.1} parent=1 // pred_check
      _
    $region79: #{tpu_custom_call.1} parent=1 // pred_check_branch
      %166 = sbr.rel (0) target = $region81
    $region80: #{tpu_custom_call.1} parent=1 // pred_region
      _
    $region81: #{tpu_custom_call.1} parent=1 // pred_fallthru
      _
    // Predicated region
    $region82: #{tpu_custom_call.1} parent=1 // pred_check
      _
    $region83: #{tpu_custom_call.1} parent=1 // pred_check_branch
      %168 = sbr.rel (0) target = $region85
    $region84: #{tpu_custom_call.1} parent=1 // pred_region
      _
    $region85: #{tpu_custom_call.1} parent=1 // pred_fallthru
      _
    // Predicated region
    $region86: #{tpu_custom_call.1} parent=1 // pred_check
      _
    $region87: #{tpu_custom_call.1} parent=1 // pred_check_branch
      %170 = sbr.rel (0) target = $region89
    $region88: #{tpu_custom_call.1} parent=1 // pred_region
      %172 = vsyncadd [#allocation22], 0
      %s174 = sshll.u32 %s21, 4
      %s175 = int_to_ptr.hbm [resolvable:$true] %s174
      %s176 = sshll.u32 [#allocation23], 4
      %s177 = int_to_ptr.vmem [resolvable:$true] %s176
      %179 = dma.hbm_to_vmem [thread:$0]  %s175, 32, %s177, [#allocation22]
    $region89: #{tpu_custom_call.1} parent=1 // pred_fallthru
      _
    // Predicated region
    $region90: #{tpu_custom_call.1} parent=1 // pred_check
      _
    $region91: #{tpu_custom_call.1} parent=1 // pred_check_branch
      %181 = sbr.rel (0) target = $region93
    $region92: #{tpu_custom_call.1} parent=1 // pred_region
      %183 = dma.done [#allocation9], 16
    $region93: #{tpu_custom_call.1} parent=1 // pred_fallthru
      _
    // Predicated region
    $region94: #{tpu_custom_call.1} parent=1 // pred_check
      _
    $region95: #{tpu_custom_call.1} parent=1 // pred_check_branch
      %185 = sbr.rel (0) target = $region97
    $region96: #{tpu_custom_call.1} parent=1 // pred_region
      %187 = dma.done [#allocation8], 16
    $region97: #{tpu_custom_call.1} parent=1 // pred_fallthru
      _
    // Predicated region
    $region98: #{tpu_custom_call.1} parent=1 // pred_check
      _
    $region99: #{tpu_custom_call.1} parent=1 // pred_check_branch
      %189 = sbr.rel (0) target = $region101
    $region100: #{tpu_custom_call.1} parent=1 // pred_region
      %191 = dma.done [#allocation6], 128
    $region101: #{tpu_custom_call.1} parent=1 // pred_fallthru
      _
    // Predicated region
    $region102: #{tpu_custom_call.1} parent=1 // pred_check
      _
    $region103: #{tpu_custom_call.1} parent=1 // pred_check_branch
      %193 = sbr.rel (0) target = $region105
    $region104: #{tpu_custom_call.1} parent=1 // pred_region
      %195 = dma.done [#allocation13], 128
    $region105: #{tpu_custom_call.1} parent=1 // pred_fallthru
      _
    // Predicated region
    $region106: #{tpu_custom_call.1} parent=1 // pred_check
      _
    $region107: #{tpu_custom_call.1} parent=1 // pred_check_branch
      %197 = sbr.rel (0) target = $region109
    $region108: #{tpu_custom_call.1} parent=1 // pred_region
      %199 = dma.done [#allocation13], 16
    $region109: #{tpu_custom_call.1} parent=1 // pred_fallthru
      _
    // Predicated region
    $region110: #{tpu_custom_call.1} parent=1 // pred_check
      _
    $region111: #{tpu_custom_call.1} parent=1 // pred_check_branch
      %201 = sbr.rel (0) target = $region113
    $region112: #{tpu_custom_call.1} parent=1 // pred_region
      %203 = dma.done [#allocation16], 256
    $region113: #{tpu_custom_call.1} parent=1 // pred_fallthru
      _
    // Predicated region
    $region114: #{tpu_custom_call.1} parent=1 // pred_check
      _
    $region115: #{tpu_custom_call.1} parent=1 // pred_check_branch
      %205 = sbr.rel (0) target = $region117
    $region116: #{tpu_custom_call.1} parent=1 // pred_region
      %207 = dma.done [#allocation16], 16
    $region117: #{tpu_custom_call.1} parent=1 // pred_fallthru
      _
    // Predicated region
    $region118: #{tpu_custom_call.1} parent=1 // pred_check
      _
    $region119: #{tpu_custom_call.1} parent=1 // pred_check_branch
      %209 = sbr.rel (0) target = $region121
    $region120: #{tpu_custom_call.1} parent=1 // pred_region
      %211 = dma.done [#allocation19], 16
    $region121: #{tpu_custom_call.1} parent=1 // pred_fallthru
      _
    // Predicated region
    $region122: #{tpu_custom_call.1} parent=1 // pred_check
      _
    $region123: #{tpu_custom_call.1} parent=1 // pred_check_branch
      %213 = sbr.rel (0) target = $region125
    $region124: #{tpu_custom_call.1} parent=1 // pred_region
      %215 = dma.done [#allocation19], 128
    $region125: #{tpu_custom_call.1} parent=1 // pred_fallthru
      _
    // Predicated region
    $region126: #{tpu_custom_call.1} parent=1 // pred_check
      _
    $region127: #{tpu_custom_call.1} parent=1 // pred_check_branch
      %217 = sbr.rel (0) target = $region129
    $region128: #{tpu_custom_call.1} parent=1 // pred_region
      %219 = dma.done [#allocation22], 16
    $region129: #{tpu_custom_call.1} parent=1 // pred_fallthru
      _
    // Predicated region
    $region130: #{tpu_custom_call.1} parent=1 // pred_check
      _
    $region131: #{tpu_custom_call.1} parent=1 // pred_check_branch
      %221 = sbr.rel (0) target = $region133
    $region132: #{tpu_custom_call.1} parent=1 // pred_region
      %223 = dma.done [#allocation22], 32
    $region133: #{tpu_custom_call.1} parent=1 // pred_fallthru
      _
    %224 = sfence
    %v226 = vld [vmem:[%s2] sm:$0xff]
    %v227 = vld [vmem:[%s2 + $0x8] sm:$0xff]
    %v228 = vld [vmem:[%s2 + $0x10] sm:$0xff]
    %v229 = vld [vmem:[%s2 + $0x18] sm:$0xff]
    %v230 = vld [vmem:[%s2 + $0x20] sm:$0xff]
    %v231 = vld [vmem:[%s2 + $0x28] sm:$0xff]
    %v232 = vld [vmem:[%s2 + $0x30] sm:$0xff]
    %v233 = vld [vmem:[%s2 + $0x38] sm:$0xff]
    %v234 = vld [vmem:[%s2 + $0x40] sm:$0xff]
    %v235 = vld [vmem:[%s2 + $0x48] sm:$0xff]
    %v236 = vld [vmem:[%s2 + $0x50] sm:$0xff]
    %v237 = vld [vmem:[%s2 + $0x58] sm:$0xff]
    %v238 = vld [vmem:[%s2 + $0x60] sm:$0xff]
    %v239 = vld [vmem:[%s2 + $0x68] sm:$0xff]
    %v240 = vld [vmem:[%s2 + $0x70] sm:$0xff]
    %v241 = vld [vmem:[%s2 + $0x78] sm:$0xff]
    %v242 = vld [vmem:[%s2 + $0x80] sm:$0xff]
    %v243 = vld [vmem:[%s2 + $0x88] sm:$0xff]
    %v244 = vld [vmem:[%s2 + $0x90] sm:$0xff]
    %v245 = vld [vmem:[%s2 + $0x98] sm:$0xff]
    %v246 = vld [vmem:[%s2 + $0xa0] sm:$0xff]
    %v247 = vld [vmem:[%s2 + $0xa8] sm:$0xff]
    %v248 = vpack.c.bf16 %v227, %v226
    %v249 = vpack.c.bf16 %v229, %v228
    %v250 = vpack.c.bf16 %v231, %v230
    %v251 = vpack.c.bf16 %v233, %v232
    %v252 = vpack.c.bf16 %v235, %v234
    %v253 = vpack.c.bf16 %v237, %v236
    %v254 = vpack.c.bf16 %v239, %v238
    %v255 = vpack.c.bf16 %v241, %v240
    %v256 = vpack.c.bf16 %v243, %v242
    %v257 = vpack.c.bf16 %v245, %v244
    %v258 = vpack.c.bf16 %v247, %v246
    %v259 = vld [vmem:[%s8] sm:$0xf]
    %v260 = vld [vmem:[%s8 + $0x4] sm:$0xf]
    %v261 = vld [vmem:[%s8 + $0x8] sm:$0xf]
    %v262 = vld [vmem:[%s8 + $0xc] sm:$0xf]
    %v267 = vunpack.c.l.b16 %v259
    %v268 = vunpack.c.l.b16 %v260
    %v269 = vunpack.c.l.b16 %v261
    %v270 = vunpack.c.l.b16 %v262
    %v271 = vpack.c.b16 %v268, %v267
    %v272 = vpack.c.b16 %v270, %v269
    %vm275 = vcmask 261120
    %v277 = vsel %vm275, %v248, 0
    %v280 = vsel %vm275, %v249, 0
    %v283 = vsel %vm275, %v250, 0
    %v286 = vsel %vm275, %v251, 0
    %v289 = vsel %vm275, %v252, 0
    %v292 = vsel %vm275, %v253, 0
    %v295 = vsel %vm275, %v254, 0
    %v298 = vsel %vm275, %v255, 0
    %v301 = vsel %vm275, %v256, 0
    %v304 = vsel %vm275, %v257, 0
    %v307 = vsel %vm275, %v258, 0
    %309 = vmatpush.bf16.msra.mxu0 0
    %310 = vmatpush.bf16.msra.mxu0 0
    %311 = vmatpush.bf16.msra.mxu0 0
    %312 = vmatpush.bf16.msra.mxu0 0
    %313 = vmatpush.bf16.msra.mxu0 0
    %314 = vmatpush.bf16.msra.mxu0 0
    %315 = vmatpush.bf16.msra.mxu0 %v272
    %316 = vmatpush.bf16.msra.mxu0 %v271
    %317 = vmatmul.bf16.gmra.mxu0 %v277
    %v318 = vpop.f32.mrf.mxu0
    %v319 = vadd.f32 0.0, %v318
    %v320 = vpop.f32.mrf.mxu0
    %v321 = vadd.f32 0.0, %v320
    %322 = vmatmul.bf16.gmra.mxu0 %v280
    %v323 = vpop.f32.mrf.mxu0
    %v324 = vadd.f32 0.0, %v323
    %v325 = vpop.f32.mrf.mxu0
    %v326 = vadd.f32 0.0, %v325
    %327 = vmatmul.bf16.gmra.mxu0 %v283
    %v328 = vpop.f32.mrf.mxu0
    %v329 = vadd.f32 0.0, %v328
    %v330 = vpop.f32.mrf.mxu0
    %v331 = vadd.f32 0.0, %v330
    %332 = vmatmul.bf16.gmra.mxu0 %v286
    %v333 = vpop.f32.mrf.mxu0
    %v334 = vadd.f32 0.0, %v333
    %v335 = vpop.f32.mrf.mxu0
    %v336 = vadd.f32 0.0, %v335
    %337 = vmatmul.bf16.gmra.mxu0 %v289
    %v338 = vpop.f32.mrf.mxu0
    %v339 = vadd.f32 0.0, %v338
    %v340 = vpop.f32.mrf.mxu0
    %v341 = vadd.f32 0.0, %v340
    %342 = vmatmul.bf16.gmra.mxu0 %v292
    %v343 = vpop.f32.mrf.mxu0
    %v344 = vadd.f32 0.0, %v343
    %v345 = vpop.f32.mrf.mxu0
    %v346 = vadd.f32 0.0, %v345
    %347 = vmatmul.bf16.gmra.mxu0 %v295
    %v348 = vpop.f32.mrf.mxu0
    %v349 = vadd.f32 0.0, %v348
    %v350 = vpop.f32.mrf.mxu0
    %v351 = vadd.f32 0.0, %v350
    %352 = vmatmul.bf16.gmra.mxu0 %v298
    %v353 = vpop.f32.mrf.mxu0
    %v354 = vadd.f32 0.0, %v353
    %v355 = vpop.f32.mrf.mxu0
    %v356 = vadd.f32 0.0, %v355
    %357 = vmatmul.bf16.gmra.mxu0 %v301
    %v358 = vpop.f32.mrf.mxu0
    %v359 = vadd.f32 0.0, %v358
    %v360 = vpop.f32.mrf.mxu0
    %v361 = vadd.f32 0.0, %v360
    %362 = vmatmul.bf16.gmra.mxu0 %v304
    %v363 = vpop.f32.mrf.mxu0
    %v364 = vadd.f32 0.0, %v363
    %v365 = vpop.f32.mrf.mxu0
    %v366 = vadd.f32 0.0, %v365
    %367 = vmatmul.bf16.gmra.mxu0 %v307
    %v368 = vpop.f32.mrf.mxu0
    %v369 = vadd.f32 0.0, %v368
    %v370 = vpop.f32.mrf.mxu0
    %v371 = vadd.f32 0.0, %v370
    %372 = vdwg.mxu0
    %v373 = vtanh.pop %v319
    %v374 = vtanh.pop %v321
    %v375 = vtanh.pop %v324
    %v376 = vtanh.pop %v326
    %v377 = vtanh.pop %v329
    %v378 = vtanh.pop %v331
    %v379 = vtanh.pop %v334
    %v380 = vtanh.pop %v336
    %v381 = vtanh.pop %v339
    %v382 = vtanh.pop %v341
    %v383 = vtanh.pop %v344
    %v384 = vtanh.pop %v346
    %v385 = vtanh.pop %v349
    %v386 = vtanh.pop %v351
    %v387 = vtanh.pop %v354
    %v388 = vtanh.pop %v356
    %v389 = vtanh.pop %v359
    %v390 = vtanh.pop %v361
    %v391 = vtanh.pop %v364
    %v392 = vtanh.pop %v366
    %v393 = vtanh.pop %v369
    %v394 = vtanh.pop %v371
    %v395 = vld [vmem:[#allocation14] sm:$0x1]
    %v397 = vperm.slane %v395, 0
    %v399 = vmul.f32 %v373, %v397
    %v400 = vmul.f32 %v374, %v397
    %v401 = vmul.f32 %v375, %v397
    %v402 = vmul.f32 %v376, %v397
    %v403 = vmul.f32 %v377, %v397
    %v404 = vmul.f32 %v378, %v397
    %v405 = vmul.f32 %v379, %v397
    %v406 = vmul.f32 %v380, %v397
    %v407 = vmul.f32 %v381, %v397
    %v408 = vmul.f32 %v382, %v397
    %v409 = vmul.f32 %v383, %v397
    %v410 = vmul.f32 %v384, %v397
    %v411 = vmul.f32 %v385, %v397
    %v412 = vmul.f32 %v386, %v397
    %v413 = vmul.f32 %v387, %v397
    %v414 = vmul.f32 %v388, %v397
    %v415 = vmul.f32 %v389, %v397
    %v416 = vmul.f32 %v390, %v397
    %v417 = vmul.f32 %v391, %v397
    %v418 = vmul.f32 %v392, %v397
    %v419 = vmul.f32 %v393, %v397
    %v420 = vmul.f32 %v394, %v397
    %v421 = vsel %vm275, %v399, 0.0
    %422 = vadd.xlane.f32.xlu0 %v421
    %v423 = vpop.xlane.xlu0 %422
    %v424 = vsel %vm275, %v400, 0.0
    %425 = vadd.xlane.f32.xlu0 %v424
    %v426 = vpop.xlane.xlu0 %425
    %v427 = vsel %vm275, %v401, 0.0
    %428 = vadd.xlane.f32.xlu0 %v427
    %v429 = vpop.xlane.xlu0 %428
    %v430 = vsel %vm275, %v402, 0.0
    %431 = vadd.xlane.f32.xlu0 %v430
    %v432 = vpop.xlane.xlu0 %431
    %v433 = vsel %vm275, %v403, 0.0
    %434 = vadd.xlane.f32.xlu0 %v433
    %v435 = vpop.xlane.xlu0 %434
    %v436 = vsel %vm275, %v404, 0.0
    %437 = vadd.xlane.f32.xlu0 %v436
    %v438 = vpop.xlane.xlu0 %437
    %v439 = vsel %vm275, %v405, 0.0
    %440 = vadd.xlane.f32.xlu0 %v439
    %v441 = vpop.xlane.xlu0 %440
    %v442 = vsel %vm275, %v406, 0.0
    %443 = vadd.xlane.f32.xlu0 %v442
    %v444 = vpop.xlane.xlu0 %443
    %v445 = vsel %vm275, %v407, 0.0
    %446 = vadd.xlane.f32.xlu0 %v445
    %v447 = vpop.xlane.xlu0 %446
    %v448 = vsel %vm275, %v408, 0.0
    %449 = vadd.xlane.f32.xlu0 %v448
    %v450 = vpop.xlane.xlu0 %449
    %v451 = vsel %vm275, %v409, 0.0
    %452 = vadd.xlane.f32.xlu0 %v451
    %v453 = vpop.xlane.xlu0 %452
    %v454 = vsel %vm275, %v410, 0.0
    %455 = vadd.xlane.f32.xlu0 %v454
    %v456 = vpop.xlane.xlu0 %455
    %v457 = vsel %vm275, %v411, 0.0
    %458 = vadd.xlane.f32.xlu0 %v457
    %v459 = vpop.xlane.xlu0 %458
    %v460 = vsel %vm275, %v412, 0.0
    %461 = vadd.xlane.f32.xlu0 %v460
    %v462 = vpop.xlane.xlu0 %461
    %v463 = vsel %vm275, %v413, 0.0
    %464 = vadd.xlane.f32.xlu0 %v463
    %v465 = vpop.xlane.xlu0 %464
    %v466 = vsel %vm275, %v414, 0.0
    %467 = vadd.xlane.f32.xlu0 %v466
    %v468 = vpop.xlane.xlu0 %467
    %v469 = vsel %vm275, %v415, 0.0
    %470 = vadd.xlane.f32.xlu0 %v469
    %v471 = vpop.xlane.xlu0 %470
    %v472 = vsel %vm275, %v416, 0.0
    %473 = vadd.xlane.f32.xlu0 %v472
    %v474 = vpop.xlane.xlu0 %473
    %v475 = vsel %vm275, %v417, 0.0
    %476 = vadd.xlane.f32.xlu0 %v475
    %v477 = vpop.xlane.xlu0 %476
    %v478 = vsel %vm275, %v418, 0.0
    %479 = vadd.xlane.f32.xlu0 %v478
    %v480 = vpop.xlane.xlu0 %479
    %v481 = vsel %vm275, %v419, 0.0
    %482 = vadd.xlane.f32.xlu0 %v481
    %v483 = vpop.xlane.xlu0 %482
    %v484 = vsel %vm275, %v420, 0.0
    %485 = vadd.xlane.f32.xlu0 %v484
    %v486 = vpop.xlane.xlu0 %485
    %v509 = vlaneseq
    %v510 = vand.u32 %v509, 127
    %v511 = vperm.slane %v423, %v510
    %v512 = vperm.slane %v426, %v510
    %v513 = vperm.slane %v429, %v510
    %v514 = vperm.slane %v432, %v510
    %v515 = vperm.slane %v435, %v510
    %v516 = vperm.slane %v438, %v510
    %v517 = vperm.slane %v441, %v510
    %v518 = vperm.slane %v444, %v510
    %v519 = vperm.slane %v447, %v510
    %v520 = vperm.slane %v450, %v510
    %v521 = vperm.slane %v453, %v510
    %v522 = vperm.slane %v456, %v510
    %v523 = vperm.slane %v459, %v510
    %v524 = vperm.slane %v462, %v510
    %v525 = vperm.slane %v465, %v510
    %v526 = vperm.slane %v468, %v510
    %v527 = vperm.slane %v471, %v510
    %v528 = vperm.slane %v474, %v510
    %v529 = vperm.slane %v477, %v510
    %v530 = vperm.slane %v480, %v510
    %v531 = vperm.slane %v483, %v510
    %v532 = vperm.slane %v486, %v510
    %vm533 = vcmask 1041409
    %v534 = vsel %vm533, %v512, %v511
    %vm535 = vcmask 1042434
    %v536 = vsel %vm535, %v513, %v534
    %vm537 = vcmask 1043459
    %v538 = vsel %vm537, %v514, %v536
    %vm539 = vcmask 1044484
    %v540 = vsel %vm539, %v515, %v538
    %vm541 = vcmask 1045509
    %v542 = vsel %vm541, %v516, %v540
    %vm543 = vcmask 1046534
    %v544 = vsel %vm543, %v517, %v542
    %vm545 = vcmask 1047559
    %v546 = vsel %vm545, %v518, %v544
    %v547 = vsel %vm533, %v520, %v519
    %v548 = vsel %vm535, %v521, %v547
    %v549 = vsel %vm537, %v522, %v548
    %v550 = vsel %vm539, %v523, %v549
    %v551 = vsel %vm541, %v524, %v550
    %v552 = vsel %vm543, %v525, %v551
    %v553 = vsel %vm545, %v526, %v552
    %v554 = vsel %vm533, %v528, %v527
    %v555 = vsel %vm535, %v529, %v554
    %v556 = vsel %vm537, %v530, %v555
    %v557 = vsel %vm539, %v531, %v556
    %v558 = vsel %vm541, %v532, %v557
    %vm562 = vcmask 64512
    %v563 = vsel %vm562, %v546, -inf
    %564 = vmax.xlane.f32.xlu0 %v563
    %v565 = vpop.xlane.xlu0 %564
    %v566 = vsel %vm562, %v553, -inf
    %567 = vmax.xlane.f32.xlu0 %v566
    %v568 = vpop.xlane.xlu0 %567
    %vm569 = vcmask 62464
    %v570 = vsel %vm569, %v558, -inf
    %571 = vmax.xlane.f32.xlu0 %v570
    %v572 = vpop.xlane.xlu0 %571
    %v576 = vperm.slane %v565, 0
    %v577 = vperm.slane %v565, 1
    %v578 = vperm.slane %v565, 2
    %v579 = vperm.slane %v565, 3
    %v580 = vperm.slane %v565, 4
    %v581 = vperm.slane %v565, 5
    %v582 = vperm.slane %v565, 6
    %v583 = vperm.slane %v565, 7
    %v584 = vperm.slane %v568, 0
    %v585 = vperm.slane %v568, 1
    %v586 = vperm.slane %v568, 2
    %v587 = vperm.slane %v568, 3
    %v588 = vperm.slane %v568, 4
    %v589 = vperm.slane %v568, 5
    %v590 = vperm.slane %v568, 6
    %v591 = vperm.slane %v568, 7
    %v592 = vperm.slane %v572, 0
    %v593 = vperm.slane %v572, 1
    %v594 = vperm.slane %v572, 2
    %v595 = vperm.slane %v572, 3
    %v596 = vperm.slane %v572, 4
    %v597 = vperm.slane %v572, 5
    %v620 = vsub.f32 %v423, %v576
    %v621 = vsub.f32 %v426, %v577
    %v622 = vsub.f32 %v429, %v578
    %v623 = vsub.f32 %v432, %v579
    %v624 = vsub.f32 %v435, %v580
    %v625 = vsub.f32 %v438, %v581
    %v626 = vsub.f32 %v441, %v582
    %v627 = vsub.f32 %v444, %v583
    %v628 = vsub.f32 %v447, %v584
    %v629 = vsub.f32 %v450, %v585
    %v630 = vsub.f32 %v453, %v586
    %v631 = vsub.f32 %v456, %v587
    %v632 = vsub.f32 %v459, %v588
    %v633 = vsub.f32 %v462, %v589
    %v634 = vsub.f32 %v465, %v590
    %v635 = vsub.f32 %v468, %v591
    %v636 = vsub.f32 %v471, %v592
    %v637 = vsub.f32 %v474, %v593
    %v638 = vsub.f32 %v477, %v594
    %v639 = vsub.f32 %v480, %v595
    %v640 = vsub.f32 %v483, %v596
    %v641 = vsub.f32 %v486, %v597
    %v642 = vmul.f32 %v620, 1.442695
    %v643 = vpow.pop %v642
    %v644 = vmul.f32 %v621, 1.442695
    %v645 = vpow.pop %v644
    %v646 = vmul.f32 %v622, 1.442695
    %v647 = vpow.pop %v646
    %v648 = vmul.f32 %v623, 1.442695
    %v649 = vpow.pop %v648
    %v650 = vmul.f32 %v624, 1.442695
    %v651 = vpow.pop %v650
    %v652 = vmul.f32 %v625, 1.442695
    %v653 = vpow.pop %v652
    %v654 = vmul.f32 %v626, 1.442695
    %v655 = vpow.pop %v654
    %v656 = vmul.f32 %v627, 1.442695
    %v657 = vpow.pop %v656
    %v658 = vmul.f32 %v628, 1.442695
    %v659 = vpow.pop %v658
    %v660 = vmul.f32 %v629, 1.442695
    %v661 = vpow.pop %v660
    %v662 = vmul.f32 %v630, 1.442695
    %v663 = vpow.pop %v662
    %v664 = vmul.f32 %v631, 1.442695
    %v665 = vpow.pop %v664
    %v666 = vmul.f32 %v632, 1.442695
    %v667 = vpow.pop %v666
    %v668 = vmul.f32 %v633, 1.442695
    %v669 = vpow.pop %v668
    %v670 = vmul.f32 %v634, 1.442695
    %v671 = vpow.pop %v670
    %v672 = vmul.f32 %v635, 1.442695
    %v673 = vpow.pop %v672
    %v674 = vmul.f32 %v636, 1.442695
    %v675 = vpow.pop %v674
    %v676 = vmul.f32 %v637, 1.442695
    %v677 = vpow.pop %v676
    %v678 = vmul.f32 %v638, 1.442695
    %v679 = vpow.pop %v678
    %v680 = vmul.f32 %v639, 1.442695
    %v681 = vpow.pop %v680
    %v682 = vmul.f32 %v640, 1.442695
    %v683 = vpow.pop %v682
    %v684 = vmul.f32 %v641, 1.442695
    %v685 = vpow.pop %v684
    %708 = vset.pattern.permute.xlu0 0
    %709 = vperm.xlu0 %708, %v643
    %v710 = vpop.permute.xlu0 %709
    %711 = vset.pattern.permute.xlu0 0
    %712 = vperm.xlu0 %711, %v645
    %v713 = vpop.permute.xlu0 %712
    %714 = vset.pattern.permute.xlu0 0
    %715 = vperm.xlu0 %714, %v647
    %v716 = vpop.permute.xlu0 %715
    %717 = vset.pattern.permute.xlu0 0
    %718 = vperm.xlu0 %717, %v649
    %v719 = vpop.permute.xlu0 %718
    %720 = vset.pattern.permute.xlu0 0
    %721 = vperm.xlu0 %720, %v651
    %v722 = vpop.permute.xlu0 %721
    %723 = vset.pattern.permute.xlu0 0
    %724 = vperm.xlu0 %723, %v653
    %v725 = vpop.permute.xlu0 %724
    %726 = vset.pattern.permute.xlu0 0
    %727 = vperm.xlu0 %726, %v655
    %v728 = vpop.permute.xlu0 %727
    %729 = vset.pattern.permute.xlu0 0
    %730 = vperm.xlu0 %729, %v657
    %v731 = vpop.permute.xlu0 %730
    %732 = vset.pattern.permute.xlu0 0
    %733 = vperm.xlu0 %732, %v659
    %v734 = vpop.permute.xlu0 %733
    %735 = vset.pattern.permute.xlu0 0
    %736 = vperm.xlu0 %735, %v661
    %v737 = vpop.permute.xlu0 %736
    %738 = vset.pattern.permute.xlu0 0
    %739 = vperm.xlu0 %738, %v663
    %v740 = vpop.permute.xlu0 %739
    %741 = vset.pattern.permute.xlu0 0
    %742 = vperm.xlu0 %741, %v665
    %v743 = vpop.permute.xlu0 %742
    %744 = vset.pattern.permute.xlu0 0
    %745 = vperm.xlu0 %744, %v667
    %v746 = vpop.permute.xlu0 %745
    %747 = vset.pattern.permute.xlu0 0
    %748 = vperm.xlu0 %747, %v669
    %v749 = vpop.permute.xlu0 %748
    %750 = vset.pattern.permute.xlu0 0
    %751 = vperm.xlu0 %750, %v671
    %v752 = vpop.permute.xlu0 %751
    %753 = vset.pattern.permute.xlu0 0
    %754 = vperm.xlu0 %753, %v673
    %v755 = vpop.permute.xlu0 %754
    %756 = vset.pattern.permute.xlu0 0
    %757 = vperm.xlu0 %756, %v675
    %v758 = vpop.permute.xlu0 %757
    %759 = vset.pattern.permute.xlu0 0
    %760 = vperm.xlu0 %759, %v677
    %v761 = vpop.permute.xlu0 %760
    %762 = vset.pattern.permute.xlu0 0
    %763 = vperm.xlu0 %762, %v679
    %v764 = vpop.permute.xlu0 %763
    %765 = vset.pattern.permute.xlu0 0
    %766 = vperm.xlu0 %765, %v681
    %v767 = vpop.permute.xlu0 %766
    %768 = vset.pattern.permute.xlu0 0
    %769 = vperm.xlu0 %768, %v683
    %v770 = vpop.permute.xlu0 %769
    %771 = vset.pattern.permute.xlu0 0
    %772 = vperm.xlu0 %771, %v685
    %v773 = vpop.permute.xlu0 %772
    %v774 = vperm.slane %v710, %v510
    %v775 = vperm.slane %v713, %v510
    %v776 = vperm.slane %v716, %v510
    %v777 = vperm.slane %v719, %v510
    %v778 = vperm.slane %v722, %v510
    %v779 = vperm.slane %v725, %v510
    %v780 = vperm.slane %v728, %v510
    %v781 = vperm.slane %v731, %v510
    %v782 = vperm.slane %v734, %v510
    %v783 = vperm.slane %v737, %v510
    %v784 = vperm.slane %v740, %v510
    %v785 = vperm.slane %v743, %v510
    %v786 = vperm.slane %v746, %v510
    %v787 = vperm.slane %v749, %v510
    %v788 = vperm.slane %v752, %v510
    %v789 = vperm.slane %v755, %v510
    %v790 = vperm.slane %v758, %v510
    %v791 = vperm.slane %v761, %v510
    %v792 = vperm.slane %v764, %v510
    %v793 = vperm.slane %v767, %v510
    %v794 = vperm.slane %v770, %v510
    %v795 = vperm.slane %v773, %v510
    %v796 = vsel %vm533, %v775, %v774
    %v797 = vsel %vm535, %v776, %v796
    %v798 = vsel %vm537, %v777, %v797
    %v799 = vsel %vm539, %v778, %v798
    %v800 = vsel %vm541, %v779, %v799
    %v801 = vsel %vm543, %v780, %v800
    %v802 = vsel %vm545, %v781, %v801
    %v803 = vsel %vm533, %v783, %v782
    %v804 = vsel %vm535, %v784, %v803
    %v805 = vsel %vm537, %v785, %v804
    %v806 = vsel %vm539, %v786, %v805
    %v807 = vsel %vm541, %v787, %v806
    %v808 = vsel %vm543, %v788, %v807
    %v809 = vsel %vm545, %v789, %v808
    %v810 = vsel %vm533, %v791, %v790
    %v811 = vsel %vm535, %v792, %v810
    %v812 = vsel %vm537, %v793, %v811
    %v813 = vsel %vm539, %v794, %v812
    %v814 = vsel %vm541, %v795, %v813
    %v818 = vsel %vm562, %v802, 0.0
    %819 = vadd.xlane.f32.xlu0 %v818
    %v820 = vpop.xlane.xlu0 %819
    %v821 = vsel %vm562, %v809, 0.0
    %822 = vadd.xlane.f32.xlu0 %v821
    %v823 = vpop.xlane.xlu0 %822
    %v824 = vsel %vm569, %v814, 0.0
    %825 = vadd.xlane.f32.xlu0 %v824
    %v826 = vpop.xlane.xlu0 %825
    %v830 = vperm.slane %v820, 0
    %v831 = vperm.slane %v820, 1
    %v832 = vperm.slane %v820, 2
    %v833 = vperm.slane %v820, 3
    %v834 = vperm.slane %v820, 4
    %v835 = vperm.slane %v820, 5
    %v836 = vperm.slane %v820, 6
    %v837 = vperm.slane %v820, 7
    %v838 = vperm.slane %v823, 0
    %v839 = vperm.slane %v823, 1
    %v840 = vperm.slane %v823, 2
    %v841 = vperm.slane %v823, 3
    %v842 = vperm.slane %v823, 4
    %v843 = vperm.slane %v823, 5
    %v844 = vperm.slane %v823, 6
    %v845 = vperm.slane %v823, 7
    %v846 = vperm.slane %v826, 0
    %v847 = vperm.slane %v826, 1
    %v848 = vperm.slane %v826, 2
    %v849 = vperm.slane %v826, 3
    %v850 = vperm.slane %v826, 4
    %v851 = vperm.slane %v826, 5
    %v874 = vrcp.pop %v830
    %v875 = vmul.f32 %v830, %v874
    %v876 = vsub.f32 1.0, %v875
    %v877 = vmul.f32 %v874, %v876
    %v878 = vadd.f32 %v874, %v877
    %vm879 = vweird.f32 %v830
    %vm880 = vweird.f32 %v874
    %vm881 = vmor %vm879, %vm880
    %v882 = vsel %vm881, %v874, %v878
    %v883 = vand.u32 2147483647, %v830
    %vm884 = vcmp.eq.f32.partialorder %v883, 8.507059e+37
    %v885 = vand.u32 %v830, 2147483648
    %v886 = vor.u32 1.1754944e-38, %v885
    %v887 = vsel %vm884, %v886, %v882
    %v888 = vmul.f32 %v643, %v887
    %v889 = vrcp.pop %v831
    %v890 = vmul.f32 %v831, %v889
    %v891 = vsub.f32 1.0, %v890
    %v892 = vmul.f32 %v889, %v891
    %v893 = vadd.f32 %v889, %v892
    %vm894 = vweird.f32 %v831
    %vm895 = vweird.f32 %v889
    %vm896 = vmor %vm894, %vm895
    %v897 = vsel %vm896, %v889, %v893
    %v898 = vand.u32 2147483647, %v831
    %vm899 = vcmp.eq.f32.partialorder %v898, 8.507059e+37
    %v900 = vand.u32 %v831, 2147483648
    %v901 = vor.u32 1.1754944e-38, %v900
    %v902 = vsel %vm899, %v901, %v897
    %v903 = vmul.f32 %v645, %v902
    %v904 = vrcp.pop %v832
    %v905 = vmul.f32 %v832, %v904
    %v906 = vsub.f32 1.0, %v905
    %v907 = vmul.f32 %v904, %v906
    %v908 = vadd.f32 %v904, %v907
    %vm909 = vweird.f32 %v832
    %vm910 = vweird.f32 %v904
    %vm911 = vmor %vm909, %vm910
    %v912 = vsel %vm911, %v904, %v908
    %v913 = vand.u32 2147483647, %v832
    %vm914 = vcmp.eq.f32.partialorder %v913, 8.507059e+37
    %v915 = vand.u32 %v832, 2147483648
    %v916 = vor.u32 1.1754944e-38, %v915
    %v917 = vsel %vm914, %v916, %v912
    %v918 = vmul.f32 %v647, %v917
    %v919 = vrcp.pop %v833
    %v920 = vmul.f32 %v833, %v919
    %v921 = vsub.f32 1.0, %v920
    %v922 = vmul.f32 %v919, %v921
    %v923 = vadd.f32 %v919, %v922
    %vm924 = vweird.f32 %v833
    %vm925 = vweird.f32 %v919
    %vm926 = vmor %vm924, %vm925
    %v927 = vsel %vm926, %v919, %v923
    %v928 = vand.u32 2147483647, %v833
    %vm929 = vcmp.eq.f32.partialorder %v928, 8.507059e+37
    %v930 = vand.u32 %v833, 2147483648
    %v931 = vor.u32 1.1754944e-38, %v930
    %v932 = vsel %vm929, %v931, %v927
    %v933 = vmul.f32 %v649, %v932
    %v934 = vrcp.pop %v834
    %v935 = vmul.f32 %v834, %v934
    %v936 = vsub.f32 1.0, %v935
    %v937 = vmul.f32 %v934, %v936
    %v938 = vadd.f32 %v934, %v937
    %vm939 = vweird.f32 %v834
    %vm940 = vweird.f32 %v934
    %vm941 = vmor %vm939, %vm940
    %v942 = vsel %vm941, %v934, %v938
    %v943 = vand.u32 2147483647, %v834
    %vm944 = vcmp.eq.f32.partialorder %v943, 8.507059e+37
    %v945 = vand.u32 %v834, 2147483648
    %v946 = vor.u32 1.1754944e-38, %v945
    %v947 = vsel %vm944, %v946, %v942
    %v948 = vmul.f32 %v651, %v947
    %v949 = vrcp.pop %v835
    %v950 = vmul.f32 %v835, %v949
    %v951 = vsub.f32 1.0, %v950
    %v952 = vmul.f32 %v949, %v951
    %v953 = vadd.f32 %v949, %v952
    %vm954 = vweird.f32 %v835
    %vm955 = vweird.f32 %v949
    %vm956 = vmor %vm954, %vm955
    %v957 = vsel %vm956, %v949, %v953
    %v958 = vand.u32 2147483647, %v835
    %vm959 = vcmp.eq.f32.partialorder %v958, 8.507059e+37
    %v960 = vand.u32 %v835, 2147483648
    %v961 = vor.u32 1.1754944e-38, %v960
    %v962 = vsel %vm959, %v961, %v957
    %v963 = vmul.f32 %v653, %v962
    %v964 = vrcp.pop %v836
    %v965 = vmul.f32 %v836, %v964
    %v966 = vsub.f32 1.0, %v965
    %v967 = vmul.f32 %v964, %v966
    %v968 = vadd.f32 %v964, %v967
    %vm969 = vweird.f32 %v836
    %vm970 = vweird.f32 %v964
    %vm971 = vmor %vm969, %vm970
    %v972 = vsel %vm971, %v964, %v968
    %v973 = vand.u32 2147483647, %v836
    %vm974 = vcmp.eq.f32.partialorder %v973, 8.507059e+37
    %v975 = vand.u32 %v836, 2147483648
    %v976 = vor.u32 1.1754944e-38, %v975
    %v977 = vsel %vm974, %v976, %v972
    %v978 = vmul.f32 %v655, %v977
    %v979 = vrcp.pop %v837
    %v980 = vmul.f32 %v837, %v979
    %v981 = vsub.f32 1.0, %v980
    %v982 = vmul.f32 %v979, %v981
    %v983 = vadd.f32 %v979, %v982
    %vm984 = vweird.f32 %v837
    %vm985 = vweird.f32 %v979
    %vm986 = vmor %vm984, %vm985
    %v987 = vsel %vm986, %v979, %v983
    %v988 = vand.u32 2147483647, %v837
    %vm989 = vcmp.eq.f32.partialorder %v988, 8.507059e+37
    %v990 = vand.u32 %v837, 2147483648
    %v991 = vor.u32 1.1754944e-38, %v990
    %v992 = vsel %vm989, %v991, %v987
    %v993 = vmul.f32 %v657, %v992
    %v994 = vrcp.pop %v838
    %v995 = vmul.f32 %v838, %v994
    %v996 = vsub.f32 1.0, %v995
    %v997 = vmul.f32 %v994, %v996
    %v998 = vadd.f32 %v994, %v997
    %vm999 = vweird.f32 %v838
    %vm1000 = vweird.f32 %v994
    %vm1001 = vmor %vm999, %vm1000
    %v1002 = vsel %vm1001, %v994, %v998
    %v1003 = vand.u32 2147483647, %v838
    %vm1004 = vcmp.eq.f32.partialorder %v1003, 8.507059e+37
    %v1005 = vand.u32 %v838, 2147483648
    %v1006 = vor.u32 1.1754944e-38, %v1005
    %v1007 = vsel %vm1004, %v1006, %v1002
    %v1008 = vmul.f32 %v659, %v1007
    %v1009 = vrcp.pop %v839
    %v1010 = vmul.f32 %v839, %v1009
    %v1011 = vsub.f32 1.0, %v1010
    %v1012 = vmul.f32 %v1009, %v1011
    %v1013 = vadd.f32 %v1009, %v1012
    %vm1014 = vweird.f32 %v839
    %vm1015 = vweird.f32 %v1009
    %vm1016 = vmor %vm1014, %vm1015
    %v1017 = vsel %vm1016, %v1009, %v1013
    %v1018 = vand.u32 2147483647, %v839
    %vm1019 = vcmp.eq.f32.partialorder %v1018, 8.507059e+37
    %v1020 = vand.u32 %v839, 2147483648
    %v1021 = vor.u32 1.1754944e-38, %v1020
    %v1022 = vsel %vm1019, %v1021, %v1017
    %v1023 = vmul.f32 %v661, %v1022
    %v1024 = vrcp.pop %v840
    %v1025 = vmul.f32 %v840, %v1024
    %v1026 = vsub.f32 1.0, %v1025
    %v1027 = vmul.f32 %v1024, %v1026
    %v1028 = vadd.f32 %v1024, %v1027
    %vm1029 = vweird.f32 %v840
    %vm1030 = vweird.f32 %v1024
    %vm1031 = vmor %vm1029, %vm1030
    %v1032 = vsel %vm1031, %v1024, %v1028
    %v1033 = vand.u32 2147483647, %v840
    %vm1034 = vcmp.eq.f32.partialorder %v1033, 8.507059e+37
    %v1035 = vand.u32 %v840, 2147483648
    %v1036 = vor.u32 1.1754944e-38, %v1035
    %v1037 = vsel %vm1034, %v1036, %v1032
    %v1038 = vmul.f32 %v663, %v1037
    %v1039 = vrcp.pop %v841
    %v1040 = vmul.f32 %v841, %v1039
    %v1041 = vsub.f32 1.0, %v1040
    %v1042 = vmul.f32 %v1039, %v1041
    %v1043 = vadd.f32 %v1039, %v1042
    %vm1044 = vweird.f32 %v841
    %vm1045 = vweird.f32 %v1039
    %vm1046 = vmor %vm1044, %vm1045
    %v1047 = vsel %vm1046, %v1039, %v1043
    %v1048 = vand.u32 2147483647, %v841
    %vm1049 = vcmp.eq.f32.partialorder %v1048, 8.507059e+37
    %v1050 = vand.u32 %v841, 2147483648
    %v1051 = vor.u32 1.1754944e-38, %v1050
    %v1052 = vsel %vm1049, %v1051, %v1047
    %v1053 = vmul.f32 %v665, %v1052
    %v1054 = vrcp.pop %v842
    %v1055 = vmul.f32 %v842, %v1054
    %v1056 = vsub.f32 1.0, %v1055
    %v1057 = vmul.f32 %v1054, %v1056
    %v1058 = vadd.f32 %v1054, %v1057
    %vm1059 = vweird.f32 %v842
    %vm1060 = vweird.f32 %v1054
    %vm1061 = vmor %vm1059, %vm1060
    %v1062 = vsel %vm1061, %v1054, %v1058
    %v1063 = vand.u32 2147483647, %v842
    %vm1064 = vcmp.eq.f32.partialorder %v1063, 8.507059e+37
    %v1065 = vand.u32 %v842, 2147483648
    %v1066 = vor.u32 1.1754944e-38, %v1065
    %v1067 = vsel %vm1064, %v1066, %v1062
    %v1068 = vmul.f32 %v667, %v1067
    %v1069 = vrcp.pop %v843
    %v1070 = vmul.f32 %v843, %v1069
    %v1071 = vsub.f32 1.0, %v1070
    %v1072 = vmul.f32 %v1069, %v1071
    %v1073 = vadd.f32 %v1069, %v1072
    %vm1074 = vweird.f32 %v843
    %vm1075 = vweird.f32 %v1069
    %vm1076 = vmor %vm1074, %vm1075
    %v1077 = vsel %vm1076, %v1069, %v1073
    %v1078 = vand.u32 2147483647, %v843
    %vm1079 = vcmp.eq.f32.partialorder %v1078, 8.507059e+37
    %v1080 = vand.u32 %v843, 2147483648
    %v1081 = vor.u32 1.1754944e-38, %v1080
    %v1082 = vsel %vm1079, %v1081, %v1077
    %v1083 = vmul.f32 %v669, %v1082
    %v1084 = vrcp.pop %v844
    %v1085 = vmul.f32 %v844, %v1084
    %v1086 = vsub.f32 1.0, %v1085
    %v1087 = vmul.f32 %v1084, %v1086
    %v1088 = vadd.f32 %v1084, %v1087
    %vm1089 = vweird.f32 %v844
    %vm1090 = vweird.f32 %v1084
    %vm1091 = vmor %vm1089, %vm1090
    %v1092 = vsel %vm1091, %v1084, %v1088
    %v1093 = vand.u32 2147483647, %v844
    %vm1094 = vcmp.eq.f32.partialorder %v1093, 8.507059e+37
    %v1095 = vand.u32 %v844, 2147483648
    %v1096 = vor.u32 1.1754944e-38, %v1095
    %v1097 = vsel %vm1094, %v1096, %v1092
    %v1098 = vmul.f32 %v671, %v1097
    %v1099 = vrcp.pop %v845
    %v1100 = vmul.f32 %v845, %v1099
    %v1101 = vsub.f32 1.0, %v1100
    %v1102 = vmul.f32 %v1099, %v1101
    %v1103 = vadd.f32 %v1099, %v1102
    %vm1104 = vweird.f32 %v845
    %vm1105 = vweird.f32 %v1099
    %vm1106 = vmor %vm1104, %vm1105
    %v1107 = vsel %vm1106, %v1099, %v1103
    %v1108 = vand.u32 2147483647, %v845
    %vm1109 = vcmp.eq.f32.partialorder %v1108, 8.507059e+37
    %v1110 = vand.u32 %v845, 2147483648
    %v1111 = vor.u32 1.1754944e-38, %v1110
    %v1112 = vsel %vm1109, %v1111, %v1107
    %v1113 = vmul.f32 %v673, %v1112
    %v1114 = vrcp.pop %v846
    %v1115 = vmul.f32 %v846, %v1114
    %v1116 = vsub.f32 1.0, %v1115
    %v1117 = vmul.f32 %v1114, %v1116
    %v1118 = vadd.f32 %v1114, %v1117
    %vm1119 = vweird.f32 %v846
    %vm1120 = vweird.f32 %v1114
    %vm1121 = vmor %vm1119, %vm1120
    %v1122 = vsel %vm1121, %v1114, %v1118
    %v1123 = vand.u32 2147483647, %v846
    %vm1124 = vcmp.eq.f32.partialorder %v1123, 8.507059e+37
    %v1125 = vand.u32 %v846, 2147483648
    %v1126 = vor.u32 1.1754944e-38, %v1125
    %v1127 = vsel %vm1124, %v1126, %v1122
    %v1128 = vmul.f32 %v675, %v1127
    %v1129 = vrcp.pop %v847
    %v1130 = vmul.f32 %v847, %v1129
    %v1131 = vsub.f32 1.0, %v1130
    %v1132 = vmul.f32 %v1129, %v1131
    %v1133 = vadd.f32 %v1129, %v1132
    %vm1134 = vweird.f32 %v847
    %vm1135 = vweird.f32 %v1129
    %vm1136 = vmor %vm1134, %vm1135
    %v1137 = vsel %vm1136, %v1129, %v1133
    %v1138 = vand.u32 2147483647, %v847
    %vm1139 = vcmp.eq.f32.partialorder %v1138, 8.507059e+37
    %v1140 = vand.u32 %v847, 2147483648
    %v1141 = vor.u32 1.1754944e-38, %v1140
    %v1142 = vsel %vm1139, %v1141, %v1137
    %v1143 = vmul.f32 %v677, %v1142
    %v1144 = vrcp.pop %v848
    %v1145 = vmul.f32 %v848, %v1144
    %v1146 = vsub.f32 1.0, %v1145
    %v1147 = vmul.f32 %v1144, %v1146
    %v1148 = vadd.f32 %v1144, %v1147
    %vm1149 = vweird.f32 %v848
    %vm1150 = vweird.f32 %v1144
    %vm1151 = vmor %vm1149, %vm1150
    %v1152 = vsel %vm1151, %v1144, %v1148
    %v1153 = vand.u32 2147483647, %v848
    %vm1154 = vcmp.eq.f32.partialorder %v1153, 8.507059e+37
    %v1155 = vand.u32 %v848, 2147483648
    %v1156 = vor.u32 1.1754944e-38, %v1155
    %v1157 = vsel %vm1154, %v1156, %v1152
    %v1158 = vmul.f32 %v679, %v1157
    %v1159 = vrcp.pop %v849
    %v1160 = vmul.f32 %v849, %v1159
    %v1161 = vsub.f32 1.0, %v1160
    %v1162 = vmul.f32 %v1159, %v1161
    %v1163 = vadd.f32 %v1159, %v1162
    %vm1164 = vweird.f32 %v849
    %vm1165 = vweird.f32 %v1159
    %vm1166 = vmor %vm1164, %vm1165
    %v1167 = vsel %vm1166, %v1159, %v1163
    %v1168 = vand.u32 2147483647, %v849
    %vm1169 = vcmp.eq.f32.partialorder %v1168, 8.507059e+37
    %v1170 = vand.u32 %v849, 2147483648
    %v1171 = vor.u32 1.1754944e-38, %v1170
    %v1172 = vsel %vm1169, %v1171, %v1167
    %v1173 = vmul.f32 %v681, %v1172
    %v1174 = vrcp.pop %v850
    %v1175 = vmul.f32 %v850, %v1174
    %v1176 = vsub.f32 1.0, %v1175
    %v1177 = vmul.f32 %v1174, %v1176
    %v1178 = vadd.f32 %v1174, %v1177
    %vm1179 = vweird.f32 %v850
    %vm1180 = vweird.f32 %v1174
    %vm1181 = vmor %vm1179, %vm1180
    %v1182 = vsel %vm1181, %v1174, %v1178
    %v1183 = vand.u32 2147483647, %v850
    %vm1184 = vcmp.eq.f32.partialorder %v1183, 8.507059e+37
    %v1185 = vand.u32 %v850, 2147483648
    %v1186 = vor.u32 1.1754944e-38, %v1185
    %v1187 = vsel %vm1184, %v1186, %v1182
    %v1188 = vmul.f32 %v683, %v1187
    %v1189 = vrcp.pop %v851
    %v1190 = vmul.f32 %v851, %v1189
    %v1191 = vsub.f32 1.0, %v1190
    %v1192 = vmul.f32 %v1189, %v1191
    %v1193 = vadd.f32 %v1189, %v1192
    %vm1194 = vweird.f32 %v851
    %vm1195 = vweird.f32 %v1189
    %vm1196 = vmor %vm1194, %vm1195
    %v1197 = vsel %vm1196, %v1189, %v1193
    %v1198 = vand.u32 2147483647, %v851
    %vm1199 = vcmp.eq.f32.partialorder %v1198, 8.507059e+37
    %v1200 = vand.u32 %v851, 2147483648
    %v1201 = vor.u32 1.1754944e-38, %v1200
    %v1202 = vsel %vm1199, %v1201, %v1197
    %v1203 = vmul.f32 %v685, %v1202
    %1205 = vset.pattern.permute.xlu0 0
    %1206 = vperm.xlu0 %1205, %v888
    %v1207 = vpop.permute.xlu0 %1206
    %1210 = vset.pattern.permute.xlu0 0
    %1211 = vperm.xlu0 %1210, %v903
    %v1212 = vpop.permute.xlu0 %1211
    %1215 = vset.pattern.permute.xlu0 0
    %1216 = vperm.xlu0 %1215, %v918
    %v1217 = vpop.permute.xlu0 %1216
    %1220 = vset.pattern.permute.xlu0 0
    %1221 = vperm.xlu0 %1220, %v933
    %v1222 = vpop.permute.xlu0 %1221
    %1225 = vset.pattern.permute.xlu0 0
    %1226 = vperm.xlu0 %1225, %v948
    %v1227 = vpop.permute.xlu0 %1226
    %1230 = vset.pattern.permute.xlu0 0
    %1231 = vperm.xlu0 %1230, %v963
    %v1232 = vpop.permute.xlu0 %1231
    %1235 = vset.pattern.permute.xlu0 0
    %1236 = vperm.xlu0 %1235, %v978
    %v1237 = vpop.permute.xlu0 %1236
    %1240 = vset.pattern.permute.xlu0 0
    %1241 = vperm.xlu0 %1240, %v993
    %v1242 = vpop.permute.xlu0 %1241
    %1245 = vset.pattern.permute.xlu0 0
    %1246 = vperm.xlu0 %1245, %v1008
    %v1247 = vpop.permute.xlu0 %1246
    %1250 = vset.pattern.permute.xlu0 0
    %1251 = vperm.xlu0 %1250, %v1023
    %v1252 = vpop.permute.xlu0 %1251
    %1255 = vset.pattern.permute.xlu0 0
    %1256 = vperm.xlu0 %1255, %v1038
    %v1257 = vpop.permute.xlu0 %1256
    %1260 = vset.pattern.permute.xlu0 0
    %1261 = vperm.xlu0 %1260, %v1053
    %v1262 = vpop.permute.xlu0 %1261
    %1265 = vset.pattern.permute.xlu0 0
    %1266 = vperm.xlu0 %1265, %v1068
    %v1267 = vpop.permute.xlu0 %1266
    %1270 = vset.pattern.permute.xlu0 0
    %1271 = vperm.xlu0 %1270, %v1083
    %v1272 = vpop.permute.xlu0 %1271
    %1275 = vset.pattern.permute.xlu0 0
    %1276 = vperm.xlu0 %1275, %v1098
    %v1277 = vpop.permute.xlu0 %1276
    %1280 = vset.pattern.permute.xlu0 0
    %1281 = vperm.xlu0 %1280, %v1113
    %v1282 = vpop.permute.xlu0 %1281
    %1285 = vset.pattern.permute.xlu0 0
    %1286 = vperm.xlu0 %1285, %v1128
    %v1287 = vpop.permute.xlu0 %1286
    %1290 = vset.pattern.permute.xlu0 0
    %1291 = vperm.xlu0 %1290, %v1143
    %v1292 = vpop.permute.xlu0 %1291
    %1295 = vset.pattern.permute.xlu0 0
    %1296 = vperm.xlu0 %1295, %v1158
    %v1297 = vpop.permute.xlu0 %1296
    %1300 = vset.pattern.permute.xlu0 0
    %1301 = vperm.xlu0 %1300, %v1173
    %v1302 = vpop.permute.xlu0 %1301
    %1305 = vset.pattern.permute.xlu0 0
    %1306 = vperm.xlu0 %1305, %v1188
    %v1307 = vpop.permute.xlu0 %1306
    %1310 = vset.pattern.permute.xlu0 0
    %1311 = vperm.xlu0 %1310, %v1203
    %v1312 = vpop.permute.xlu0 %1311
    %v1314 = vmul.f32 %v1207, %v226
    %v1315 = vmul.f32 %v1212, %v227
    %v1316 = vmul.f32 %v1217, %v228
    %v1317 = vmul.f32 %v1222, %v229
    %v1318 = vmul.f32 %v1227, %v230
    %v1319 = vmul.f32 %v1232, %v231
    %v1320 = vmul.f32 %v1237, %v232
    %v1321 = vmul.f32 %v1242, %v233
    %v1322 = vmul.f32 %v1247, %v234
    %v1323 = vmul.f32 %v1252, %v235
    %v1324 = vmul.f32 %v1257, %v236
    %v1325 = vmul.f32 %v1262, %v237
    %v1326 = vmul.f32 %v1267, %v238
    %v1327 = vmul.f32 %v1272, %v239
    %v1328 = vmul.f32 %v1277, %v240
    %v1329 = vmul.f32 %v1282, %v241
    %v1330 = vmul.f32 %v1287, %v242
    %v1331 = vmul.f32 %v1292, %v243
    %v1332 = vmul.f32 %v1297, %v244
    %v1333 = vmul.f32 %v1302, %v245
    %v1334 = vmul.f32 %v1307, %v246
    %v1335 = vmul.f32 %v1312, %v247
    %v1336 = vsel %vm275, %v1314, 0.0
    %v1337 = vrot.slane %v1336, 4
    %v1338 = vadd.f32 %v1336, %v1337
    %v1339 = vrot.slane %v1338, 2
    %v1340 = vadd.f32 %v1338, %v1339
    %v1341 = vrot.slane %v1340, 1
    %v1342 = vadd.f32 %v1340, %v1341
    %v1343 = vsel %vm275, %v1315, 0.0
    %v1344 = vrot.slane %v1343, 4
    %v1345 = vadd.f32 %v1343, %v1344
    %v1346 = vrot.slane %v1345, 2
    %v1347 = vadd.f32 %v1345, %v1346
    %v1348 = vrot.slane %v1347, 1
    %v1349 = vadd.f32 %v1347, %v1348
    %v1350 = vsel %vm275, %v1316, 0.0
    %v1351 = vrot.slane %v1350, 4
    %v1352 = vadd.f32 %v1350, %v1351
    %v1353 = vrot.slane %v1352, 2
    %v1354 = vadd.f32 %v1352, %v1353
    %v1355 = vrot.slane %v1354, 1
    %v1356 = vadd.f32 %v1354, %v1355
    %v1357 = vsel %vm275, %v1317, 0.0
    %v1358 = vrot.slane %v1357, 4
    %v1359 = vadd.f32 %v1357, %v1358
    %v1360 = vrot.slane %v1359, 2
    %v1361 = vadd.f32 %v1359, %v1360
    %v1362 = vrot.slane %v1361, 1
    %v1363 = vadd.f32 %v1361, %v1362
    %v1364 = vsel %vm275, %v1318, 0.0
    %v1365 = vrot.slane %v1364, 4
    %v1366 = vadd.f32 %v1364, %v1365
    %v1367 = vrot.slane %v1366, 2
    %v1368 = vadd.f32 %v1366, %v1367
    %v1369 = vrot.slane %v1368, 1
    %v1370 = vadd.f32 %v1368, %v1369
    %v1371 = vsel %vm275, %v1319, 0.0
    %v1372 = vrot.slane %v1371, 4
    %v1373 = vadd.f32 %v1371, %v1372
    %v1374 = vrot.slane %v1373, 2
    %v1375 = vadd.f32 %v1373, %v1374
    %v1376 = vrot.slane %v1375, 1
    %v1377 = vadd.f32 %v1375, %v1376
    %v1378 = vsel %vm275, %v1320, 0.0
    %v1379 = vrot.slane %v1378, 4
    %v1380 = vadd.f32 %v1378, %v1379
    %v1381 = vrot.slane %v1380, 2
    %v1382 = vadd.f32 %v1380, %v1381
    %v1383 = vrot.slane %v1382, 1
    %v1384 = vadd.f32 %v1382, %v1383
    %v1385 = vsel %vm275, %v1321, 0.0
    %v1386 = vrot.slane %v1385, 4
    %v1387 = vadd.f32 %v1385, %v1386
    %v1388 = vrot.slane %v1387, 2
    %v1389 = vadd.f32 %v1387, %v1388
    %v1390 = vrot.slane %v1389, 1
    %v1391 = vadd.f32 %v1389, %v1390
    %v1392 = vsel %vm275, %v1322, 0.0
    %v1393 = vrot.slane %v1392, 4
    %v1394 = vadd.f32 %v1392, %v1393
    %v1395 = vrot.slane %v1394, 2
    %v1396 = vadd.f32 %v1394, %v1395
    %v1397 = vrot.slane %v1396, 1
    %v1398 = vadd.f32 %v1396, %v1397
    %v1399 = vsel %vm275, %v1323, 0.0
    %v1400 = vrot.slane %v1399, 4
    %v1401 = vadd.f32 %v1399, %v1400
    %v1402 = vrot.slane %v1401, 2
    %v1403 = vadd.f32 %v1401, %v1402
    %v1404 = vrot.slane %v1403, 1
    %v1405 = vadd.f32 %v1403, %v1404
    %v1406 = vsel %vm275, %v1324, 0.0
    %v1407 = vrot.slane %v1406, 4
    %v1408 = vadd.f32 %v1406, %v1407
    %v1409 = vrot.slane %v1408, 2
    %v1410 = vadd.f32 %v1408, %v1409
    %v1411 = vrot.slane %v1410, 1
    %v1412 = vadd.f32 %v1410, %v1411
    %v1413 = vsel %vm275, %v1325, 0.0
    %v1414 = vrot.slane %v1413, 4
    %v1415 = vadd.f32 %v1413, %v1414
    %v1416 = vrot.slane %v1415, 2
    %v1417 = vadd.f32 %v1415, %v1416
    %v1418 = vrot.slane %v1417, 1
    %v1419 = vadd.f32 %v1417, %v1418
    %v1420 = vsel %vm275, %v1326, 0.0
    %v1421 = vrot.slane %v1420, 4
    %v1422 = vadd.f32 %v1420, %v1421
    %v1423 = vrot.slane %v1422, 2
    %v1424 = vadd.f32 %v1422, %v1423
    %v1425 = vrot.slane %v1424, 1
    %v1426 = vadd.f32 %v1424, %v1425
    %v1427 = vsel %vm275, %v1327, 0.0
    %v1428 = vrot.slane %v1427, 4
    %v1429 = vadd.f32 %v1427, %v1428
    %v1430 = vrot.slane %v1429, 2
    %v1431 = vadd.f32 %v1429, %v1430
    %v1432 = vrot.slane %v1431, 1
    %v1433 = vadd.f32 %v1431, %v1432
    %v1434 = vsel %vm275, %v1328, 0.0
    %v1435 = vrot.slane %v1434, 4
    %v1436 = vadd.f32 %v1434, %v1435
    %v1437 = vrot.slane %v1436, 2
    %v1438 = vadd.f32 %v1436, %v1437
    %v1439 = vrot.slane %v1438, 1
    %v1440 = vadd.f32 %v1438, %v1439
    %v1441 = vsel %vm275, %v1329, 0.0
    %v1442 = vrot.slane %v1441, 4
    %v1443 = vadd.f32 %v1441, %v1442
    %v1444 = vrot.slane %v1443, 2
    %v1445 = vadd.f32 %v1443, %v1444
    %v1446 = vrot.slane %v1445, 1
    %v1447 = vadd.f32 %v1445, %v1446
    %v1448 = vsel %vm275, %v1330, 0.0
    %v1449 = vrot.slane %v1448, 4
    %v1450 = vadd.f32 %v1448, %v1449
    %v1451 = vrot.slane %v1450, 2
    %v1452 = vadd.f32 %v1450, %v1451
    %v1453 = vrot.slane %v1452, 1
    %v1454 = vadd.f32 %v1452, %v1453
    %v1455 = vsel %vm275, %v1331, 0.0
    %v1456 = vrot.slane %v1455, 4
    %v1457 = vadd.f32 %v1455, %v1456
    %v1458 = vrot.slane %v1457, 2
    %v1459 = vadd.f32 %v1457, %v1458
    %v1460 = vrot.slane %v1459, 1
    %v1461 = vadd.f32 %v1459, %v1460
    %v1462 = vsel %vm275, %v1332, 0.0
    %v1463 = vrot.slane %v1462, 4
    %v1464 = vadd.f32 %v1462, %v1463
    %v1465 = vrot.slane %v1464, 2
    %v1466 = vadd.f32 %v1464, %v1465
    %v1467 = vrot.slane %v1466, 1
    %v1468 = vadd.f32 %v1466, %v1467
    %v1469 = vsel %vm275, %v1333, 0.0
    %v1470 = vrot.slane %v1469, 4
    %v1471 = vadd.f32 %v1469, %v1470
    %v1472 = vrot.slane %v1471, 2
    %v1473 = vadd.f32 %v1471, %v1472
    %v1474 = vrot.slane %v1473, 1
    %v1475 = vadd.f32 %v1473, %v1474
    %v1476 = vsel %vm275, %v1334, 0.0
    %v1477 = vrot.slane %v1476, 4
    %v1478 = vadd.f32 %v1476, %v1477
    %v1479 = vrot.slane %v1478, 2
    %v1480 = vadd.f32 %v1478, %v1479
    %v1481 = vrot.slane %v1480, 1
    %v1482 = vadd.f32 %v1480, %v1481
    %v1483 = vsel %vm275, %v1335, 0.0
    %v1484 = vrot.slane %v1483, 4
    %v1485 = vadd.f32 %v1483, %v1484
    %v1486 = vrot.slane %v1485, 2
    %v1487 = vadd.f32 %v1485, %v1486
    %v1488 = vrot.slane %v1487, 1
    %v1489 = vadd.f32 %v1487, %v1488
    %v1490 = vld [vmem:[%s3] sm:$0x1f]
    %v1491 = vld [vmem:[%s3 + $0x8] sm:$0x1f]
    %v1492 = vld [vmem:[%s3 + $0x10] sm:$0x1f]
    %v1493 = vld [vmem:[%s3 + $0x18] sm:$0x1f]
    %v1494 = vld [vmem:[%s3 + $0x20] sm:$0x1f]
    %v1495 = vld [vmem:[%s3 + $0x28] sm:$0x1f]
    %v1496 = vld [vmem:[%s3 + $0x30] sm:$0x1f]
    %v1497 = vld [vmem:[%s3 + $0x38] sm:$0x1f]
    %v1498 = vld [vmem:[%s3 + $0x40] sm:$0x1f]
    %v1499 = vld [vmem:[%s3 + $0x48] sm:$0x1f]
    %v1500 = vld [vmem:[%s3 + $0x50] sm:$0x1f]
    %v1501 = vld [vmem:[%s3 + $0x58] sm:$0x1f]
    %v1502 = vld [vmem:[%s3 + $0x60] sm:$0x1f]
    %v1503 = vld [vmem:[%s3 + $0x68] sm:$0x1f]
    %v1504 = vld [vmem:[%s3 + $0x70] sm:$0x1f]
    %v1505 = vld [vmem:[%s3 + $0x78] sm:$0x1f]
    %v1506 = vld [vmem:[%s3 + $0x80] sm:$0x1f]
    %v1507 = vld [vmem:[%s3 + $0x88] sm:$0x1f]
    %v1508 = vld [vmem:[%s3 + $0x90] sm:$0x1f]
    %v1509 = vld [vmem:[%s3 + $0x98] sm:$0x1f]
    %v1510 = vld [vmem:[%s3 + $0xa0] sm:$0x1f]
    %v1511 = vld [vmem:[%s3 + $0xa8] sm:$0x1f]
    %vm1512 = vcmask 126976
    %v1513 = vsel %vm1512, %v1490, 0.0
    %v1514 = vrot.slane %v1513, 4
    %v1515 = vadd.f32 %v1513, %v1514
    %v1516 = vrot.slane %v1515, 2
    %v1517 = vadd.f32 %v1515, %v1516
    %v1518 = vrot.slane %v1517, 1
    %v1519 = vadd.f32 %v1517, %v1518
    %v1520 = vsel %vm1512, %v1491, 0.0
    %v1521 = vrot.slane %v1520, 4
    %v1522 = vadd.f32 %v1520, %v1521
    %v1523 = vrot.slane %v1522, 2
    %v1524 = vadd.f32 %v1522, %v1523
    %v1525 = vrot.slane %v1524, 1
    %v1526 = vadd.f32 %v1524, %v1525
    %v1527 = vsel %vm1512, %v1492, 0.0
    %v1528 = vrot.slane %v1527, 4
    %v1529 = vadd.f32 %v1527, %v1528
    %v1530 = vrot.slane %v1529, 2
    %v1531 = vadd.f32 %v1529, %v1530
    %v1532 = vrot.slane %v1531, 1
    %v1533 = vadd.f32 %v1531, %v1532
    %v1534 = vsel %vm1512, %v1493, 0.0
    %v1535 = vrot.slane %v1534, 4
    %v1536 = vadd.f32 %v1534, %v1535
    %v1537 = vrot.slane %v1536, 2
    %v1538 = vadd.f32 %v1536, %v1537
    %v1539 = vrot.slane %v1538, 1
    %v1540 = vadd.f32 %v1538, %v1539
    %v1541 = vsel %vm1512, %v1494, 0.0
    %v1542 = vrot.slane %v1541, 4
    %v1543 = vadd.f32 %v1541, %v1542
    %v1544 = vrot.slane %v1543, 2
    %v1545 = vadd.f32 %v1543, %v1544
    %v1546 = vrot.slane %v1545, 1
    %v1547 = vadd.f32 %v1545, %v1546
    %v1548 = vsel %vm1512, %v1495, 0.0
    %v1549 = vrot.slane %v1548, 4
    %v1550 = vadd.f32 %v1548, %v1549
    %v1551 = vrot.slane %v1550, 2
    %v1552 = vadd.f32 %v1550, %v1551
    %v1553 = vrot.slane %v1552, 1
    %v1554 = vadd.f32 %v1552, %v1553
    %v1555 = vsel %vm1512, %v1496, 0.0
    %v1556 = vrot.slane %v1555, 4
    %v1557 = vadd.f32 %v1555, %v1556
    %v1558 = vrot.slane %v1557, 2
    %v1559 = vadd.f32 %v1557, %v1558
    %v1560 = vrot.slane %v1559, 1
    %v1561 = vadd.f32 %v1559, %v1560
    %v1562 = vsel %vm1512, %v1497, 0.0
    %v1563 = vrot.slane %v1562, 4
    %v1564 = vadd.f32 %v1562, %v1563
    %v1565 = vrot.slane %v1564, 2
    %v1566 = vadd.f32 %v1564, %v1565
    %v1567 = vrot.slane %v1566, 1
    %v1568 = vadd.f32 %v1566, %v1567
    %v1569 = vsel %vm1512, %v1498, 0.0
    %v1570 = vrot.slane %v1569, 4
    %v1571 = vadd.f32 %v1569, %v1570
    %v1572 = vrot.slane %v1571, 2
    %v1573 = vadd.f32 %v1571, %v1572
    %v1574 = vrot.slane %v1573, 1
    %v1575 = vadd.f32 %v1573, %v1574
    %v1576 = vsel %vm1512, %v1499, 0.0
    %v1577 = vrot.slane %v1576, 4
    %v1578 = vadd.f32 %v1576, %v1577
    %v1579 = vrot.slane %v1578, 2
    %v1580 = vadd.f32 %v1578, %v1579
    %v1581 = vrot.slane %v1580, 1
    %v1582 = vadd.f32 %v1580, %v1581
    %v1583 = vsel %vm1512, %v1500, 0.0
    %v1584 = vrot.slane %v1583, 4
    %v1585 = vadd.f32 %v1583, %v1584
    %v1586 = vrot.slane %v1585, 2
    %v1587 = vadd.f32 %v1585, %v1586
    %v1588 = vrot.slane %v1587, 1
    %v1589 = vadd.f32 %v1587, %v1588
    %v1590 = vsel %vm1512, %v1501, 0.0
    %v1591 = vrot.slane %v1590, 4
    %v1592 = vadd.f32 %v1590, %v1591
    %v1593 = vrot.slane %v1592, 2
    %v1594 = vadd.f32 %v1592, %v1593
    %v1595 = vrot.slane %v1594, 1
    %v1596 = vadd.f32 %v1594, %v1595
    %v1597 = vsel %vm1512, %v1502, 0.0
    %v1598 = vrot.slane %v1597, 4
    %v1599 = vadd.f32 %v1597, %v1598
    %v1600 = vrot.slane %v1599, 2
    %v1601 = vadd.f32 %v1599, %v1600
    %v1602 = vrot.slane %v1601, 1
    %v1603 = vadd.f32 %v1601, %v1602
    %v1604 = vsel %vm1512, %v1503, 0.0
    %v1605 = vrot.slane %v1604, 4
    %v1606 = vadd.f32 %v1604, %v1605
    %v1607 = vrot.slane %v1606, 2
    %v1608 = vadd.f32 %v1606, %v1607
    %v1609 = vrot.slane %v1608, 1
    %v1610 = vadd.f32 %v1608, %v1609
    %v1611 = vsel %vm1512, %v1504, 0.0
    %v1612 = vrot.slane %v1611, 4
    %v1613 = vadd.f32 %v1611, %v1612
    %v1614 = vrot.slane %v1613, 2
    %v1615 = vadd.f32 %v1613, %v1614
    %v1616 = vrot.slane %v1615, 1
    %v1617 = vadd.f32 %v1615, %v1616
    %v1618 = vsel %vm1512, %v1505, 0.0
    %v1619 = vrot.slane %v1618, 4
    %v1620 = vadd.f32 %v1618, %v1619
    %v1621 = vrot.slane %v1620, 2
    %v1622 = vadd.f32 %v1620, %v1621
    %v1623 = vrot.slane %v1622, 1
    %v1624 = vadd.f32 %v1622, %v1623
    %v1625 = vsel %vm1512, %v1506, 0.0
    %v1626 = vrot.slane %v1625, 4
    %v1627 = vadd.f32 %v1625, %v1626
    %v1628 = vrot.slane %v1627, 2
    %v1629 = vadd.f32 %v1627, %v1628
    %v1630 = vrot.slane %v1629, 1
    %v1631 = vadd.f32 %v1629, %v1630
    %v1632 = vsel %vm1512, %v1507, 0.0
    %v1633 = vrot.slane %v1632, 4
    %v1634 = vadd.f32 %v1632, %v1633
    %v1635 = vrot.slane %v1634, 2
    %v1636 = vadd.f32 %v1634, %v1635
    %v1637 = vrot.slane %v1636, 1
    %v1638 = vadd.f32 %v1636, %v1637
    %v1639 = vsel %vm1512, %v1508, 0.0
    %v1640 = vrot.slane %v1639, 4
    %v1641 = vadd.f32 %v1639, %v1640
    %v1642 = vrot.slane %v1641, 2
    %v1643 = vadd.f32 %v1641, %v1642
    %v1644 = vrot.slane %v1643, 1
    %v1645 = vadd.f32 %v1643, %v1644
    %v1646 = vsel %vm1512, %v1509, 0.0
    %v1647 = vrot.slane %v1646, 4
    %v1648 = vadd.f32 %v1646, %v1647
    %v1649 = vrot.slane %v1648, 2
    %v1650 = vadd.f32 %v1648, %v1649
    %v1651 = vrot.slane %v1650, 1
    %v1652 = vadd.f32 %v1650, %v1651
    %v1653 = vsel %vm1512, %v1510, 0.0
    %v1654 = vrot.slane %v1653, 4
    %v1655 = vadd.f32 %v1653, %v1654
    %v1656 = vrot.slane %v1655, 2
    %v1657 = vadd.f32 %v1655, %v1656
    %v1658 = vrot.slane %v1657, 1
    %v1659 = vadd.f32 %v1657, %v1658
    %v1660 = vsel %vm1512, %v1511, 0.0
    %v1661 = vrot.slane %v1660, 4
    %v1662 = vadd.f32 %v1660, %v1661
    %v1663 = vrot.slane %v1662, 2
    %v1664 = vadd.f32 %v1662, %v1663
    %v1665 = vrot.slane %v1664, 1
    %v1666 = vadd.f32 %v1664, %v1665
    %v1667 = vrcp.pop 5.0
    %v1668 = vmul.f32 5.0, %v1667
    %v1669 = vsub.f32 1.0, %v1668
    %v1670 = vmul.f32 %v1667, %v1669
    %v1671 = vadd.f32 %v1667, %v1670
    %vm1672 = vweird.f32 %v1667
    %v1673 = vsel %vm1672, %v1667, %v1671
    %v1674 = vmul.f32 %v1519, %v1673
    %v1675 = vmul.f32 %v1526, %v1673
    %v1676 = vmul.f32 %v1533, %v1673
    %v1677 = vmul.f32 %v1540, %v1673
    %v1678 = vmul.f32 %v1547, %v1673
    %v1679 = vmul.f32 %v1554, %v1673
    %v1680 = vmul.f32 %v1561, %v1673
    %v1681 = vmul.f32 %v1568, %v1673
    %v1682 = vmul.f32 %v1575, %v1673
    %v1683 = vmul.f32 %v1582, %v1673
    %v1684 = vmul.f32 %v1589, %v1673
    %v1685 = vmul.f32 %v1596, %v1673
    %v1686 = vmul.f32 %v1603, %v1673
    %v1687 = vmul.f32 %v1610, %v1673
    %v1688 = vmul.f32 %v1617, %v1673
    %v1689 = vmul.f32 %v1624, %v1673
    %v1690 = vmul.f32 %v1631, %v1673
    %v1691 = vmul.f32 %v1638, %v1673
    %v1692 = vmul.f32 %v1645, %v1673
    %v1693 = vmul.f32 %v1652, %v1673
    %v1694 = vmul.f32 %v1659, %v1673
    %v1695 = vmul.f32 %v1666, %v1673
    %v1718 = vsel %vm533, %v1349, %v1342
    %v1719 = vsel %vm535, %v1356, %v1718
    %v1720 = vsel %vm537, %v1363, %v1719
    %v1721 = vsel %vm539, %v1370, %v1720
    %v1722 = vsel %vm541, %v1377, %v1721
    %v1723 = vsel %vm543, %v1384, %v1722
    %v1724 = vsel %vm545, %v1391, %v1723
    %v1725 = vsel %vm533, %v1405, %v1398
    %v1726 = vsel %vm535, %v1412, %v1725
    %v1727 = vsel %vm537, %v1419, %v1726
    %v1728 = vsel %vm539, %v1426, %v1727
    %v1729 = vsel %vm541, %v1433, %v1728
    %v1730 = vsel %vm543, %v1440, %v1729
    %v1731 = vsel %vm545, %v1447, %v1730
    %v1732 = vsel %vm533, %v1461, %v1454
    %v1733 = vsel %vm535, %v1468, %v1732
    %v1734 = vsel %vm537, %v1475, %v1733
    %v1735 = vsel %vm539, %v1482, %v1734
    %v1736 = vsel %vm541, %v1489, %v1735
    %v1762 = vsel %vm533, %v1675, %v1674
    %v1763 = vsel %vm535, %v1676, %v1762
    %v1764 = vsel %vm537, %v1677, %v1763
    %v1765 = vsel %vm539, %v1678, %v1764
    %v1766 = vsel %vm541, %v1679, %v1765
    %v1767 = vsel %vm543, %v1680, %v1766
    %v1768 = vsel %vm545, %v1681, %v1767
    %v1769 = vsel %vm533, %v1683, %v1682
    %v1770 = vsel %vm535, %v1684, %v1769
    %v1771 = vsel %vm537, %v1685, %v1770
    %v1772 = vsel %vm539, %v1686, %v1771
    %v1773 = vsel %vm541, %v1687, %v1772
    %v1774 = vsel %vm543, %v1688, %v1773
    %v1775 = vsel %vm545, %v1689, %v1774
    %v1776 = vsel %vm533, %v1691, %v1690
    %v1777 = vsel %vm535, %v1692, %v1776
    %v1778 = vsel %vm537, %v1693, %v1777
    %v1779 = vsel %vm539, %v1694, %v1778
    %v1780 = vsel %vm541, %v1695, %v1779
    %1781 = vrot.lane.b32.xlu0 %v1768, 32
    %v1782 = vpop.permute.xlu0 %1781
    %1783 = vrot.lane.b32.xlu0 %v1775, 32
    %v1784 = vpop.permute.xlu0 %1783
    %1785 = vrot.lane.b32.xlu0 %v1780, 32
    %v1786 = vpop.permute.xlu0 %1785
    %v1790 = vsel %vm275, %v1724, %v1782
    %v1791 = vsel %vm275, %v1731, %v1784
    %v1792 = vsel %vm275, %v1736, %v1786
    %v1793 = vpack.c.bf16 %v1791, %v1790
    %v1794 = vpack.c.bf16 %v1792, %v1792
    %v1795 = vld [vmem:[%s10] sm:$0xf]
    %v1796 = vld [vmem:[%s10 + $0x4] sm:$0xf]
    %v1797 = vld [vmem:[%s10 + $0x8] sm:$0xf]
    %v1798 = vld [vmem:[%s10 + $0xc] sm:$0xf]
    %v1799 = vld [vmem:[%s10 + $0x10] sm:$0xf]
    %v1800 = vld [vmem:[%s10 + $0x14] sm:$0xf]
    %v1807 = vunpack.c.l.b16 %v1795
    %v1808 = vunpack.c.l.b16 %v1796
    %v1809 = vunpack.c.l.b16 %v1797
    %v1810 = vunpack.c.l.b16 %v1798
    %v1811 = vunpack.c.l.b16 %v1799
    %v1812 = vunpack.c.l.b16 %v1800
    %v1813 = vpack.c.b16 %v1808, %v1807
    %v1814 = vpack.c.b16 %v1810, %v1809
    %v1815 = vpack.c.b16 %v1812, %v1811
    %vm1819 = vcmask 392192
    %v1821 = vsel %vm1819, %v1793, 0
    %v1824 = vsel %vm1819, %v1794, 0
    %1826 = vmatpush.bf16.msra.mxu0 0
    %1827 = vmatpush.bf16.msra.mxu0 0
    %1828 = vmatpush.bf16.msra.mxu0 0
    %1829 = vmatpush.bf16.msra.mxu0 0
    %1830 = vmatpush.bf16.msra.mxu0 0
    %1831 = vmatpush.bf16.msra.mxu0 %v1815
    %1832 = vmatpush.bf16.msra.mxu0 %v1814
    %1833 = vmatpush.bf16.msra.mxu0 %v1813
    %1834 = vmatmul.bf16.gmra.mxu0 %v1821
    %v1835 = vpop.f32.mrf.mxu0
    %v1836 = vadd.f32 0.0, %v1835
    %v1837 = vpop.f32.mrf.mxu0
    %v1838 = vadd.f32 0.0, %v1837
    %1839 = vmatmul.bf16.gmra.mxu0 %v1824
    %v1840 = vpop.f32.mrf.mxu0
    %v1841 = vadd.f32 0.0, %v1840
    %v1842 = vpop.f32.mrf.mxu0
    %1843 = vdwg.mxu0
    %v1844 = vld [vmem:[#allocation11] sm:$0xf]
    %v1845 = vld [vmem:[#allocation11 + $0x4] sm:$0xf]
    %v1846 = vld [vmem:[%s12] sm:$0xf]
    %v1847 = vld [vmem:[%s12 + $0x4] sm:$0xf]
    %v1848 = vld [vmem:[%s12 + $0x8] sm:$0xf]
    %v1849 = vld [vmem:[%s12 + $0xc] sm:$0xf]
    %v1850 = vld [vmem:[#allocation15] sm:$0xf]
    %v1851 = vld [vmem:[#allocation15 + $0x4] sm:$0xf]
    %v1852 = vld [vmem:[#allocation15 + $0x8] sm:$0xf]
    %v1853 = vld [vmem:[#allocation15 + $0xc] sm:$0xf]
    %v1854 = vld [vmem:[#allocation17] sm:$0x1]
    %v1855 = vld [vmem:[#allocation18] sm:$0x1]
    %v1856 = vpack.c.bf16 %v1838, %v1836
    %v1857 = vld [vmem:[%s11] sm:$0xf]
    %v1858 = vld [vmem:[%s11 + $0x4] sm:$0xf]
    %v1859 = vld [vmem:[%s11 + $0x8] sm:$0xf]
    %v1860 = vld [vmem:[%s11 + $0xc] sm:$0xf]
    %v1865 = vunpack.c.l.b16 %v1857
    %v1866 = vunpack.c.l.b16 %v1858
    %v1867 = vunpack.c.l.b16 %v1859
    %v1868 = vunpack.c.l.b16 %v1860
    %v1869 = vpack.c.b16 %v1866, %v1865
    %v1870 = vpack.c.b16 %v1868, %v1867
    %v1874 = vsel %vm275, %v1856, 0
    %1876 = vmatpush.bf16.msra.mxu0 0
    %1877 = vmatpush.bf16.msra.mxu0 0
    %1878 = vmatpush.bf16.msra.mxu0 0
    %1879 = vmatpush.bf16.msra.mxu0 0
    %1880 = vmatpush.bf16.msra.mxu0 0
    %1881 = vmatpush.bf16.msra.mxu0 0
    %1882 = vmatpush.bf16.msra.mxu0 %v1870
    %1883 = vmatpush.bf16.msra.mxu0 %v1869
    %1884 = vmatmul.bf16.gmra.mxu0 %v1874
    %v1885 = vpop.f32.mrf.mxu0
    %v1886 = vadd.f32 0.0, %v1885
    %v1887 = vpop.f32.mrf.mxu0
    %v1888 = vadd.f32 0.0, %v1887
    %1889 = vdwg.mxu0
    %v1890 = vpack.c.bf16 %v1888, %v1886
    %v1893 = vunpack.c.l.b16 %v1844
    %v1894 = vunpack.c.l.b16 %v1845
    %v1895 = vpack.c.b16 %v1894, %v1893
    %vm1896 = vcmask 130048
    %v1898 = vsel %vm1896, %v1895, 0
    %1900 = vmatpush.bf16.msra.mxu0 0
    %1901 = vmatpush.bf16.msra.mxu0 0
    %1902 = vmatpush.bf16.msra.mxu0 0
    %1903 = vmatpush.bf16.msra.mxu0 0
    %1904 = vmatpush.bf16.msra.mxu0 0
    %1905 = vmatpush.bf16.msra.mxu0 0
    %1906 = vmatpush.bf16.msra.mxu0 0
    %1907 = vmatpush.bf16.msra.mxu0 %v1890
    %1908 = vmatmul.bf16.gmra.mxu0 %v1898
    %v1909 = vpop.f32.mrf.mxu0
    %v1910 = vadd.f32 0.0, %v1909
    %v1911 = vpop.f32.mrf.mxu0
    %v1912 = vadd.f32 0.0, %v1911
    %1913 = vdwg.mxu0
    %v1914 = vpack.c.bf16 %v1912, %v1910
    %v1916 = vperm.slane %v1854, 0
    %v1922 = vunpack.c.l.b16 %v1846
    %v1923 = vunpack.c.l.b16 %v1847
    %v1924 = vunpack.c.l.b16 %v1848
    %v1925 = vunpack.c.l.b16 %v1849
    %v1926 = vpack.c.b16 %v1923, %v1922
    %v1927 = vpack.c.b16 %v1925, %v1924
    %v1931 = vsel %vm275, %v1914, 0
    %1933 = vmatpush.bf16.msra.mxu0 0
    %1934 = vmatpush.bf16.msra.mxu0 0
    %1935 = vmatpush.bf16.msra.mxu0 0
    %1936 = vmatpush.bf16.msra.mxu0 0
    %1937 = vmatpush.bf16.msra.mxu0 0
    %1938 = vmatpush.bf16.msra.mxu0 0
    %1939 = vmatpush.bf16.msra.mxu0 %v1927
    %1940 = vmatpush.bf16.msra.mxu0 %v1926
    %1941 = vmatmul.bf16.gmra.mxu0 %v1931
    %v1942 = vpop.f32.mrf.mxu0
    %v1943 = vadd.f32 %v1916, %v1942
    %v1944 = vpop.f32.mrf.mxu0
    %v1945 = vadd.f32 %v1916, %v1944
    %1946 = vdwg.mxu0
    %v1948 = vperm.slane %v1855, 0
    %v1954 = vunpack.c.l.b16 %v1850
    %v1955 = vunpack.c.l.b16 %v1851
    %v1956 = vunpack.c.l.b16 %v1852
    %v1957 = vunpack.c.l.b16 %v1853
    %v1958 = vpack.c.b16 %v1955, %v1954
    %v1959 = vpack.c.b16 %v1957, %v1956
    %1962 = vmatpush.bf16.msra.mxu0 0
    %1963 = vmatpush.bf16.msra.mxu0 0
    %1964 = vmatpush.bf16.msra.mxu0 0
    %1965 = vmatpush.bf16.msra.mxu0 0
    %1966 = vmatpush.bf16.msra.mxu0 0
    %1967 = vmatpush.bf16.msra.mxu0 0
    %1968 = vmatpush.bf16.msra.mxu0 %v1959
    %1969 = vmatpush.bf16.msra.mxu0 %v1958
    %1970 = vmatmul.bf16.gmra.mxu0 %v1874
    %v1971 = vpop.f32.mrf.mxu0
    %v1972 = vadd.f32 %v1948, %v1971
    %v1973 = vpop.f32.mrf.mxu0
    %v1974 = vadd.f32 %v1948, %v1973
    %1975 = vdwg.mxu0
    %v1976 = vadd.f32 %v1943, %v1972
    %v1977 = vadd.f32 %v1945, %v1974
    %v1978 = vxor.u32 %v1976, 2147483648
    %v1979 = vxor.u32 %v1977, 2147483648
    %v1980 = vmul.f32 %v1978, 1.442695
    %v1981 = vpow.pop %v1980
    %v1982 = vmul.f32 %v1979, 1.442695
    %v1983 = vpow.pop %v1982
    %v1984 = vadd.f32 %v1981, 1.0
    %v1985 = vadd.f32 %v1983, 1.0
    %v1986 = vrcp.pop %v1984
    %v1987 = vmul.f32 %v1984, %v1986
    %v1988 = vsub.f32 1.0, %v1987
    %v1989 = vmul.f32 %v1986, %v1988
    %v1990 = vadd.f32 %v1986, %v1989
    %vm1991 = vweird.f32 %v1984
    %vm1992 = vweird.f32 %v1986
    %vm1993 = vmor %vm1991, %vm1992
    %v1994 = vsel %vm1993, %v1986, %v1990
    %v1995 = vand.u32 2147483647, %v1984
    %vm1996 = vcmp.eq.f32.partialorder %v1995, 8.507059e+37
    %v1997 = vand.u32 %v1984, 2147483648
    %v1998 = vor.u32 1.1754944e-38, %v1997
    %v1999 = vsel %vm1996, %v1998, %v1994
    %v2000 = vmul.f32 1.0, %v1999
    %v2001 = vrcp.pop %v1985
    %v2002 = vmul.f32 %v1985, %v2001
    %v2003 = vsub.f32 1.0, %v2002
    %v2004 = vmul.f32 %v2001, %v2003
    %v2005 = vadd.f32 %v2001, %v2004
    %vm2006 = vweird.f32 %v1985
    %vm2007 = vweird.f32 %v2001
    %vm2008 = vmor %vm2006, %vm2007
    %v2009 = vsel %vm2008, %v2001, %v2005
    %v2010 = vand.u32 2147483647, %v1985
    %vm2011 = vcmp.eq.f32.partialorder %v2010, 8.507059e+37
    %v2012 = vand.u32 %v1985, 2147483648
    %v2013 = vor.u32 1.1754944e-38, %v2012
    %v2014 = vsel %vm2011, %v2013, %v2009
    %v2015 = vmul.f32 1.0, %v2014
    %2018 = vrot.lane.b32.xlu0 %v1972, 64
    %v2019 = vpop.permute.xlu0 %2018
    %2020 = vrot.lane.b32.xlu0 %v1974, 64
    %v2021 = vpop.permute.xlu0 %2020
    %v2024 = vmul.f32 %v2000, %v2019
    %v2025 = vmul.f32 %v2015, %v2021
    %2028 = vrot.lane.b32.xlu0 %v2024, 64
    %v2029 = vpop.permute.xlu0 %2028
    %2030 = vrot.lane.b32.xlu0 %v2025, 64
    %v2031 = vpop.permute.xlu0 %2030
    %v2034 = vadd.f32 %v1943, %v2029
    %v2035 = vadd.f32 %v1945, %v2031
    %v2036 = vtanh.pop %v2034
    %v2037 = vtanh.pop %v2035
    %v2038 = vsub.f32 1.0, %v2000
    %v2039 = vsub.f32 1.0, %v2015
    %2042 = vrot.lane.b32.xlu0 %v2036, 96
    %v2043 = vpop.permute.xlu0 %2042
    %2044 = vrot.lane.b32.xlu0 %v2037, 96
    %v2045 = vpop.permute.xlu0 %2044
    %v2048 = vmul.f32 %v2038, %v2043
    %v2049 = vmul.f32 %v2039, %v2045
    %2052 = vrot.lane.b32.xlu0 %v1836, 32
    %v2053 = vpop.permute.xlu0 %2052
    %2054 = vrot.lane.b32.xlu0 %v1838, 32
    %v2055 = vpop.permute.xlu0 %2054
    %v2058 = vmul.f32 %v2000, %v2053
    %v2059 = vmul.f32 %v2015, %v2055
    %v2060 = vadd.f32 %v2048, %v2058
    %v2061 = vadd.f32 %v2049, %v2059
    %v2062 = vpack.c.bf16 %v2061, %v2060
    %s2063 = scalar_lea.vmem %s11, 16
    %v2064 = vld [vmem:[%s2063] sm:$0xf]
    %v2065 = vld [vmem:[%s2063 + $0x4] sm:$0xf]
    %v2066 = vld [vmem:[%s2063 + $0x8] sm:$0xf]
    %v2067 = vld [vmem:[%s2063 + $0xc] sm:$0xf]
    %2069 = vrot.lane.b32.xlu0 %v2062, 96
    %v2070 = vpop.permute.xlu0 %2069
    %v2075 = vunpack.c.l.b16 %v2064
    %v2076 = vunpack.c.l.b16 %v2065
    %v2077 = vunpack.c.l.b16 %v2066
    %v2078 = vunpack.c.l.b16 %v2067
    %v2079 = vpack.c.b16 %v2076, %v2075
    %v2080 = vpack.c.b16 %v2078, %v2077
    %v2084 = vsel %vm275, %v2070, 0
    %2086 = vmatpush.bf16.msra.mxu0 0
    %2087 = vmatpush.bf16.msra.mxu0 0
    %2088 = vmatpush.bf16.msra.mxu0 0
    %2089 = vmatpush.bf16.msra.mxu0 0
    %2090 = vmatpush.bf16.msra.mxu0 0
    %2091 = vmatpush.bf16.msra.mxu0 0
    %2092 = vmatpush.bf16.msra.mxu0 %v2080
    %2093 = vmatpush.bf16.msra.mxu0 %v2079
    %2094 = vmatmul.bf16.gmra.mxu0 %v2084
    %v2095 = vpop.f32.mrf.mxu0
    %v2096 = vadd.f32 0.0, %v2095
    %v2097 = vpop.f32.mrf.mxu0
    %v2098 = vadd.f32 0.0, %v2097
    %2099 = vdwg.mxu0
    %v2100 = vpack.c.bf16 %v2098, %v2096
    %2101 = vmatpush.bf16.msra.mxu0 0
    %2102 = vmatpush.bf16.msra.mxu0 0
    %2103 = vmatpush.bf16.msra.mxu0 0
    %2104 = vmatpush.bf16.msra.mxu0 0
    %2105 = vmatpush.bf16.msra.mxu0 0
    %2106 = vmatpush.bf16.msra.mxu0 0
    %2107 = vmatpush.bf16.msra.mxu0 0
    %2108 = vmatpush.bf16.msra.mxu0 %v2100
    %2109 = vmatmul.bf16.gmra.mxu0 %v1898
    %v2110 = vpop.f32.mrf.mxu0
    %v2111 = vadd.f32 0.0, %v2110
    %v2112 = vpop.f32.mrf.mxu0
    %v2113 = vadd.f32 0.0, %v2112
    %2114 = vdwg.mxu0
    %v2115 = vpack.c.bf16 %v2113, %v2111
    %v2117 = vsel %vm275, %v2115, 0
    %2119 = vmatpush.bf16.msra.mxu0 0
    %2120 = vmatpush.bf16.msra.mxu0 0
    %2121 = vmatpush.bf16.msra.mxu0 0
    %2122 = vmatpush.bf16.msra.mxu0 0
    %2123 = vmatpush.bf16.msra.mxu0 0
    %2124 = vmatpush.bf16.msra.mxu0 0
    %2125 = vmatpush.bf16.msra.mxu0 %v1927
    %2126 = vmatpush.bf16.msra.mxu0 %v1926
    %2127 = vmatmul.bf16.gmra.mxu0 %v2117
    %v2128 = vpop.f32.mrf.mxu0
    %v2129 = vadd.f32 %v1916, %v2128
    %v2130 = vpop.f32.mrf.mxu0
    %v2131 = vadd.f32 %v1916, %v2130
    %2132 = vdwg.mxu0
    %2133 = vmatpush.bf16.msra.mxu0 0
    %2134 = vmatpush.bf16.msra.mxu0 0
    %2135 = vmatpush.bf16.msra.mxu0 0
    %2136 = vmatpush.bf16.msra.mxu0 0
    %2137 = vmatpush.bf16.msra.mxu0 0
    %2138 = vmatpush.bf16.msra.mxu0 0
    %2139 = vmatpush.bf16.msra.mxu0 %v1959
    %2140 = vmatpush.bf16.msra.mxu0 %v1958
    %2141 = vmatmul.bf16.gmra.mxu0 %v2084
    %v2142 = vpop.f32.mrf.mxu0
    %v2143 = vadd.f32 %v1948, %v2142
    %v2144 = vpop.f32.mrf.mxu0
    %v2145 = vadd.f32 %v1948, %v2144
    %2146 = vdwg.mxu0
    %v2147 = vadd.f32 %v2129, %v2143
    %v2148 = vadd.f32 %v2131, %v2145
    %v2149 = vxor.u32 %v2147, 2147483648
    %v2150 = vxor.u32 %v2148, 2147483648
    %v2151 = vmul.f32 %v2149, 1.442695
    %v2152 = vpow.pop %v2151
    %v2153 = vmul.f32 %v2150, 1.442695
    %v2154 = vpow.pop %v2153
    %v2155 = vadd.f32 %v2152, 1.0
    %v2156 = vadd.f32 %v2154, 1.0
    %v2157 = vrcp.pop %v2155
    %v2158 = vmul.f32 %v2155, %v2157
    %v2159 = vsub.f32 1.0, %v2158
    %v2160 = vmul.f32 %v2157, %v2159
    %v2161 = vadd.f32 %v2157, %v2160
    %vm2162 = vweird.f32 %v2155
    %vm2163 = vweird.f32 %v2157
    %vm2164 = vmor %vm2162, %vm2163
    %v2165 = vsel %vm2164, %v2157, %v2161
    %v2166 = vand.u32 2147483647, %v2155
    %vm2167 = vcmp.eq.f32.partialorder %v2166, 8.507059e+37
    %v2168 = vand.u32 %v2155, 2147483648
    %v2169 = vor.u32 1.1754944e-38, %v2168
    %v2170 = vsel %vm2167, %v2169, %v2165
    %v2171 = vmul.f32 1.0, %v2170
    %v2172 = vrcp.pop %v2156
    %v2173 = vmul.f32 %v2156, %v2172
    %v2174 = vsub.f32 1.0, %v2173
    %v2175 = vmul.f32 %v2172, %v2174
    %v2176 = vadd.f32 %v2172, %v2175
    %vm2177 = vweird.f32 %v2156
    %vm2178 = vweird.f32 %v2172
    %vm2179 = vmor %vm2177, %vm2178
    %v2180 = vsel %vm2179, %v2172, %v2176
    %v2181 = vand.u32 2147483647, %v2156
    %vm2182 = vcmp.eq.f32.partialorder %v2181, 8.507059e+37
    %v2183 = vand.u32 %v2156, 2147483648
    %v2184 = vor.u32 1.1754944e-38, %v2183
    %v2185 = vsel %vm2182, %v2184, %v2180
    %v2186 = vmul.f32 1.0, %v2185
    %2189 = vrot.lane.b32.xlu0 %v2143, 64
    %v2190 = vpop.permute.xlu0 %2189
    %2191 = vrot.lane.b32.xlu0 %v2145, 64
    %v2192 = vpop.permute.xlu0 %2191
    %v2195 = vmul.f32 %v2171, %v2190
    %v2196 = vmul.f32 %v2186, %v2192
    %2199 = vrot.lane.b32.xlu0 %v2195, 64
    %v2200 = vpop.permute.xlu0 %2199
    %2201 = vrot.lane.b32.xlu0 %v2196, 64
    %v2202 = vpop.permute.xlu0 %2201
    %v2205 = vadd.f32 %v2129, %v2200
    %v2206 = vadd.f32 %v2131, %v2202
    %v2207 = vtanh.pop %v2205
    %v2208 = vtanh.pop %v2206
    %v2209 = vsub.f32 1.0, %v2171
    %v2210 = vsub.f32 1.0, %v2186
    %2213 = vrot.lane.b32.xlu0 %v2207, 96
    %v2214 = vpop.permute.xlu0 %2213
    %2215 = vrot.lane.b32.xlu0 %v2208, 96
    %v2216 = vpop.permute.xlu0 %2215
    %v2219 = vmul.f32 %v2209, %v2214
    %v2220 = vmul.f32 %v2210, %v2216
    %v2221 = vmul.f32 %v2171, %v2060
    %v2222 = vmul.f32 %v2186, %v2061
    %v2223 = vadd.f32 %v2219, %v2221
    %v2224 = vadd.f32 %v2220, %v2222
    %v2225 = vpack.c.bf16 %v2224, %v2223
    %s2226 = scalar_lea.vmem %s11, 32
    %v2227 = vld [vmem:[%s2226] sm:$0xf]
    %v2228 = vld [vmem:[%s2226 + $0x4] sm:$0xf]
    %v2229 = vld [vmem:[%s2226 + $0x8] sm:$0xf]
    %v2230 = vld [vmem:[%s2226 + $0xc] sm:$0xf]
    %2232 = vrot.lane.b32.xlu0 %v2225, 96
    %v2233 = vpop.permute.xlu0 %2232
    %v2238 = vunpack.c.l.b16 %v2227
    %v2239 = vunpack.c.l.b16 %v2228
    %v2240 = vunpack.c.l.b16 %v2229
    %v2241 = vunpack.c.l.b16 %v2230
    %v2242 = vpack.c.b16 %v2239, %v2238
    %v2243 = vpack.c.b16 %v2241, %v2240
    %v2247 = vsel %vm275, %v2233, 0
    %2249 = vmatpush.bf16.msra.mxu0 0
    %2250 = vmatpush.bf16.msra.mxu0 0
    %2251 = vmatpush.bf16.msra.mxu0 0
    %2252 = vmatpush.bf16.msra.mxu0 0
    %2253 = vmatpush.bf16.msra.mxu0 0
    %2254 = vmatpush.bf16.msra.mxu0 0
    %2255 = vmatpush.bf16.msra.mxu0 %v2243
    %2256 = vmatpush.bf16.msra.mxu0 %v2242
    %2257 = vmatmul.bf16.gmra.mxu0 %v2247
    %v2258 = vpop.f32.mrf.mxu0
    %v2259 = vadd.f32 0.0, %v2258
    %v2260 = vpop.f32.mrf.mxu0
    %v2261 = vadd.f32 0.0, %v2260
    %2262 = vdwg.mxu0
    %v2263 = vpack.c.bf16 %v2261, %v2259
    %2264 = vmatpush.bf16.msra.mxu0 0
    %2265 = vmatpush.bf16.msra.mxu0 0
    %2266 = vmatpush.bf16.msra.mxu0 0
    %2267 = vmatpush.bf16.msra.mxu0 0
    %2268 = vmatpush.bf16.msra.mxu0 0
    %2269 = vmatpush.bf16.msra.mxu0 0
    %2270 = vmatpush.bf16.msra.mxu0 0
    %2271 = vmatpush.bf16.msra.mxu0 %v2263
    %2272 = vmatmul.bf16.gmra.mxu0 %v1898
    %v2273 = vpop.f32.mrf.mxu0
    %v2274 = vadd.f32 0.0, %v2273
    %v2275 = vpop.f32.mrf.mxu0
    %v2276 = vadd.f32 0.0, %v2275
    %2277 = vdwg.mxu0
    %v2278 = vpack.c.bf16 %v2276, %v2274
    %v2280 = vsel %vm275, %v2278, 0
    %2282 = vmatpush.bf16.msra.mxu0 0
    %2283 = vmatpush.bf16.msra.mxu0 0
    %2284 = vmatpush.bf16.msra.mxu0 0
    %2285 = vmatpush.bf16.msra.mxu0 0
    %2286 = vmatpush.bf16.msra.mxu0 0
    %2287 = vmatpush.bf16.msra.mxu0 0
    %2288 = vmatpush.bf16.msra.mxu0 %v1927
    %2289 = vmatpush.bf16.msra.mxu0 %v1926
    %2290 = vmatmul.bf16.gmra.mxu0 %v2280
    %v2291 = vpop.f32.mrf.mxu0
    %v2292 = vadd.f32 %v1916, %v2291
    %v2293 = vpop.f32.mrf.mxu0
    %v2294 = vadd.f32 %v1916, %v2293
    %2295 = vdwg.mxu0
    %2296 = vmatpush.bf16.msra.mxu0 0
    %2297 = vmatpush.bf16.msra.mxu0 0
    %2298 = vmatpush.bf16.msra.mxu0 0
    %2299 = vmatpush.bf16.msra.mxu0 0
    %2300 = vmatpush.bf16.msra.mxu0 0
    %2301 = vmatpush.bf16.msra.mxu0 0
    %2302 = vmatpush.bf16.msra.mxu0 %v1959
    %2303 = vmatpush.bf16.msra.mxu0 %v1958
    %2304 = vmatmul.bf16.gmra.mxu0 %v2247
    %v2305 = vpop.f32.mrf.mxu0
    %v2306 = vadd.f32 %v1948, %v2305
    %v2307 = vpop.f32.mrf.mxu0
    %v2308 = vadd.f32 %v1948, %v2307
    %2309 = vdwg.mxu0
    %v2310 = vadd.f32 %v2292, %v2306
    %v2311 = vadd.f32 %v2294, %v2308
    %v2312 = vxor.u32 %v2310, 2147483648
    %v2313 = vxor.u32 %v2311, 2147483648
    %v2314 = vmul.f32 %v2312, 1.442695
    %v2315 = vpow.pop %v2314
    %v2316 = vmul.f32 %v2313, 1.442695
    %v2317 = vpow.pop %v2316
    %v2318 = vadd.f32 %v2315, 1.0
    %v2319 = vadd.f32 %v2317, 1.0
    %v2320 = vrcp.pop %v2318
    %v2321 = vmul.f32 %v2318, %v2320
    %v2322 = vsub.f32 1.0, %v2321
    %v2323 = vmul.f32 %v2320, %v2322
    %v2324 = vadd.f32 %v2320, %v2323
    %vm2325 = vweird.f32 %v2318
    %vm2326 = vweird.f32 %v2320
    %vm2327 = vmor %vm2325, %vm2326
    %v2328 = vsel %vm2327, %v2320, %v2324
    %v2329 = vand.u32 2147483647, %v2318
    %vm2330 = vcmp.eq.f32.partialorder %v2329, 8.507059e+37
    %v2331 = vand.u32 %v2318, 2147483648
    %v2332 = vor.u32 1.1754944e-38, %v2331
    %v2333 = vsel %vm2330, %v2332, %v2328
    %v2334 = vmul.f32 1.0, %v2333
    %v2335 = vrcp.pop %v2319
    %v2336 = vmul.f32 %v2319, %v2335
    %v2337 = vsub.f32 1.0, %v2336
    %v2338 = vmul.f32 %v2335, %v2337
    %v2339 = vadd.f32 %v2335, %v2338
    %vm2340 = vweird.f32 %v2319
    %vm2341 = vweird.f32 %v2335
    %vm2342 = vmor %vm2340, %vm2341
    %v2343 = vsel %vm2342, %v2335, %v2339
    %v2344 = vand.u32 2147483647, %v2319
    %vm2345 = vcmp.eq.f32.partialorder %v2344, 8.507059e+37
    %v2346 = vand.u32 %v2319, 2147483648
    %v2347 = vor.u32 1.1754944e-38, %v2346
    %v2348 = vsel %vm2345, %v2347, %v2343
    %v2349 = vmul.f32 1.0, %v2348
    %2352 = vrot.lane.b32.xlu0 %v2306, 64
    %v2353 = vpop.permute.xlu0 %2352
    %2354 = vrot.lane.b32.xlu0 %v2308, 64
    %v2355 = vpop.permute.xlu0 %2354
    %v2358 = vmul.f32 %v2334, %v2353
    %v2359 = vmul.f32 %v2349, %v2355
    %2362 = vrot.lane.b32.xlu0 %v2358, 64
    %v2363 = vpop.permute.xlu0 %2362
    %2364 = vrot.lane.b32.xlu0 %v2359, 64
    %v2365 = vpop.permute.xlu0 %2364
    %v2368 = vadd.f32 %v2292, %v2363
    %v2369 = vadd.f32 %v2294, %v2365
    %v2370 = vtanh.pop %v2368
    %v2371 = vtanh.pop %v2369
    %v2372 = vsub.f32 1.0, %v2334
    %v2373 = vsub.f32 1.0, %v2349
    %2376 = vrot.lane.b32.xlu0 %v2370, 96
    %v2377 = vpop.permute.xlu0 %2376
    %2378 = vrot.lane.b32.xlu0 %v2371, 96
    %v2379 = vpop.permute.xlu0 %2378
    %v2382 = vmul.f32 %v2372, %v2377
    %v2383 = vmul.f32 %v2373, %v2379
    %v2384 = vmul.f32 %v2334, %v2223
    %v2385 = vmul.f32 %v2349, %v2224
    %v2386 = vadd.f32 %v2382, %v2384
    %v2387 = vadd.f32 %v2383, %v2385
    %v2388 = vsel %vm275, %v1836, %v2386
    %v2389 = vsel %vm275, %v1838, %v2387
    %vm2390 = vcmask 523264
    %2391 = vst.msk [vmem:[#allocation2] sm:$0xff] %vm2390, %v2388
    %2392 = vst.msk [vmem:[#allocation2 + $0x8] sm:$0xff] %vm2390, %v2389
    %s2393 = sld [smem:[#allocation5]]
    %s2394 = sld [smem:[#allocation10]]
    %s2395 = scalar_lea.vmem [#allocation2], %s2393
    %v2396 = vld [vmem:[%s2395] sm:$0x1]
    %v2397 = vstv %s2394
    %v2398 = vmul.f32 %v2396, %v2397
    %vm2399 = vcmask 516096
    %2400 = vst.msk [vmem:[#allocation3] sm:$0x1] %vm2399, %v2398
    %s2401 = sld [smem:[#allocation5 + $0x1]]
    %s2402 = sld [smem:[#allocation10 + $0x1]]
    %s2403 = scalar_lea.vmem [#allocation2], %s2401
    %v2404 = vld [vmem:[%s2403] sm:$0x1]
    %v2405 = vstv %s2402
    %v2406 = vmul.f32 %v2404, %v2405
    %2407 = vst.msk [vmem:[#allocation3 + $0x1] sm:$0x1] %vm2399, %v2406
    %s2408 = sld [smem:[#allocation5 + $0x2]]
    %s2409 = sld [smem:[#allocation10 + $0x2]]
    %s2410 = scalar_lea.vmem [#allocation2], %s2408
    %v2411 = vld [vmem:[%s2410] sm:$0x1]
    %v2412 = vstv %s2409
    %v2413 = vmul.f32 %v2411, %v2412
    %2414 = vst.msk [vmem:[#allocation3 + $0x2] sm:$0x1] %vm2399, %v2413
    %s2415 = sld [smem:[#allocation5 + $0x3]]
    %s2416 = sld [smem:[#allocation10 + $0x3]]
    %s2417 = scalar_lea.vmem [#allocation2], %s2415
    %v2418 = vld [vmem:[%s2417] sm:$0x1]
    %v2419 = vstv %s2416
    %v2420 = vmul.f32 %v2418, %v2419
    %2421 = vst.msk [vmem:[#allocation3 + $0x3] sm:$0x1] %vm2399, %v2420
    %s2422 = sld [smem:[#allocation5 + $0x4]]
    %s2423 = sld [smem:[#allocation10 + $0x4]]
    %s2424 = scalar_lea.vmem [#allocation2], %s2422
    %v2425 = vld [vmem:[%s2424] sm:$0x1]
    %v2426 = vstv %s2423
    %v2427 = vmul.f32 %v2425, %v2426
    %2428 = vst.msk [vmem:[#allocation3 + $0x4] sm:$0x1] %vm2399, %v2427
    %s2429 = sld [smem:[#allocation5 + $0x5]]
    %s2430 = sld [smem:[#allocation10 + $0x5]]
    %s2431 = scalar_lea.vmem [#allocation2], %s2429
    %v2432 = vld [vmem:[%s2431] sm:$0x1]
    %v2433 = vstv %s2430
    %v2434 = vmul.f32 %v2432, %v2433
    %2435 = vst.msk [vmem:[#allocation3 + $0x5] sm:$0x1] %vm2399, %v2434
    %s2436 = sld [smem:[#allocation5 + $0x6]]
    %s2437 = sld [smem:[#allocation10 + $0x6]]
    %s2438 = scalar_lea.vmem [#allocation2], %s2436
    %v2439 = vld [vmem:[%s2438] sm:$0x1]
    %v2440 = vstv %s2437
    %v2441 = vmul.f32 %v2439, %v2440
    %2442 = vst.msk [vmem:[#allocation3 + $0x6] sm:$0x1] %vm2399, %v2441
    %s2443 = sld [smem:[#allocation5 + $0x7]]
    %s2444 = sld [smem:[#allocation10 + $0x7]]
    %s2445 = scalar_lea.vmem [#allocation2], %s2443
    %v2446 = vld [vmem:[%s2445] sm:$0x1]
    %v2447 = vstv %s2444
    %v2448 = vmul.f32 %v2446, %v2447
    %2449 = vst.msk [vmem:[#allocation3 + $0x7] sm:$0x1] %vm2399, %v2448
    %s2450 = sld [smem:[#allocation5 + $0x8]]
    %s2451 = sld [smem:[#allocation10 + $0x8]]
    %s2452 = scalar_lea.vmem [#allocation2], %s2450
    %v2453 = vld [vmem:[%s2452] sm:$0x1]
    %v2454 = vstv %s2451
    %v2455 = vmul.f32 %v2453, %v2454
    %2456 = vst.msk [vmem:[#allocation3 + $0x8] sm:$0x1] %vm2399, %v2455
    %s2457 = sld [smem:[#allocation5 + $0x9]]
    %s2458 = sld [smem:[#allocation10 + $0x9]]
    %s2459 = scalar_lea.vmem [#allocation2], %s2457
    %v2460 = vld [vmem:[%s2459] sm:$0x1]
    %v2461 = vstv %s2458
    %v2462 = vmul.f32 %v2460, %v2461
    %2463 = vst.msk [vmem:[#allocation3 + $0x9] sm:$0x1] %vm2399, %v2462
    %s2464 = sld [smem:[#allocation5 + $0xa]]
    %s2465 = sld [smem:[#allocation10 + $0xa]]
    %s2466 = scalar_lea.vmem [#allocation2], %s2464
    %v2467 = vld [vmem:[%s2466] sm:$0x1]
    %v2468 = vstv %s2465
    %v2469 = vmul.f32 %v2467, %v2468
    %2470 = vst.msk [vmem:[#allocation3 + $0xa] sm:$0x1] %vm2399, %v2469
    %s2471 = sld [smem:[#allocation5 + $0xb]]
    %s2472 = sld [smem:[#allocation10 + $0xb]]
    %s2473 = scalar_lea.vmem [#allocation2], %s2471
    %v2474 = vld [vmem:[%s2473] sm:$0x1]
    %v2475 = vstv %s2472
    %v2476 = vmul.f32 %v2474, %v2475
    %2477 = vst.msk [vmem:[#allocation3 + $0xb] sm:$0x1] %vm2399, %v2476
    %s2478 = sld [smem:[#allocation5 + $0xc]]
    %s2479 = sld [smem:[#allocation10 + $0xc]]
    %s2480 = scalar_lea.vmem [#allocation2], %s2478
    %v2481 = vld [vmem:[%s2480] sm:$0x1]
    %v2482 = vstv %s2479
    %v2483 = vmul.f32 %v2481, %v2482
    %2484 = vst.msk [vmem:[#allocation3 + $0xc] sm:$0x1] %vm2399, %v2483
    %s2485 = sld [smem:[#allocation5 + $0xd]]
    %s2486 = sld [smem:[#allocation10 + $0xd]]
    %s2487 = scalar_lea.vmem [#allocation2], %s2485
    %v2488 = vld [vmem:[%s2487] sm:$0x1]
    %v2489 = vstv %s2486
    %v2490 = vmul.f32 %v2488, %v2489
    %2491 = vst.msk [vmem:[#allocation3 + $0xd] sm:$0x1] %vm2399, %v2490
    %s2492 = sld [smem:[#allocation5 + $0xe]]
    %s2493 = sld [smem:[#allocation10 + $0xe]]
    %s2494 = scalar_lea.vmem [#allocation2], %s2492
    %v2495 = vld [vmem:[%s2494] sm:$0x1]
    %v2496 = vstv %s2493
    %v2497 = vmul.f32 %v2495, %v2496
    %2498 = vst.msk [vmem:[#allocation3 + $0xe] sm:$0x1] %vm2399, %v2497
    %s2499 = sld [smem:[#allocation5 + $0xf]]
    %s2500 = sld [smem:[#allocation10 + $0xf]]
    %s2501 = scalar_lea.vmem [#allocation2], %s2499
    %v2502 = vld [vmem:[%s2501] sm:$0x1]
    %v2503 = vstv %s2500
    %v2504 = vmul.f32 %v2502, %v2503
    %2505 = vst.msk [vmem:[#allocation3 + $0xf] sm:$0x1] %vm2399, %v2504
    %s2506 = sld [smem:[#allocation5 + $0x10]]
    %s2507 = sld [smem:[#allocation10 + $0x10]]
    %s2508 = scalar_lea.vmem [#allocation2], %s2506
    %v2509 = vld [vmem:[%s2508] sm:$0x1]
    %v2510 = vstv %s2507
    %v2511 = vmul.f32 %v2509, %v2510
    %2512 = vst.msk [vmem:[#allocation3 + $0x10] sm:$0x1] %vm2399, %v2511
    %s2513 = sld [smem:[#allocation5 + $0x11]]
    %s2514 = sld [smem:[#allocation10 + $0x11]]
    %s2515 = scalar_lea.vmem [#allocation2], %s2513
    %v2516 = vld [vmem:[%s2515] sm:$0x1]
    %v2517 = vstv %s2514
    %v2518 = vmul.f32 %v2516, %v2517
    %2519 = vst.msk [vmem:[#allocation3 + $0x11] sm:$0x1] %vm2399, %v2518
    %s2520 = sld [smem:[#allocation5 + $0x12]]
    %s2521 = sld [smem:[#allocation10 + $0x12]]
    %s2522 = scalar_lea.vmem [#allocation2], %s2520
    %v2523 = vld [vmem:[%s2522] sm:$0x1]
    %v2524 = vstv %s2521
    %v2525 = vmul.f32 %v2523, %v2524
    %2526 = vst.msk [vmem:[#allocation3 + $0x12] sm:$0x1] %vm2399, %v2525
    %s2527 = sld [smem:[#allocation5 + $0x13]]
    %s2528 = sld [smem:[#allocation10 + $0x13]]
    %s2529 = scalar_lea.vmem [#allocation2], %s2527
    %v2530 = vld [vmem:[%s2529] sm:$0x1]
    %v2531 = vstv %s2528
    %v2532 = vmul.f32 %v2530, %v2531
    %2533 = vst.msk [vmem:[#allocation3 + $0x13] sm:$0x1] %vm2399, %v2532
    %s2534 = sld [smem:[#allocation5 + $0x14]]
    %s2535 = sld [smem:[#allocation10 + $0x14]]
    %s2536 = scalar_lea.vmem [#allocation2], %s2534
    %v2537 = vld [vmem:[%s2536] sm:$0x1]
    %v2538 = vstv %s2535
    %v2539 = vmul.f32 %v2537, %v2538
    %2540 = vst.msk [vmem:[#allocation3 + $0x14] sm:$0x1] %vm2399, %v2539
    %s2541 = sld [smem:[#allocation5 + $0x15]]
    %s2542 = sld [smem:[#allocation10 + $0x15]]
    %s2543 = scalar_lea.vmem [#allocation2], %s2541
    %v2544 = vld [vmem:[%s2543] sm:$0x1]
    %v2545 = vstv %s2542
    %v2546 = vmul.f32 %v2544, %v2545
    %2547 = vst.msk [vmem:[#allocation3 + $0x15] sm:$0x1] %vm2399, %v2546
    %s2548 = sld [smem:[#allocation5 + $0x16]]
    %s2549 = sld [smem:[#allocation10 + $0x16]]
    %s2550 = scalar_lea.vmem [#allocation2], %s2548
    %v2551 = vld [vmem:[%s2550] sm:$0x1]
    %v2552 = vstv %s2549
    %v2553 = vmul.f32 %v2551, %v2552
    %2554 = vst.msk [vmem:[#allocation3 + $0x16] sm:$0x1] %vm2399, %v2553
    %s2555 = sld [smem:[#allocation5 + $0x17]]
    %s2556 = sld [smem:[#allocation10 + $0x17]]
    %s2557 = scalar_lea.vmem [#allocation2], %s2555
    %v2558 = vld [vmem:[%s2557] sm:$0x1]
    %v2559 = vstv %s2556
    %v2560 = vmul.f32 %v2558, %v2559
    %2561 = vst.msk [vmem:[#allocation3 + $0x17] sm:$0x1] %vm2399, %v2560
    %s2562 = sld [smem:[#allocation5 + $0x18]]
    %s2563 = sld [smem:[#allocation10 + $0x18]]
    %s2564 = scalar_lea.vmem [#allocation2], %s2562
    %v2565 = vld [vmem:[%s2564] sm:$0x1]
    %v2566 = vstv %s2563
    %v2567 = vmul.f32 %v2565, %v2566
    %2568 = vst.msk [vmem:[#allocation3 + $0x18] sm:$0x1] %vm2399, %v2567
    %s2569 = sld [smem:[#allocation5 + $0x19]]
    %s2570 = sld [smem:[#allocation10 + $0x19]]
    %s2571 = scalar_lea.vmem [#allocation2], %s2569
    %v2572 = vld [vmem:[%s2571] sm:$0x1]
    %v2573 = vstv %s2570
    %v2574 = vmul.f32 %v2572, %v2573
    %2575 = vst.msk [vmem:[#allocation3 + $0x19] sm:$0x1] %vm2399, %v2574
    %s2576 = sld [smem:[#allocation5 + $0x1a]]
    %s2577 = sld [smem:[#allocation10 + $0x1a]]
    %s2578 = scalar_lea.vmem [#allocation2], %s2576
    %v2579 = vld [vmem:[%s2578] sm:$0x1]
    %v2580 = vstv %s2577
    %v2581 = vmul.f32 %v2579, %v2580
    %2582 = vst.msk [vmem:[#allocation3 + $0x1a] sm:$0x1] %vm2399, %v2581
    %s2583 = sld [smem:[#allocation5 + $0x1b]]
    %s2584 = sld [smem:[#allocation10 + $0x1b]]
    %s2585 = scalar_lea.vmem [#allocation2], %s2583
    %v2586 = vld [vmem:[%s2585] sm:$0x1]
    %v2587 = vstv %s2584
    %v2588 = vmul.f32 %v2586, %v2587
    %2589 = vst.msk [vmem:[#allocation3 + $0x1b] sm:$0x1] %vm2399, %v2588
    %s2590 = sld [smem:[#allocation5 + $0x1c]]
    %s2591 = sld [smem:[#allocation10 + $0x1c]]
    %s2592 = scalar_lea.vmem [#allocation2], %s2590
    %v2593 = vld [vmem:[%s2592] sm:$0x1]
    %v2594 = vstv %s2591
    %v2595 = vmul.f32 %v2593, %v2594
    %2596 = vst.msk [vmem:[#allocation3 + $0x1c] sm:$0x1] %vm2399, %v2595
    %s2597 = sld [smem:[#allocation5 + $0x1d]]
    %s2598 = sld [smem:[#allocation10 + $0x1d]]
    %s2599 = scalar_lea.vmem [#allocation2], %s2597
    %v2600 = vld [vmem:[%s2599] sm:$0x1]
    %v2601 = vstv %s2598
    %v2602 = vmul.f32 %v2600, %v2601
    %2603 = vst.msk [vmem:[#allocation3 + $0x1d] sm:$0x1] %vm2399, %v2602
    %s2604 = sld [smem:[#allocation5 + $0x1e]]
    %s2605 = sld [smem:[#allocation10 + $0x1e]]
    %s2606 = scalar_lea.vmem [#allocation2], %s2604
    %v2607 = vld [vmem:[%s2606] sm:$0x1]
    %v2608 = vstv %s2605
    %v2609 = vmul.f32 %v2607, %v2608
    %2610 = vst.msk [vmem:[#allocation3 + $0x1e] sm:$0x1] %vm2399, %v2609
    %s2611 = sld [smem:[#allocation5 + $0x1f]]
    %s2612 = sld [smem:[#allocation10 + $0x1f]]
    %s2613 = scalar_lea.vmem [#allocation2], %s2611
    %v2614 = vld [vmem:[%s2613] sm:$0x1]
    %v2615 = vstv %s2612
    %v2616 = vmul.f32 %v2614, %v2615
    %2617 = vst.msk [vmem:[#allocation3 + $0x1f] sm:$0x1] %vm2399, %v2616
    %v2618 = vld [vmem:[#allocation3] sm:$0xff]
    %v2619 = vld [vmem:[#allocation3 + $0x8] sm:$0xff]
    %v2620 = vld [vmem:[#allocation3 + $0x10] sm:$0xff]
    %v2621 = vld [vmem:[#allocation3 + $0x18] sm:$0xff]
    %v2622 = vpack.c.bf16 %v2619, %v2618
    %v2623 = vpack.c.bf16 %v2621, %v2620
    %v2624 = vld [vmem:[%s19] sm:$0xff]
    %v2625 = vld [vmem:[%s19 + $0x8] sm:$0xff]
    %v2626 = vld [vmem:[%s19 + $0x10] sm:$0xff]
    %v2627 = vld [vmem:[%s19 + $0x18] sm:$0xff]
    %v2628 = vld [vmem:[%s19 + $0x20] sm:$0xff]
    %v2629 = vld [vmem:[%s19 + $0x28] sm:$0xff]
    %v2630 = vld [vmem:[%s19 + $0x30] sm:$0xff]
    %v2631 = vld [vmem:[%s19 + $0x38] sm:$0xff]
    %v2632 = vld [vmem:[#allocation23] sm:$0x3]
    %v2634 = vperm.slane %v2632, 0
    %v2635 = vperm.slane %v2632, 1
    %v2646 = vunpack.c.l.b16 %v2624
    %v2647 = vunpack.c.h.b16 %v2624
    %v2648 = vunpack.c.l.b16 %v2625
    %v2649 = vunpack.c.h.b16 %v2625
    %v2650 = vunpack.c.l.b16 %v2626
    %v2651 = vunpack.c.h.b16 %v2626
    %v2652 = vunpack.c.l.b16 %v2627
    %v2653 = vunpack.c.h.b16 %v2627
    %v2654 = vunpack.c.l.b16 %v2628
    %v2655 = vunpack.c.h.b16 %v2628
    %v2656 = vunpack.c.l.b16 %v2629
    %v2657 = vunpack.c.h.b16 %v2629
    %v2658 = vunpack.c.l.b16 %v2630
    %v2659 = vunpack.c.h.b16 %v2630
    %v2660 = vunpack.c.l.b16 %v2631
    %v2661 = vunpack.c.h.b16 %v2631
    %v2662 = vpack.c.b16 %v2648, %v2646
    %v2663 = vpack.c.b16 %v2649, %v2647
    %v2664 = vpack.c.b16 %v2652, %v2650
    %v2665 = vpack.c.b16 %v2653, %v2651
    %v2666 = vpack.c.b16 %v2656, %v2654
    %v2667 = vpack.c.b16 %v2657, %v2655
    %v2668 = vpack.c.b16 %v2660, %v2658
    %v2669 = vpack.c.b16 %v2661, %v2659
    %v2679 = vsel %vm2390, %v2622, 0
    %v2682 = vsel %vm2390, %v2623, 0
    %2684 = vmatpush.bf16.msra.mxu0 0
    %2685 = vmatpush.bf16.msra.mxu0 0
    %2686 = vmatpush.bf16.msra.mxu0 0
    %2687 = vmatpush.bf16.msra.mxu0 0
    %2688 = vmatpush.bf16.msra.mxu0 %v2668
    %2689 = vmatpush.bf16.msra.mxu0 %v2666
    %2690 = vmatpush.bf16.msra.mxu0 %v2664
    %2691 = vmatpush.bf16.msra.mxu0 %v2662
    %2692 = vmatmul.bf16.gmra.mxu0 %v2679
    %v2693 = vpop.f32.mrf.mxu0
    %v2694 = vadd.f32 %v2634, %v2693
    %v2695 = vpop.f32.mrf.mxu0
    %v2696 = vadd.f32 %v2634, %v2695
    %2697 = vmatmul.bf16.gmra.mxu0 %v2682
    %v2698 = vpop.f32.mrf.mxu0
    %v2699 = vadd.f32 %v2634, %v2698
    %v2700 = vpop.f32.mrf.mxu0
    %v2701 = vadd.f32 %v2634, %v2700
    %2702 = vdwg.mxu0
    %2703 = vmatpush.bf16.msra.mxu0 0
    %2704 = vmatpush.bf16.msra.mxu0 0
    %2705 = vmatpush.bf16.msra.mxu0 0
    %2706 = vmatpush.bf16.msra.mxu0 0
    %2707 = vmatpush.bf16.msra.mxu0 %v2669
    %2708 = vmatpush.bf16.msra.mxu0 %v2667
    %2709 = vmatpush.bf16.msra.mxu0 %v2665
    %2710 = vmatpush.bf16.msra.mxu0 %v2663
    %2711 = vmatmul.bf16.gmra.mxu0 %v2679
    %v2712 = vpop.f32.mrf.mxu0
    %v2713 = vadd.f32 %v2635, %v2712
    %v2714 = vpop.f32.mrf.mxu0
    %v2715 = vadd.f32 %v2635, %v2714
    %2716 = vmatmul.bf16.gmra.mxu0 %v2682
    %v2717 = vpop.f32.mrf.mxu0
    %v2718 = vadd.f32 %v2635, %v2717
    %v2719 = vpop.f32.mrf.mxu0
    %v2720 = vadd.f32 %v2635, %v2719
    %2721 = vdwg.mxu0
    %2722 = vst [vmem:[#allocation4] sm:$0xff] %v2694
    %2723 = vst.msk [vmem:[#allocation4 + $0x8] sm:$0xff] %vm2390, %v2713
    %2724 = vst [vmem:[#allocation4 + $0x10] sm:$0xff] %v2696
    %2725 = vst.msk [vmem:[#allocation4 + $0x18] sm:$0xff] %vm2390, %v2715
    %2726 = vst [vmem:[#allocation4 + $0x20] sm:$0xff] %v2699
    %2727 = vst.msk [vmem:[#allocation4 + $0x28] sm:$0xff] %vm2390, %v2718
    %2728 = vst [vmem:[#allocation4 + $0x30] sm:$0xff] %v2701
    %2729 = vst.msk [vmem:[#allocation4 + $0x38] sm:$0xff] %vm2390, %v2720
    %v2730 = vld [vmem:[%s20] sm:$0xff]
    %v2731 = vld [vmem:[%s20 + $0x8] sm:$0xff]
    %v2732 = vld [vmem:[%s20 + $0x10] sm:$0xff]
    %v2733 = vld [vmem:[%s20 + $0x18] sm:$0xff]
    %v2734 = vld [vmem:[%s20 + $0x20] sm:$0xff]
    %v2735 = vld [vmem:[%s20 + $0x28] sm:$0xff]
    loop: start=0, step=1, limit=4
    $region134: #{tpu_custom_call.1} parent=1 // loop_pre_header
      _
    $region135: #{tpu_custom_call.1} parent=1 // loop_header
      %s2737 = sphi 0, %s2741
      %p2738 = scmp.ge.s32.totalorder %s2737, 4
      %v2742 = vphi 0.0, %v2888
      %v2743 = vphi 0.0, %v2895
    $region136: #{tpu_custom_call.1} parent=1 // loop_header_branch
      %2740 = sbr.rel (%p2738) target = $region140
    $region137: #{tpu_custom_call.1} parent=1 // loop_body
      %s2744 = smul.u32 %s2737, 8
      %s2745 = sshra.s32 %s2744, 3
      %s2746 = sand.u32 %s2744, 7
      %s2747 = smul.u32 %s2745, 2
      %s2748 = smul.addr %s2747, 8
      %s2749 = scalar_lea.vmem [#allocation4], %s2748
      %v2750 = vld [vmem:[%s2749] sm:$0xff]
      %v2751 = vld [vmem:[%s2749 + $0x8] sm:$0xff]
      %v2752 = vpack.c.bf16 %v2742, %v2742
      %v2759 = vunpack.c.l.b16 %v2730
      %v2760 = vunpack.c.h.b16 %v2730
      %v2761 = vunpack.c.l.b16 %v2731
      %v2762 = vunpack.c.h.b16 %v2731
      %v2763 = vunpack.c.l.b16 %v2732
      %v2764 = vunpack.c.h.b16 %v2732
      %v2765 = vunpack.c.l.b16 %v2733
      %v2766 = vunpack.c.h.b16 %v2733
      %v2767 = vunpack.c.l.b16 %v2734
      %v2768 = vunpack.c.h.b16 %v2734
      %v2769 = vunpack.c.l.b16 %v2735
      %v2770 = vunpack.c.h.b16 %v2735
      %v2771 = vpack.c.b16 %v2761, %v2759
      %v2772 = vpack.c.b16 %v2762, %v2760
      %v2773 = vpack.c.b16 %v2765, %v2763
      %v2774 = vpack.c.b16 %v2766, %v2764
      %v2775 = vpack.c.b16 %v2769, %v2767
      %v2776 = vpack.c.b16 %v2770, %v2768
      %v2784 = vsel %vm1819, %v2752, 0
      %2786 = vmatpush.bf16.msra.mxu0 0
      %2787 = vmatpush.bf16.msra.mxu0 0
      %2788 = vmatpush.bf16.msra.mxu0 0
      %2789 = vmatpush.bf16.msra.mxu0 0
      %2790 = vmatpush.bf16.msra.mxu0 0
      %2791 = vmatpush.bf16.msra.mxu0 %v2775
      %2792 = vmatpush.bf16.msra.mxu0 %v2773
      %2793 = vmatpush.bf16.msra.mxu0 %v2771
      %2794 = vmatmul.bf16.gmra.mxu0 %v2784
      %v2795 = vpop.f32.mrf.mxu0
      %v2796 = vadd.f32 0.0, %v2795
      %v2797 = vpop.f32.mrf.mxu0
      %2798 = vdwg.mxu0
      %2799 = vmatpush.bf16.msra.mxu0 0
      %2800 = vmatpush.bf16.msra.mxu0 0
      %2801 = vmatpush.bf16.msra.mxu0 0
      %2802 = vmatpush.bf16.msra.mxu0 0
      %2803 = vmatpush.bf16.msra.mxu0 0
      %2804 = vmatpush.bf16.msra.mxu0 %v2776
      %2805 = vmatpush.bf16.msra.mxu0 %v2774
      %2806 = vmatpush.bf16.msra.mxu0 %v2772
      %2807 = vmatmul.bf16.gmra.mxu0 %v2784
      %v2808 = vpop.f32.mrf.mxu0
      %v2809 = vadd.f32 0.0, %v2808
      %v2810 = vpop.f32.mrf.mxu0
      %2811 = vdwg.mxu0
      %v2812 = vadd.f32 %v2750, %v2796
      %v2813 = vadd.f32 %v2751, %v2809
      %v2814 = vxor.u32 %v2812, 2147483648
      %v2815 = vmul.f32 %v2814, 1.442695
      %v2816 = vpow.pop %v2815
      %v2817 = vadd.f32 %v2816, 1.0
      %v2818 = vrcp.pop %v2817
      %v2819 = vmul.f32 %v2817, %v2818
      %v2820 = vsub.f32 1.0, %v2819
      %v2821 = vmul.f32 %v2818, %v2820
      %v2822 = vadd.f32 %v2818, %v2821
      %vm2823 = vweird.f32 %v2817
      %vm2824 = vweird.f32 %v2818
      %vm2825 = vmor %vm2823, %vm2824
      %v2826 = vsel %vm2825, %v2818, %v2822
      %v2827 = vand.u32 2147483647, %v2817
      %vm2828 = vcmp.eq.f32.partialorder %v2827, 8.507059e+37
      %v2829 = vand.u32 %v2817, 2147483648
      %v2830 = vor.u32 1.1754944e-38, %v2829
      %v2831 = vsel %vm2828, %v2830, %v2826
      %v2832 = vmul.f32 1.0, %v2831
      %v2833 = vtanh.pop %v2812
      %v2834 = vtanh.pop %v2813
      %v2835 = vxor.u32 %v2813, 2147483648
      %v2836 = vmul.f32 %v2835, 1.442695
      %v2837 = vpow.pop %v2836
      %v2838 = vadd.f32 %v2837, 1.0
      %v2839 = vrcp.pop %v2838
      %v2840 = vmul.f32 %v2838, %v2839
      %v2841 = vsub.f32 1.0, %v2840
      %v2842 = vmul.f32 %v2839, %v2841
      %v2843 = vadd.f32 %v2839, %v2842
      %vm2844 = vweird.f32 %v2838
      %vm2845 = vweird.f32 %v2839
      %vm2846 = vmor %vm2844, %vm2845
      %v2847 = vsel %vm2846, %v2839, %v2843
      %v2848 = vand.u32 2147483647, %v2838
      %vm2849 = vcmp.eq.f32.partialorder %v2848, 8.507059e+37
      %v2850 = vand.u32 %v2838, 2147483648
      %v2851 = vor.u32 1.1754944e-38, %v2850
      %v2852 = vsel %vm2849, %v2851, %v2847
      %v2853 = vmul.f32 1.0, %v2852
      %2855 = vrot.lane.b32.xlu0 %v2743, 48
      %v2856 = vpop.permute.xlu0 %2855
      %v2858 = vmul.f32 %v2832, %v2856
      %2861 = vrot.lane.b32.xlu0 %v2833, 32
      %v2862 = vpop.permute.xlu0 %2861
      %2863 = vrot.lane.b32.xlu0 %v2834, 32
      %v2864 = vpop.permute.xlu0 %2863
      %v2865 = vsel %vm275, %v2862, %v2864
      %v2867 = vmul.f32 %v2832, %v2865
      %2869 = vrot.lane.b32.xlu0 %v2867, 48
      %v2870 = vpop.permute.xlu0 %2869
      %v2872 = vadd.f32 %v2858, %v2870
      %v2873 = vtanh.pop %v2872
      %2875 = vrot.lane.b32.xlu0 %v2873, 96
      %v2876 = vpop.permute.xlu0 %2875
      %v2878 = vmul.f32 %v2853, %v2876
      %s2879 = scalar_lea.vmem %s5, %s2744
      %v2880 = vld [vmem:[%s2879] sm:$0xff]
      %2882 = vrot.lane.b32.xlu0 %v2878, 112
      %v2883 = vpop.permute.xlu0 %2882
      %v2885 = vmul.f32 %v2880, %v2883
      %v2886 = vsub.f32 1.0, %v2880
      %v2887 = vmul.f32 %v2886, %v2742
      %v2888 = vadd.f32 %v2885, %v2887
      %2890 = vrot.lane.b32.xlu0 %v2872, 80
      %v2891 = vpop.permute.xlu0 %2890
      %v2893 = vmul.f32 %v2880, %v2891
      %v2894 = vmul.f32 %v2886, %v2743
      %v2895 = vadd.f32 %v2893, %v2894
    $region138: #{tpu_custom_call.1} parent=1 // loop_footer
      %s2741 = sadd.s32 1, %s2737
    $region139: #{tpu_custom_call.1} parent=1 // loop_footer_branch
      %2736 = sbr.rel target = $region135
    $region140: #{tpu_custom_call.1} parent=1 // loop_exit
      _
    %v2896 = vld [vmem:[%s6] sm:$0xff]
    %v2897 = vld [vmem:[%s6 + $0x8] sm:$0x3]
    %v2898 = vld [vmem:[%s6 + $0x10] sm:$0xff]
    %v2899 = vld [vmem:[%s6 + $0x18] sm:$0x3]
    %v2900 = vld [vmem:[%s6 + $0x20] sm:$0xff]
    %v2901 = vld [vmem:[%s6 + $0x28] sm:$0x3]
    %v2902 = vld [vmem:[%s6 + $0x30] sm:$0xff]
    %v2903 = vld [vmem:[%s6 + $0x38] sm:$0x3]
    %v2904 = vld [vmem:[%s6 + $0x40] sm:$0xff]
    %v2905 = vld [vmem:[%s6 + $0x48] sm:$0x3]
    %v2906 = vld [vmem:[%s6 + $0x50] sm:$0xff]
    %v2907 = vld [vmem:[%s6 + $0x58] sm:$0x3]
    %v2920 = vrot.slane %v2896, 2
    %v2921 = vrot.slane %v2896, 4
    %v2922 = vrot.slane %v2896, 6
    %v2923 = vrot.slane %v2898, 2
    %v2924 = vrot.slane %v2898, 4
    %v2925 = vrot.slane %v2898, 6
    %v2926 = vrot.slane %v2900, 2
    %v2927 = vrot.slane %v2900, 4
    %v2928 = vrot.slane %v2900, 6
    %v2929 = vrot.slane %v2902, 2
    %v2930 = vrot.slane %v2902, 4
    %v2931 = vrot.slane %v2902, 6
    %v2932 = vrot.slane %v2904, 2
    %v2933 = vrot.slane %v2904, 4
    %v2934 = vrot.slane %v2904, 6
    %v2935 = vrot.slane %v2906, 2
    %v2936 = vrot.slane %v2906, 4
    %v2937 = vrot.slane %v2906, 6
    %2938 = vst [vmem:[#allocation1] ss:$4 sm:$0xff] %v2896
    %s2939 = scalar_lea.vmem [#allocation1], 1
    %2940 = vst [vmem:[%s2939] ss:$4 sm:$0xff] %v2920
    %s2941 = scalar_lea.vmem [#allocation1], 2
    %2942 = vst [vmem:[%s2941] ss:$4 sm:$0xff] %v2921
    %s2943 = scalar_lea.vmem [#allocation1], 3
    %2944 = vst [vmem:[%s2943] ss:$4 sm:$0xff] %v2922
    %s2945 = scalar_lea.vmem [#allocation1], 32
    %2946 = vst [vmem:[%s2945] ss:$4 sm:$0xff] %v2897
    %s2947 = scalar_lea.vmem [#allocation1], 33
    %2948 = vst [vmem:[%s2947] ss:$4 sm:$0xff] %v2898
    %s2949 = scalar_lea.vmem [#allocation1], 34
    %2950 = vst [vmem:[%s2949] ss:$4 sm:$0xff] %v2923
    %s2951 = scalar_lea.vmem [#allocation1], 35
    %2952 = vst [vmem:[%s2951] ss:$4 sm:$0xff] %v2924
    %v2953 = vld.sshfl [vmem:[#allocation1] sm:$0xff pattern:$0x73625140]
    %v2954 = vld.sshfl [vmem:[#allocation1 + $0x20] sm:$0xff pattern:$0x73625140]
    %2955 = vst [vmem:[#allocation1] ss:$4 sm:$0xff] %v2925
    %2956 = vst [vmem:[%s2939] ss:$4 sm:$0xff] %v2899
    %2957 = vst [vmem:[%s2941] ss:$4 sm:$0xff] %v2900
    %2958 = vst [vmem:[%s2943] ss:$4 sm:$0xff] %v2926
    %2959 = vst [vmem:[%s2945] ss:$4 sm:$0xff] %v2927
    %2960 = vst [vmem:[%s2947] ss:$4 sm:$0xff] %v2928
    %2961 = vst [vmem:[%s2949] ss:$4 sm:$0xff] %v2901
    %2962 = vst [vmem:[%s2951] ss:$4 sm:$0xff] %v2902
    %v2963 = vld.sshfl [vmem:[#allocation1] sm:$0xff pattern:$0x73625140]
    %v2964 = vld.sshfl [vmem:[#allocation1 + $0x20] sm:$0xff pattern:$0x73625140]
    %2965 = vst [vmem:[#allocation1] ss:$4 sm:$0xff] %v2929
    %2966 = vst [vmem:[%s2939] ss:$4 sm:$0xff] %v2930
    %2967 = vst [vmem:[%s2941] ss:$4 sm:$0xff] %v2931
    %2968 = vst [vmem:[%s2943] ss:$4 sm:$0xff] %v2903
    %2969 = vst [vmem:[%s2945] ss:$4 sm:$0xff] %v2904
    %2970 = vst [vmem:[%s2947] ss:$4 sm:$0xff] %v2932
    %2971 = vst [vmem:[%s2949] ss:$4 sm:$0xff] %v2933
    %2972 = vst [vmem:[%s2951] ss:$4 sm:$0xff] %v2934
    %v2973 = vld.sshfl [vmem:[#allocation1] sm:$0xff pattern:$0x73625140]
    %v2974 = vld.sshfl [vmem:[#allocation1 + $0x20] sm:$0xff pattern:$0x73625140]
    %2975 = vst [vmem:[#allocation1] ss:$4 sm:$0xff] %v2905
    %2976 = vst [vmem:[%s2939] ss:$4 sm:$0xff] %v2906
    %2977 = vst [vmem:[%s2941] ss:$4 sm:$0xff] %v2935
    %2978 = vst [vmem:[%s2943] ss:$4 sm:$0xff] %v2936
    %2979 = vst [vmem:[%s2945] ss:$4 sm:$0xff] %v2937
    %2980 = vst [vmem:[%s2947] ss:$4 sm:$0xff] %v2907
    %v2981 = vld.sshfl [vmem:[#allocation1] sm:$0xff pattern:$0x73625140]
    %v2982 = vld.sshfl [vmem:[#allocation1 + $0x20] sm:$0xff pattern:$0x73625140]
    %v2991 = vpack.c.bf16 %v2954, %v2953
    %v2992 = vpack.c.bf16 %v2964, %v2963
    %v2993 = vpack.c.bf16 %v2974, %v2973
    %v2994 = vpack.c.bf16 %v2982, %v2981
    %v2995 = vld [vmem:[#allocation20] sm:$0xf]
    %v2996 = vld [vmem:[#allocation20 + $0x4] sm:$0xf]
    %v2999 = vunpack.c.l.b16 %v2995
    %v3000 = vunpack.c.l.b16 %v2996
    %v3001 = vpack.c.b16 %v3000, %v2999
    %v3004 = vsel %vm1896, %v2991, 0
    %v3007 = vsel %vm1896, %v2992, 0
    %v3010 = vsel %vm1896, %v2993, 0
    %v3013 = vsel %vm1896, %v2994, 0
    %3015 = vmatpush.bf16.msra.mxu0 0
    %3016 = vmatpush.bf16.msra.mxu0 0
    %3017 = vmatpush.bf16.msra.mxu0 0
    %3018 = vmatpush.bf16.msra.mxu0 0
    %3019 = vmatpush.bf16.msra.mxu0 0
    %3020 = vmatpush.bf16.msra.mxu0 0
    %3021 = vmatpush.bf16.msra.mxu0 0
    %3022 = vmatpush.bf16.msra.mxu0 %v3001
    %3023 = vmatmul.bf16.gmra.mxu0 %v3004
    %v3024 = vpop.f32.mrf.mxu0
    %v3025 = vadd.f32 0.0, %v3024
    %v3026 = vpop.f32.mrf.mxu0
    %v3027 = vadd.f32 0.0, %v3026
    %3028 = vmatmul.bf16.gmra.mxu0 %v3007
    %v3029 = vpop.f32.mrf.mxu0
    %v3030 = vadd.f32 0.0, %v3029
    %v3031 = vpop.f32.mrf.mxu0
    %v3032 = vadd.f32 0.0, %v3031
    %3033 = vmatmul.bf16.gmra.mxu0 %v3010
    %v3034 = vpop.f32.mrf.mxu0
    %v3035 = vadd.f32 0.0, %v3034
    %v3036 = vpop.f32.mrf.mxu0
    %v3037 = vadd.f32 0.0, %v3036
    %3038 = vmatmul.bf16.gmra.mxu0 %v3013
    %v3039 = vpop.f32.mrf.mxu0
    %v3040 = vadd.f32 0.0, %v3039
    %v3041 = vpop.f32.mrf.mxu0
    %v3042 = vadd.f32 0.0, %v3041
    %3043 = vdwg.mxu0
    %v3044 = vtanh.pop %v3025
    %v3045 = vtanh.pop %v3027
    %v3046 = vtanh.pop %v3030
    %v3047 = vtanh.pop %v3032
    %v3048 = vtanh.pop %v3035
    %v3049 = vtanh.pop %v3037
    %v3050 = vtanh.pop %v3040
    %v3051 = vtanh.pop %v3042
    %v3060 = vrot.slane %v3044, 2
    %v3061 = vrot.slane %v3044, 4
    %v3062 = vrot.slane %v3044, 6
    %v3063 = vrot.slane %v3045, 2
    %v3064 = vrot.slane %v3045, 4
    %v3065 = vrot.slane %v3045, 6
    %v3066 = vrot.slane %v3046, 2
    %v3067 = vrot.slane %v3046, 4
    %v3068 = vrot.slane %v3046, 6
    %v3069 = vrot.slane %v3047, 2
    %v3070 = vrot.slane %v3047, 4
    %v3071 = vrot.slane %v3047, 6
    %v3072 = vrot.slane %v3048, 2
    %v3073 = vrot.slane %v3048, 4
    %v3074 = vrot.slane %v3048, 6
    %v3075 = vrot.slane %v3049, 2
    %v3076 = vrot.slane %v3049, 4
    %v3077 = vrot.slane %v3049, 6
    %v3078 = vrot.slane %v3050, 2
    %v3079 = vrot.slane %v3050, 4
    %v3080 = vrot.slane %v3050, 6
    %v3081 = vrot.slane %v3051, 2
    %v3104 = vld [vmem:[#allocation21] sm:$0x1]
    %v3106 = vperm.slane %v3104, 0
    %v3108 = vrot.slane %v3106, 2
    %v3109 = vrot.slane %v3106, 4
    %v3110 = vrot.slane %v3106, 6
    %v3114 = vmul.f32 %v3044, %v3106
    %v3115 = vmul.f32 %v3060, %v3108
    %v3116 = vmul.f32 %v3061, %v3109
    %v3117 = vmul.f32 %v3062, %v3110
    %v3118 = vmul.f32 %v3045, %v3106
    %v3119 = vmul.f32 %v3063, %v3106
    %v3120 = vmul.f32 %v3064, %v3108
    %v3121 = vmul.f32 %v3065, %v3109
    %v3122 = vmul.f32 %v3046, %v3110
    %v3123 = vmul.f32 %v3066, %v3106
    %v3124 = vmul.f32 %v3067, %v3106
    %v3125 = vmul.f32 %v3068, %v3108
    %v3126 = vmul.f32 %v3047, %v3109
    %v3127 = vmul.f32 %v3069, %v3110
    %v3128 = vmul.f32 %v3070, %v3106
    %v3129 = vmul.f32 %v3071, %v3106
    %v3130 = vmul.f32 %v3048, %v3108
    %v3131 = vmul.f32 %v3072, %v3109
    %v3132 = vmul.f32 %v3073, %v3110
    %v3133 = vmul.f32 %v3074, %v3106
    %v3134 = vmul.f32 %v3049, %v3106
    %v3135 = vmul.f32 %v3075, %v3108
    %v3136 = vmul.f32 %v3076, %v3109
    %v3137 = vmul.f32 %v3077, %v3110
    %v3138 = vmul.f32 %v3050, %v3106
    %v3139 = vmul.f32 %v3078, %v3106
    %v3140 = vmul.f32 %v3079, %v3108
    %v3141 = vmul.f32 %v3080, %v3109
    %v3142 = vmul.f32 %v3051, %v3110
    %v3143 = vmul.f32 %v3081, %v3106
    %3174 = vst [vmem:[#allocation1] ss:$4 sm:$0xff] %v3114
    %s3175 = scalar_lea.vmem [#allocation1], 1
    %3176 = vst [vmem:[%s3175] ss:$4 sm:$0xff] %v3115
    %s3177 = scalar_lea.vmem [#allocation1], 2
    %3178 = vst [vmem:[%s3177] ss:$4 sm:$0xff] %v3116
    %s3179 = scalar_lea.vmem [#allocation1], 3
    %3180 = vst [vmem:[%s3179] ss:$4 sm:$0xff] %v3117
    %s3181 = scalar_lea.vmem [#allocation1], 32
    %3182 = vst [vmem:[%s3181] ss:$4 sm:$0xff] %v3118
    %v3183 = vld.sshfl [vmem:[#allocation1] sm:$0xff pattern:$0x73625140]
    %v3184 = vld.sshfl [vmem:[#allocation1 + $0x20] sm:$0xff pattern:$0x73625140]
    %3185 = vst [vmem:[#allocation1] ss:$4 sm:$0xff] %v3119
    %3186 = vst [vmem:[%s3175] ss:$4 sm:$0xff] %v3120
    %3187 = vst [vmem:[%s3177] ss:$4 sm:$0xff] %v3121
    %3188 = vst [vmem:[%s3179] ss:$4 sm:$0xff] %v3122
    %3189 = vst [vmem:[%s3181] ss:$4 sm:$0xff] %v3123
    %v3190 = vld.sshfl [vmem:[#allocation1] sm:$0xff pattern:$0x73625140]
    %v3191 = vld.sshfl [vmem:[#allocation1 + $0x20] sm:$0xff pattern:$0x73625140]
    %3192 = vst [vmem:[#allocation1] ss:$4 sm:$0xff] %v3124
    %3193 = vst [vmem:[%s3175] ss:$4 sm:$0xff] %v3125
    %3194 = vst [vmem:[%s3177] ss:$4 sm:$0xff] %v3126
    %3195 = vst [vmem:[%s3179] ss:$4 sm:$0xff] %v3127
    %3196 = vst [vmem:[%s3181] ss:$4 sm:$0xff] %v3128
    %v3197 = vld.sshfl [vmem:[#allocation1] sm:$0xff pattern:$0x73625140]
    %v3198 = vld.sshfl [vmem:[#allocation1 + $0x20] sm:$0xff pattern:$0x73625140]
    %3199 = vst [vmem:[#allocation1] ss:$4 sm:$0xff] %v3129
    %3200 = vst [vmem:[%s3175] ss:$4 sm:$0xff] %v3130
    %3201 = vst [vmem:[%s3177] ss:$4 sm:$0xff] %v3131
    %3202 = vst [vmem:[%s3179] ss:$4 sm:$0xff] %v3132
    %3203 = vst [vmem:[%s3181] ss:$4 sm:$0xff] %v3133
    %v3204 = vld.sshfl [vmem:[#allocation1] sm:$0xff pattern:$0x73625140]
    %v3205 = vld.sshfl [vmem:[#allocation1 + $0x20] sm:$0xff pattern:$0x73625140]
    %3206 = vst [vmem:[#allocation1] ss:$4 sm:$0xff] %v3134
    %3207 = vst [vmem:[%s3175] ss:$4 sm:$0xff] %v3135
    %3208 = vst [vmem:[%s3177] ss:$4 sm:$0xff] %v3136
    %3209 = vst [vmem:[%s3179] ss:$4 sm:$0xff] %v3137
    %3210 = vst [vmem:[%s3181] ss:$4 sm:$0xff] %v3138
    %v3211 = vld.sshfl [vmem:[#allocation1] sm:$0xff pattern:$0x73625140]
    %v3212 = vld.sshfl [vmem:[#allocation1 + $0x20] sm:$0xff pattern:$0x73625140]
    %3213 = vst [vmem:[#allocation1] ss:$4 sm:$0xff] %v3139
    %3214 = vst [vmem:[%s3175] ss:$4 sm:$0xff] %v3140
    %3215 = vst [vmem:[%s3177] ss:$4 sm:$0xff] %v3141
    %3216 = vst [vmem:[%s3179] ss:$4 sm:$0xff] %v3142
    %3217 = vst [vmem:[%s3181] ss:$4 sm:$0xff] %v3143
    %v3218 = vld.sshfl [vmem:[#allocation1] sm:$0xff pattern:$0x73625140]
    %v3219 = vld.sshfl [vmem:[#allocation1 + $0x20] sm:$0xff pattern:$0x73625140]
    %v3232 = vsel %vm275, %v3183, 0.0
    %3233 = vadd.xlane.f32.xlu0 %v3232
    %v3234 = vpop.xlane.xlu0 %3233
    %vm3235 = vcmask 254976
    %v3236 = vsel %vm3235, %v3184, 0.0
    %3237 = vadd.xlane.f32.xlu0 %v3236
    %v3238 = vpop.xlane.xlu0 %3237
    %v3239 = vsel %vm275, %v3190, 0.0
    %3240 = vadd.xlane.f32.xlu0 %v3239
    %v3241 = vpop.xlane.xlu0 %3240
    %v3242 = vsel %vm3235, %v3191, 0.0
    %3243 = vadd.xlane.f32.xlu0 %v3242
    %v3244 = vpop.xlane.xlu0 %3243
    %v3245 = vsel %vm275, %v3197, 0.0
    %3246 = vadd.xlane.f32.xlu0 %v3245
    %v3247 = vpop.xlane.xlu0 %3246
    %v3248 = vsel %vm3235, %v3198, 0.0
    %3249 = vadd.xlane.f32.xlu0 %v3248
    %v3250 = vpop.xlane.xlu0 %3249
    %v3251 = vsel %vm275, %v3204, 0.0
    %3252 = vadd.xlane.f32.xlu0 %v3251
    %v3253 = vpop.xlane.xlu0 %3252
    %v3254 = vsel %vm3235, %v3205, 0.0
    %3255 = vadd.xlane.f32.xlu0 %v3254
    %v3256 = vpop.xlane.xlu0 %3255
    %v3257 = vsel %vm275, %v3211, 0.0
    %3258 = vadd.xlane.f32.xlu0 %v3257
    %v3259 = vpop.xlane.xlu0 %3258
    %v3260 = vsel %vm3235, %v3212, 0.0
    %3261 = vadd.xlane.f32.xlu0 %v3260
    %v3262 = vpop.xlane.xlu0 %3261
    %v3263 = vsel %vm275, %v3218, 0.0
    %3264 = vadd.xlane.f32.xlu0 %v3263
    %v3265 = vpop.xlane.xlu0 %3264
    %v3266 = vsel %vm3235, %v3219, 0.0
    %3267 = vadd.xlane.f32.xlu0 %v3266
    %v3268 = vpop.xlane.xlu0 %3267
    %v3269 = vld [vmem:[#allocation12] sm:$0x3f]
    %v3270 = vsub.f32 %v3269, 1.0
    %v3271 = vmul.f32 %v3270, 1e+09
    %v3273 = vperm.slane %v3271, 0
    %v3274 = vlaneseq
    %v3275 = vshrl.u32 %v3274, 7
    %3277 = vset.pattern.permute.xlu0 %v3275
    %3278 = vperm.xlu0 %3277, %v3273
    %v3279 = vpop.permute.xlu0 %3278
    %v3280 = vlaneseq
    %v3281 = vshrl.u32 %v3280, 7
    %v3282 = vadd.s32 %v3281, 8
    %3283 = vset.pattern.permute.xlu0 %v3282
    %3284 = vperm.xlu0 %3283, %v3273
    %v3285 = vpop.permute.xlu0 %3284
    %v3286 = vperm.slane %v3271, 1
    %v3287 = vlaneseq
    %v3288 = vshrl.u32 %v3287, 7
    %3290 = vset.pattern.permute.xlu0 %v3288
    %3291 = vperm.xlu0 %3290, %v3286
    %v3292 = vpop.permute.xlu0 %3291
    %v3293 = vlaneseq
    %v3294 = vshrl.u32 %v3293, 7
    %v3295 = vadd.s32 %v3294, 8
    %3296 = vset.pattern.permute.xlu0 %v3295
    %3297 = vperm.xlu0 %3296, %v3286
    %v3298 = vpop.permute.xlu0 %3297
    %v3299 = vperm.slane %v3271, 2
    %v3300 = vlaneseq
    %v3301 = vshrl.u32 %v3300, 7
    %3303 = vset.pattern.permute.xlu0 %v3301
    %3304 = vperm.xlu0 %3303, %v3299
    %v3305 = vpop.permute.xlu0 %3304
    %v3306 = vlaneseq
    %v3307 = vshrl.u32 %v3306, 7
    %v3308 = vadd.s32 %v3307, 8
    %3309 = vset.pattern.permute.xlu0 %v3308
    %3310 = vperm.xlu0 %3309, %v3299
    %v3311 = vpop.permute.xlu0 %3310
    %v3312 = vperm.slane %v3271, 3
    %v3313 = vlaneseq
    %v3314 = vshrl.u32 %v3313, 7
    %3316 = vset.pattern.permute.xlu0 %v3314
    %3317 = vperm.xlu0 %3316, %v3312
    %v3318 = vpop.permute.xlu0 %3317
    %v3319 = vlaneseq
    %v3320 = vshrl.u32 %v3319, 7
    %v3321 = vadd.s32 %v3320, 8
    %3322 = vset.pattern.permute.xlu0 %v3321
    %3323 = vperm.xlu0 %3322, %v3312
    %v3324 = vpop.permute.xlu0 %3323
    %v3325 = vperm.slane %v3271, 4
    %v3326 = vlaneseq
    %v3327 = vshrl.u32 %v3326, 7
    %3329 = vset.pattern.permute.xlu0 %v3327
    %3330 = vperm.xlu0 %3329, %v3325
    %v3331 = vpop.permute.xlu0 %3330
    %v3332 = vlaneseq
    %v3333 = vshrl.u32 %v3332, 7
    %v3334 = vadd.s32 %v3333, 8
    %3335 = vset.pattern.permute.xlu0 %v3334
    %3336 = vperm.xlu0 %3335, %v3325
    %v3337 = vpop.permute.xlu0 %3336
    %v3338 = vperm.slane %v3271, 5
    %v3339 = vlaneseq
    %v3340 = vshrl.u32 %v3339, 7
    %3342 = vset.pattern.permute.xlu0 %v3340
    %3343 = vperm.xlu0 %3342, %v3338
    %v3344 = vpop.permute.xlu0 %3343
    %v3345 = vlaneseq
    %v3346 = vshrl.u32 %v3345, 7
    %v3347 = vadd.s32 %v3346, 8
    %3348 = vset.pattern.permute.xlu0 %v3347
    %3349 = vperm.xlu0 %3348, %v3338
    %v3350 = vpop.permute.xlu0 %3349
    %v3363 = vadd.f32 %v3234, %v3279
    %v3364 = vadd.f32 %v3238, %v3285
    %v3365 = vadd.f32 %v3241, %v3292
    %v3366 = vadd.f32 %v3244, %v3298
    %v3367 = vadd.f32 %v3247, %v3305
    %v3368 = vadd.f32 %v3250, %v3311
    %v3369 = vadd.f32 %v3253, %v3318
    %v3370 = vadd.f32 %v3256, %v3324
    %v3371 = vadd.f32 %v3259, %v3331
    %v3372 = vadd.f32 %v3262, %v3337
    %v3373 = vadd.f32 %v3265, %v3344
    %v3374 = vadd.f32 %v3268, %v3350
    %3387 = vset.pattern.permute.xlu0 0
    %3388 = vperm.xlu0 %3387, %v3363
    %v3389 = vpop.permute.xlu0 %3388
    %3390 = vset.pattern.permute.xlu0 0
    %3391 = vperm.xlu0 %3390, %v3364
    %v3392 = vpop.permute.xlu0 %3391
    %3393 = vset.pattern.permute.xlu0 0
    %3394 = vperm.xlu0 %3393, %v3365
    %v3395 = vpop.permute.xlu0 %3394
    %3396 = vset.pattern.permute.xlu0 0
    %3397 = vperm.xlu0 %3396, %v3366
    %v3398 = vpop.permute.xlu0 %3397
    %3399 = vset.pattern.permute.xlu0 0
    %3400 = vperm.xlu0 %3399, %v3367
    %v3401 = vpop.permute.xlu0 %3400
    %3402 = vset.pattern.permute.xlu0 0
    %3403 = vperm.xlu0 %3402, %v3368
    %v3404 = vpop.permute.xlu0 %3403
    %3405 = vset.pattern.permute.xlu0 0
    %3406 = vperm.xlu0 %3405, %v3369
    %v3407 = vpop.permute.xlu0 %3406
    %3408 = vset.pattern.permute.xlu0 0
    %3409 = vperm.xlu0 %3408, %v3370
    %v3410 = vpop.permute.xlu0 %3409
    %3411 = vset.pattern.permute.xlu0 0
    %3412 = vperm.xlu0 %3411, %v3371
    %v3413 = vpop.permute.xlu0 %3412
    %3414 = vset.pattern.permute.xlu0 0
    %3415 = vperm.xlu0 %3414, %v3372
    %v3416 = vpop.permute.xlu0 %3415
    %3417 = vset.pattern.permute.xlu0 0
    %3418 = vperm.xlu0 %3417, %v3373
    %v3419 = vpop.permute.xlu0 %3418
    %3420 = vset.pattern.permute.xlu0 0
    %3421 = vperm.xlu0 %3420, %v3374
    %v3422 = vpop.permute.xlu0 %3421
    %v3423 = vperm.slane %v3389, %v510
    %v3424 = vadd.s32 %v510, 4294967288
    %v3425 = vperm.slane %v3392, %v3424
    %vm3426 = vcmask 130112
    %v3427 = vsel %vm3426, %v3425, %v3423
    %v3428 = vperm.slane %v3395, %v510
    %v3429 = vperm.slane %v3398, %v3424
    %v3430 = vsel %vm3426, %v3429, %v3428
    %v3431 = vperm.slane %v3401, %v510
    %v3432 = vperm.slane %v3404, %v3424
    %v3433 = vsel %vm3426, %v3432, %v3431
    %v3434 = vperm.slane %v3407, %v510
    %v3435 = vperm.slane %v3410, %v3424
    %v3436 = vsel %vm3426, %v3435, %v3434
    %v3437 = vperm.slane %v3413, %v510
    %v3438 = vperm.slane %v3416, %v3424
    %v3439 = vsel %vm3426, %v3438, %v3437
    %v3440 = vperm.slane %v3419, %v510
    %v3441 = vperm.slane %v3422, %v3424
    %v3442 = vsel %vm3426, %v3441, %v3440
    %v3443 = vsel %vm533, %v3430, %v3427
    %v3444 = vsel %vm535, %v3433, %v3443
    %v3445 = vsel %vm537, %v3436, %v3444
    %v3446 = vsel %vm539, %v3439, %v3445
    %v3447 = vsel %vm541, %v3442, %v3446
    %vm3449 = vcmask 78848
    %v3450 = vsel %vm3449, %v3447, -inf
    %3451 = vmax.xlane.f32.xlu0 %v3450
    %v3452 = vpop.xlane.xlu0 %3451
    %v3454 = vperm.slane %v3452, 0
    %v3455 = vperm.slane %v3452, 1
    %v3456 = vperm.slane %v3452, 2
    %v3457 = vperm.slane %v3452, 3
    %v3458 = vperm.slane %v3452, 4
    %v3459 = vperm.slane %v3452, 5
    %v3466 = vsub.f32 %v3363, %v3454
    %v3467 = vsub.f32 %v3364, %v3454
    %v3468 = vsub.f32 %v3365, %v3455
    %v3469 = vsub.f32 %v3366, %v3455
    %v3470 = vsub.f32 %v3367, %v3456
    %v3471 = vsub.f32 %v3368, %v3456
    %v3472 = vsub.f32 %v3369, %v3457
    %v3473 = vsub.f32 %v3370, %v3457
    %v3474 = vsub.f32 %v3371, %v3458
    %v3475 = vsub.f32 %v3372, %v3458
    %v3476 = vsub.f32 %v3373, %v3459
    %v3477 = vsub.f32 %v3374, %v3459
    %v3478 = vmul.f32 %v3466, 1.442695
    %v3479 = vpow.pop %v3478
    %v3480 = vmul.f32 %v3467, 1.442695
    %v3481 = vpow.pop %v3480
    %v3482 = vmul.f32 %v3468, 1.442695
    %v3483 = vpow.pop %v3482
    %v3484 = vmul.f32 %v3469, 1.442695
    %v3485 = vpow.pop %v3484
    %v3486 = vmul.f32 %v3470, 1.442695
    %v3487 = vpow.pop %v3486
    %v3488 = vmul.f32 %v3471, 1.442695
    %v3489 = vpow.pop %v3488
    %v3490 = vmul.f32 %v3472, 1.442695
    %v3491 = vpow.pop %v3490
    %v3492 = vmul.f32 %v3473, 1.442695
    %v3493 = vpow.pop %v3492
    %v3494 = vmul.f32 %v3474, 1.442695
    %v3495 = vpow.pop %v3494
    %v3496 = vmul.f32 %v3475, 1.442695
    %v3497 = vpow.pop %v3496
    %v3498 = vmul.f32 %v3476, 1.442695
    %v3499 = vpow.pop %v3498
    %v3500 = vmul.f32 %v3477, 1.442695
    %v3501 = vpow.pop %v3500
    %v3503 = vperm.slane %v3269, 0
    %v3504 = vlaneseq
    %v3505 = vshrl.u32 %v3504, 7
    %3507 = vset.pattern.permute.xlu0 %v3505
    %3508 = vperm.xlu0 %3507, %v3503
    %v3509 = vpop.permute.xlu0 %3508
    %v3510 = vlaneseq
    %v3511 = vshrl.u32 %v3510, 7
    %v3512 = vadd.s32 %v3511, 8
    %3513 = vset.pattern.permute.xlu0 %v3512
    %3514 = vperm.xlu0 %3513, %v3503
    %v3515 = vpop.permute.xlu0 %3514
    %v3516 = vperm.slane %v3269, 1
    %v3517 = vlaneseq
    %v3518 = vshrl.u32 %v3517, 7
    %3520 = vset.pattern.permute.xlu0 %v3518
    %3521 = vperm.xlu0 %3520, %v3516
    %v3522 = vpop.permute.xlu0 %3521
    %v3523 = vlaneseq
    %v3524 = vshrl.u32 %v3523, 7
    %v3525 = vadd.s32 %v3524, 8
    %3526 = vset.pattern.permute.xlu0 %v3525
    %3527 = vperm.xlu0 %3526, %v3516
    %v3528 = vpop.permute.xlu0 %3527
    %v3529 = vperm.slane %v3269, 2
    %v3530 = vlaneseq
    %v3531 = vshrl.u32 %v3530, 7
    %3533 = vset.pattern.permute.xlu0 %v3531
    %3534 = vperm.xlu0 %3533, %v3529
    %v3535 = vpop.permute.xlu0 %3534
    %v3536 = vlaneseq
    %v3537 = vshrl.u32 %v3536, 7
    %v3538 = vadd.s32 %v3537, 8
    %3539 = vset.pattern.permute.xlu0 %v3538
    %3540 = vperm.xlu0 %3539, %v3529
    %v3541 = vpop.permute.xlu0 %3540
    %v3542 = vperm.slane %v3269, 3
    %v3543 = vlaneseq
    %v3544 = vshrl.u32 %v3543, 7
    %3546 = vset.pattern.permute.xlu0 %v3544
    %3547 = vperm.xlu0 %3546, %v3542
    %v3548 = vpop.permute.xlu0 %3547
    %v3549 = vlaneseq
    %v3550 = vshrl.u32 %v3549, 7
    %v3551 = vadd.s32 %v3550, 8
    %3552 = vset.pattern.permute.xlu0 %v3551
    %3553 = vperm.xlu0 %3552, %v3542
    %v3554 = vpop.permute.xlu0 %3553
    %v3555 = vperm.slane %v3269, 4
    %v3556 = vlaneseq
    %v3557 = vshrl.u32 %v3556, 7
    %3559 = vset.pattern.permute.xlu0 %v3557
    %3560 = vperm.xlu0 %3559, %v3555
    %v3561 = vpop.permute.xlu0 %3560
    %v3562 = vlaneseq
    %v3563 = vshrl.u32 %v3562, 7
    %v3564 = vadd.s32 %v3563, 8
    %3565 = vset.pattern.permute.xlu0 %v3564
    %3566 = vperm.xlu0 %3565, %v3555
    %v3567 = vpop.permute.xlu0 %3566
    %v3568 = vperm.slane %v3269, 5
    %v3569 = vlaneseq
    %v3570 = vshrl.u32 %v3569, 7
    %3572 = vset.pattern.permute.xlu0 %v3570
    %3573 = vperm.xlu0 %3572, %v3568
    %v3574 = vpop.permute.xlu0 %3573
    %v3575 = vlaneseq
    %v3576 = vshrl.u32 %v3575, 7
    %v3577 = vadd.s32 %v3576, 8
    %3578 = vset.pattern.permute.xlu0 %v3577
    %3579 = vperm.xlu0 %3578, %v3568
    %v3580 = vpop.permute.xlu0 %3579
    %v3593 = vmul.f32 %v3479, %v3509
    %v3594 = vmul.f32 %v3481, %v3515
    %v3595 = vmul.f32 %v3483, %v3522
    %v3596 = vmul.f32 %v3485, %v3528
    %v3597 = vmul.f32 %v3487, %v3535
    %v3598 = vmul.f32 %v3489, %v3541
    %v3599 = vmul.f32 %v3491, %v3548
    %v3600 = vmul.f32 %v3493, %v3554
    %v3601 = vmul.f32 %v3495, %v3561
    %v3602 = vmul.f32 %v3497, %v3567
    %v3603 = vmul.f32 %v3499, %v3574
    %v3604 = vmul.f32 %v3501, %v3580
    %3617 = vset.pattern.permute.xlu0 0
    %3618 = vperm.xlu0 %3617, %v3593
    %v3619 = vpop.permute.xlu0 %3618
    %3620 = vset.pattern.permute.xlu0 0
    %3621 = vperm.xlu0 %3620, %v3594
    %v3622 = vpop.permute.xlu0 %3621
    %3623 = vset.pattern.permute.xlu0 0
    %3624 = vperm.xlu0 %3623, %v3595
    %v3625 = vpop.permute.xlu0 %3624
    %3626 = vset.pattern.permute.xlu0 0
    %3627 = vperm.xlu0 %3626, %v3596
    %v3628 = vpop.permute.xlu0 %3627
    %3629 = vset.pattern.permute.xlu0 0
    %3630 = vperm.xlu0 %3629, %v3597
    %v3631 = vpop.permute.xlu0 %3630
    %3632 = vset.pattern.permute.xlu0 0
    %3633 = vperm.xlu0 %3632, %v3598
    %v3634 = vpop.permute.xlu0 %3633
    %3635 = vset.pattern.permute.xlu0 0
    %3636 = vperm.xlu0 %3635, %v3599
    %v3637 = vpop.permute.xlu0 %3636
    %3638 = vset.pattern.permute.xlu0 0
    %3639 = vperm.xlu0 %3638, %v3600
    %v3640 = vpop.permute.xlu0 %3639
    %3641 = vset.pattern.permute.xlu0 0
    %3642 = vperm.xlu0 %3641, %v3601
    %v3643 = vpop.permute.xlu0 %3642
    %3644 = vset.pattern.permute.xlu0 0
    %3645 = vperm.xlu0 %3644, %v3602
    %v3646 = vpop.permute.xlu0 %3645
    %3647 = vset.pattern.permute.xlu0 0
    %3648 = vperm.xlu0 %3647, %v3603
    %v3649 = vpop.permute.xlu0 %3648
    %3650 = vset.pattern.permute.xlu0 0
    %3651 = vperm.xlu0 %3650, %v3604
    %v3652 = vpop.permute.xlu0 %3651
    %v3653 = vperm.slane %v3619, %v510
    %v3654 = vperm.slane %v3622, %v3424
    %v3655 = vsel %vm3426, %v3654, %v3653
    %v3656 = vperm.slane %v3625, %v510
    %v3657 = vperm.slane %v3628, %v3424
    %v3658 = vsel %vm3426, %v3657, %v3656
    %v3659 = vperm.slane %v3631, %v510
    %v3660 = vperm.slane %v3634, %v3424
    %v3661 = vsel %vm3426, %v3660, %v3659
    %v3662 = vperm.slane %v3637, %v510
    %v3663 = vperm.slane %v3640, %v3424
    %v3664 = vsel %vm3426, %v3663, %v3662
    %v3665 = vperm.slane %v3643, %v510
    %v3666 = vperm.slane %v3646, %v3424
    %v3667 = vsel %vm3426, %v3666, %v3665
    %v3668 = vperm.slane %v3649, %v510
    %v3669 = vperm.slane %v3652, %v3424
    %v3670 = vsel %vm3426, %v3669, %v3668
    %v3671 = vsel %vm533, %v3658, %v3655
    %v3672 = vsel %vm535, %v3661, %v3671
    %v3673 = vsel %vm537, %v3664, %v3672
    %v3674 = vsel %vm539, %v3667, %v3673
    %v3675 = vsel %vm541, %v3670, %v3674
    %v3677 = vsel %vm3449, %v3675, 0.0
    %3678 = vadd.xlane.f32.xlu0 %v3677
    %v3679 = vpop.xlane.xlu0 %3678
    %v3680 = vadd.f32 %v3679, 1e-08
    %v3682 = vperm.slane %v3680, 0
    %v3683 = vperm.slane %v3680, 1
    %v3684 = vperm.slane %v3680, 2
    %v3685 = vperm.slane %v3680, 3
    %v3686 = vperm.slane %v3680, 4
    %v3687 = vperm.slane %v3680, 5
    %v3694 = vrcp.pop %v3682
    %v3695 = vmul.f32 %v3682, %v3694
    %v3696 = vsub.f32 1.0, %v3695
    %v3697 = vmul.f32 %v3694, %v3696
    %v3698 = vadd.f32 %v3694, %v3697
    %vm3699 = vweird.f32 %v3682
    %vm3700 = vweird.f32 %v3694
    %vm3701 = vmor %vm3699, %vm3700
    %v3702 = vsel %vm3701, %v3694, %v3698
    %v3703 = vand.u32 2147483647, %v3682
    %vm3704 = vcmp.eq.f32.partialorder %v3703, 8.507059e+37
    %v3705 = vand.u32 %v3682, 2147483648
    %v3706 = vor.u32 1.1754944e-38, %v3705
    %v3707 = vsel %vm3704, %v3706, %v3702
    %v3708 = vmul.f32 %v3593, %v3707
    %v3709 = vmul.f32 %v3594, %v3707
    %v3710 = vrcp.pop %v3683
    %v3711 = vmul.f32 %v3683, %v3710
    %v3712 = vsub.f32 1.0, %v3711
    %v3713 = vmul.f32 %v3710, %v3712
    %v3714 = vadd.f32 %v3710, %v3713
    %vm3715 = vweird.f32 %v3683
    %vm3716 = vweird.f32 %v3710
    %vm3717 = vmor %vm3715, %vm3716
    %v3718 = vsel %vm3717, %v3710, %v3714
    %v3719 = vand.u32 2147483647, %v3683
    %vm3720 = vcmp.eq.f32.partialorder %v3719, 8.507059e+37
    %v3721 = vand.u32 %v3683, 2147483648
    %v3722 = vor.u32 1.1754944e-38, %v3721
    %v3723 = vsel %vm3720, %v3722, %v3718
    %v3724 = vmul.f32 %v3595, %v3723
    %v3725 = vmul.f32 %v3596, %v3723
    %v3726 = vrcp.pop %v3684
    %v3727 = vmul.f32 %v3684, %v3726
    %v3728 = vsub.f32 1.0, %v3727
    %v3729 = vmul.f32 %v3726, %v3728
    %v3730 = vadd.f32 %v3726, %v3729
    %vm3731 = vweird.f32 %v3684
    %vm3732 = vweird.f32 %v3726
    %vm3733 = vmor %vm3731, %vm3732
    %v3734 = vsel %vm3733, %v3726, %v3730
    %v3735 = vand.u32 2147483647, %v3684
    %vm3736 = vcmp.eq.f32.partialorder %v3735, 8.507059e+37
    %v3737 = vand.u32 %v3684, 2147483648
    %v3738 = vor.u32 1.1754944e-38, %v3737
    %v3739 = vsel %vm3736, %v3738, %v3734
    %v3740 = vmul.f32 %v3597, %v3739
    %v3741 = vmul.f32 %v3598, %v3739
    %v3742 = vrcp.pop %v3685
    %v3743 = vmul.f32 %v3685, %v3742
    %v3744 = vsub.f32 1.0, %v3743
    %v3745 = vmul.f32 %v3742, %v3744
    %v3746 = vadd.f32 %v3742, %v3745
    %vm3747 = vweird.f32 %v3685
    %vm3748 = vweird.f32 %v3742
    %vm3749 = vmor %vm3747, %vm3748
    %v3750 = vsel %vm3749, %v3742, %v3746
    %v3751 = vand.u32 2147483647, %v3685
    %vm3752 = vcmp.eq.f32.partialorder %v3751, 8.507059e+37
    %v3753 = vand.u32 %v3685, 2147483648
    %v3754 = vor.u32 1.1754944e-38, %v3753
    %v3755 = vsel %vm3752, %v3754, %v3750
    %v3756 = vmul.f32 %v3599, %v3755
    %v3757 = vmul.f32 %v3600, %v3755
    %v3758 = vrcp.pop %v3686
    %v3759 = vmul.f32 %v3686, %v3758
    %v3760 = vsub.f32 1.0, %v3759
    %v3761 = vmul.f32 %v3758, %v3760
    %v3762 = vadd.f32 %v3758, %v3761
    %vm3763 = vweird.f32 %v3686
    %vm3764 = vweird.f32 %v3758
    %vm3765 = vmor %vm3763, %vm3764
    %v3766 = vsel %vm3765, %v3758, %v3762
    %v3767 = vand.u32 2147483647, %v3686
    %vm3768 = vcmp.eq.f32.partialorder %v3767, 8.507059e+37
    %v3769 = vand.u32 %v3686, 2147483648
    %v3770 = vor.u32 1.1754944e-38, %v3769
    %v3771 = vsel %vm3768, %v3770, %v3766
    %v3772 = vmul.f32 %v3601, %v3771
    %v3773 = vmul.f32 %v3602, %v3771
    %v3774 = vrcp.pop %v3687
    %v3775 = vmul.f32 %v3687, %v3774
    %v3776 = vsub.f32 1.0, %v3775
    %v3777 = vmul.f32 %v3774, %v3776
    %v3778 = vadd.f32 %v3774, %v3777
    %vm3779 = vweird.f32 %v3687
    %vm3780 = vweird.f32 %v3774
    %vm3781 = vmor %vm3779, %vm3780
    %v3782 = vsel %vm3781, %v3774, %v3778
    %v3783 = vand.u32 2147483647, %v3687
    %vm3784 = vcmp.eq.f32.partialorder %v3783, 8.507059e+37
    %v3785 = vand.u32 %v3687, 2147483648
    %v3786 = vor.u32 1.1754944e-38, %v3785
    %v3787 = vsel %vm3784, %v3786, %v3782
    %v3788 = vmul.f32 %v3603, %v3787
    %v3789 = vmul.f32 %v3604, %v3787
    %3791 = vset.pattern.permute.xlu0 0
    %3792 = vperm.xlu0 %3791, %v3708
    %v3793 = vpop.permute.xlu0 %3792
    %3796 = vset.pattern.permute.xlu0 0
    %3797 = vperm.xlu0 %3796, %v3709
    %v3798 = vpop.permute.xlu0 %3797
    %3801 = vset.pattern.permute.xlu0 0
    %3802 = vperm.xlu0 %3801, %v3724
    %v3803 = vpop.permute.xlu0 %3802
    %3806 = vset.pattern.permute.xlu0 0
    %3807 = vperm.xlu0 %3806, %v3725
    %v3808 = vpop.permute.xlu0 %3807
    %3811 = vset.pattern.permute.xlu0 0
    %3812 = vperm.xlu0 %3811, %v3740
    %v3813 = vpop.permute.xlu0 %3812
    %3816 = vset.pattern.permute.xlu0 0
    %3817 = vperm.xlu0 %3816, %v3741
    %v3818 = vpop.permute.xlu0 %3817
    %3821 = vset.pattern.permute.xlu0 0
    %3822 = vperm.xlu0 %3821, %v3756
    %v3823 = vpop.permute.xlu0 %3822
    %3826 = vset.pattern.permute.xlu0 0
    %3827 = vperm.xlu0 %3826, %v3757
    %v3828 = vpop.permute.xlu0 %3827
    %3831 = vset.pattern.permute.xlu0 0
    %3832 = vperm.xlu0 %3831, %v3772
    %v3833 = vpop.permute.xlu0 %3832
    %3836 = vset.pattern.permute.xlu0 0
    %3837 = vperm.xlu0 %3836, %v3773
    %v3838 = vpop.permute.xlu0 %3837
    %3841 = vset.pattern.permute.xlu0 0
    %3842 = vperm.xlu0 %3841, %v3788
    %v3843 = vpop.permute.xlu0 %3842
    %3846 = vset.pattern.permute.xlu0 0
    %3847 = vperm.xlu0 %3846, %v3789
    %v3848 = vpop.permute.xlu0 %3847
    %v3850 = vmul.f32 %v3793, %v2896
    %v3851 = vmul.f32 %v3798, %v2897
    %v3852 = vmul.f32 %v3803, %v2898
    %v3853 = vmul.f32 %v3808, %v2899
    %v3854 = vmul.f32 %v3813, %v2900
    %v3855 = vmul.f32 %v3818, %v2901
    %v3856 = vmul.f32 %v3823, %v2902
    %v3857 = vmul.f32 %v3828, %v2903
    %v3858 = vmul.f32 %v3833, %v2904
    %v3859 = vmul.f32 %v3838, %v2905
    %v3860 = vmul.f32 %v3843, %v2906
    %v3861 = vmul.f32 %v3848, %v2907
    %v3862 = vsel %vm1896, %v3850, 0.0
    %vm3863 = vcmask 123904
    %v3864 = vsel %vm3863, %v3851, 0.0
    %v3865 = vadd.f32 %v3862, %v3864
    %v3866 = vrot.slane %v3865, 4
    %v3867 = vadd.f32 %v3865, %v3866
    %v3868 = vrot.slane %v3867, 2
    %v3869 = vadd.f32 %v3867, %v3868
    %v3870 = vrot.slane %v3869, 1
    %v3871 = vadd.f32 %v3869, %v3870
    %v3872 = vsel %vm1896, %v3852, 0.0
    %v3873 = vsel %vm3863, %v3853, 0.0
    %v3874 = vadd.f32 %v3872, %v3873
    %v3875 = vrot.slane %v3874, 4
    %v3876 = vadd.f32 %v3874, %v3875
    %v3877 = vrot.slane %v3876, 2
    %v3878 = vadd.f32 %v3876, %v3877
    %v3879 = vrot.slane %v3878, 1
    %v3880 = vadd.f32 %v3878, %v3879
    %v3881 = vsel %vm1896, %v3854, 0.0
    %v3882 = vsel %vm3863, %v3855, 0.0
    %v3883 = vadd.f32 %v3881, %v3882
    %v3884 = vrot.slane %v3883, 4
    %v3885 = vadd.f32 %v3883, %v3884
    %v3886 = vrot.slane %v3885, 2
    %v3887 = vadd.f32 %v3885, %v3886
    %v3888 = vrot.slane %v3887, 1
    %v3889 = vadd.f32 %v3887, %v3888
    %v3890 = vsel %vm1896, %v3856, 0.0
    %v3891 = vsel %vm3863, %v3857, 0.0
    %v3892 = vadd.f32 %v3890, %v3891
    %v3893 = vrot.slane %v3892, 4
    %v3894 = vadd.f32 %v3892, %v3893
    %v3895 = vrot.slane %v3894, 2
    %v3896 = vadd.f32 %v3894, %v3895
    %v3897 = vrot.slane %v3896, 1
    %v3898 = vadd.f32 %v3896, %v3897
    %v3899 = vsel %vm1896, %v3858, 0.0
    %v3900 = vsel %vm3863, %v3859, 0.0
    %v3901 = vadd.f32 %v3899, %v3900
    %v3902 = vrot.slane %v3901, 4
    %v3903 = vadd.f32 %v3901, %v3902
    %v3904 = vrot.slane %v3903, 2
    %v3905 = vadd.f32 %v3903, %v3904
    %v3906 = vrot.slane %v3905, 1
    %v3907 = vadd.f32 %v3905, %v3906
    %v3908 = vsel %vm1896, %v3860, 0.0
    %v3909 = vsel %vm3863, %v3861, 0.0
    %v3910 = vadd.f32 %v3908, %v3909
    %v3911 = vrot.slane %v3910, 4
    %v3912 = vadd.f32 %v3910, %v3911
    %v3913 = vrot.slane %v3912, 2
    %v3914 = vadd.f32 %v3912, %v3913
    %v3915 = vrot.slane %v3914, 1
    %v3916 = vadd.f32 %v3914, %v3915
    %v3917 = vpack.c.bf16 %v3871, %v3871
    %v3918 = vpack.c.bf16 %v3880, %v3880
    %v3919 = vpack.c.bf16 %v3889, %v3889
    %v3920 = vpack.c.bf16 %v3898, %v3898
    %v3921 = vpack.c.bf16 %v3907, %v3907
    %v3922 = vpack.c.bf16 %v3916, %v3916
    %v3923 = vld [vmem:[%s18] sm:$0xf]
    %v3924 = vld [vmem:[%s18 + $0x4] sm:$0xf]
    %v3931 = vunpack.c.l.b16 %v3917
    %v3932 = vunpack.c.l.b16 %v3918
    %v3933 = vunpack.c.l.b16 %v3919
    %v3934 = vunpack.c.l.b16 %v3920
    %v3935 = vunpack.c.l.b16 %v3921
    %v3936 = vunpack.c.l.b16 %v3922
    %v3937 = vsel %vm533, %v3932, %v3931
    %v3938 = vsel %vm535, %v3933, %v3937
    %v3939 = vsel %vm537, %v3934, %v3938
    %v3940 = vsel %vm539, %v3935, %v3939
    %v3941 = vsel %vm541, %v3936, %v3940
    %v3942 = vpack.c.b16 %v3941, %v3941
    %v3945 = vunpack.c.l.b16 %v3923
    %v3946 = vunpack.c.l.b16 %v3924
    %v3947 = vpack.c.b16 %v3946, %v3945
    %v3950 = vsel %vm1896, %v3942, 0
    %3952 = vmatpush.bf16.msra.mxu0 0
    %3953 = vmatpush.bf16.msra.mxu0 0
    %3954 = vmatpush.bf16.msra.mxu0 0
    %3955 = vmatpush.bf16.msra.mxu0 0
    %3956 = vmatpush.bf16.msra.mxu0 0
    %3957 = vmatpush.bf16.msra.mxu0 0
    %3958 = vmatpush.bf16.msra.mxu0 0
    %3959 = vmatpush.bf16.msra.mxu0 %v3947
    %3960 = vmatmul.bf16.gmra.mxu0 %v3950
    %v3961 = vpop.f32.mrf.mxu0
    %v3962 = vadd.f32 0.0, %v3961
    %v3963 = vpop.f32.mrf.mxu0
    %3964 = vdwg.mxu0
    %3966 = vrot.lane.b32.xlu0 %v1841, 16
    %v3967 = vpop.permute.xlu0 %3966
    %v3969 = vsel %vm1896, %v3962, %v3967
    %v3970 = vpack.c.bf16 %v3969, %v3969
    %v3971 = vpack.c.bf16 %v2742, %v2742
    %v3973 = vsel %vm1819, %v3970, 0
    %v3976 = vsel %vm1819, %v3971, 0
    %3978 = vmatpush.bf16.xpose.msra.mxu0 0
    %3979 = vmatpush.bf16.xpose.msra.mxu0 0
    %3980 = vmatpush.bf16.xpose.msra.mxu0 0
    %3981 = vmatpush.bf16.xpose.msra.mxu0 0
    %3982 = vmatpush.bf16.xpose.msra.mxu0 0
    %3983 = vmatpush.bf16.xpose.msra.mxu0 0
    %3984 = vmatpush.bf16.xpose.msra.mxu0 0
    %3985 = vmatpush.bf16.xpose.msra.mxu0 %v3976
    %3986 = vmatmul.bf16.gmra.mxu0 %v3973
    %v3987 = vpop.f32.mrf.mxu0
    %v3988 = vadd.f32 0.0, %v3987
    %v3989 = vpop.f32.mrf.mxu0
    %3990 = vdwg.mxu0
    %3991 = vst.msk [vmem:[#allocation24] sm:$0x3f] %vm569, %v3988
    // Predicated region
    $region141: #{tpu_custom_call.1} parent=1 // pred_check
      _
    $region142: #{tpu_custom_call.1} parent=1 // pred_check_branch
      %3993 = sbr.rel (0) target = $region144
    $region143: #{tpu_custom_call.1} parent=1 // pred_region
      %3995 = vsyncadd [#allocation7], 0
      %s3997 = sshll.u32 [#allocation24], 4
      %s3998 = int_to_ptr.vmem [resolvable:$true] %s3997
      %s3999 = sshll.u32 %s22, 4
      %s4000 = int_to_ptr.hbm [resolvable:$true] %s3999
      %4002 = dma.vmem_to_hbm [thread:$0]  %s3998, 128, %s4000, [#allocation7]
    $region144: #{tpu_custom_call.1} parent=1 // pred_fallthru
      _
    // Predicated region
    $region145: #{tpu_custom_call.1} parent=1 // pred_check
      _
    $region146: #{tpu_custom_call.1} parent=1 // pred_check_branch
      %4004 = sbr.rel (0) target = $region148
    $region147: #{tpu_custom_call.1} parent=1 // pred_region
      %4006 = dma.done [#allocation7], 128
    $region148: #{tpu_custom_call.1} parent=1 // pred_fallthru
      _
    %4007 = vsyncpa [#allocation6], 1
    %4008 = vsyncpa [#allocation13], 1
    %4009 = vsyncpa [#allocation16], 1
    %4010 = vsyncpa [#allocation19], 1
    %4011 = vsyncpa [#allocation22], 1
    %4012 = vsyncpa [#allocation7], 1
    %4013 = vsyncpa [#allocation8], 1
    %4014 = vsyncpa [#allocation9], 1

</llo_original>
